<compile_context>
chip_gen: v7x
topology: tpu7x:2x2x1
jax: 0.10.0
libtpu: 0.0.40
codegen_flags: <defaults>
</compile_context>

<pallas_src>
import functools

import jax
import jax.numpy as jnp
import numpy as np
from jax import lax
from jax.experimental import pallas as pl
from jax.experimental.pallas import tpu as pltpu


def _act(x, activation):
    return jnp.maximum(x, 0.0) if activation == "ReLU" else jnp.tanh(x)


def _encoder_kernel(x_ref, g1_ref, g2_ref, g3_ref, g4_ref, bias_ref, wbig_ref,
                    mask_ref, out_ref, qkv_ref, av_ref, *,
                    filter_num, fd, t_final, d_outs, activation):
    """Full SpecificEncoder forward for one stacked (B_tile * S) row slab."""
    f = filter_num
    qkv_w = 2 * fd + f                  # per-timestep [q | k | v] width
    qkv_cols = t_final * qkv_w          # attention-projection columns of wbig
    bfc_off = sum(d_outs)               # FC bias offset inside the bias pack

    # ---- Part 1: conv stack as banded matmuls, (rows, D_in) @ (D_in, D_out) ----
    a = x_ref[...]                                                    # (rows, T0*C0) bf16
    off = 0
    for g_ref, d_out in zip((g1_ref, g2_ref, g3_ref, g4_ref), d_outs):
        z = jnp.dot(a, g_ref[...], preferred_element_type=jnp.float32)
        z = z + bias_ref[:, off:off + d_out]
        a = _act(z, activation).astype(jnp.bfloat16)                  # (rows, T_l*F)
        off += d_out
    # a: (rows, T*F) bf16; column index = t*F + f (time-major, feature-minor).

    # ---- Part 2a: all-timestep q/k/v projection + residual FC path: ONE matmul ----
    # wbig = [blockdiag_t(Wq^T | Wk^T | gamma*Wv^T)  |  Wfc'], so the last 2F columns
    # hold fc_fusion applied to the pre-attention (residual) features.
    qkv_ref[...] = jnp.dot(a, wbig_ref[...], preferred_element_type=jnp.float32)

    # ---- Part 2b: per-timestep channel self-attention (softmax over channels) ----
    for t in range(t_final):
        c0 = t * qkv_w
        q = qkv_ref[:, c0:c0 + fd].astype(jnp.bfloat16)               # (rows, Fd)
        k = qkv_ref[:, c0 + fd:c0 + 2 * fd].astype(jnp.bfloat16)      # (rows, Fd)
        v = qkv_ref[:, c0 + 2 * fd:c0 + qkv_w].astype(jnp.bfloat16)   # (rows, F)
        # scores[j, i] = <k_j, q_i>; torch's softmax(dim=1) == normalize over i.
        scores = lax.dot_general(k, q, (((1,), (1,)), ((), ())),
                                 preferred_element_type=jnp.float32)  # (rows, rows)
        scores = scores + mask_ref[...]          # block-diag mask: -1e30 across batch
        scores = scores - jnp.max(scores, axis=-1, keepdims=True)
        e = jnp.exp(scores)
        beta = e * pl.reciprocal(jnp.sum(e, axis=-1, keepdims=True), approx=True)
        av = jnp.dot(beta.astype(jnp.bfloat16), v,
                     preferred_element_type=jnp.float32)              # (rows, F)
        av_ref[:, t * f:(t + 1) * f] = av

    # ---- Part 3: cross-channel fusion FC (attention part + folded residual part) ----
    wfc = wbig_ref[:, qkv_cols:]                                      # (T*F, 2F) bf16
    attn_fc = jnp.dot(av_ref[...].astype(jnp.bfloat16), wfc,
                      preferred_element_type=jnp.float32)             # (rows, 2F)
    resid_fc = qkv_ref[:, qkv_cols:]                                  # (rows, 2F)
    out_ref[...] = (resid_fc + attn_fc + bias_ref[:, bfc_off:]).astype(out_ref.dtype)


def _conv_band(w, t_in, stride=2):
    """Banded matrix G with (rows, T_in*C_in) @ G == valid stride-2 conv, time-major."""
    w_np = np.asarray(w, dtype=np.float32)                            # (F_out, C_in, fs)
    f_out, c_in, fs = w_np.shape
    t_out = (t_in - fs) // stride + 1
    assert t_out >= 1, "temporal length too short for the conv stack"
    g = np.zeros((t_in * c_in, t_out * f_out), np.float32)
    for to in range(t_out):
        for k in range(fs):
            ti = stride * to + k
            g[ti * c_in:(ti + 1) * c_in, to * f_out:(to + 1) * f_out] = w_np[:, :, k].T
    return g, t_out


def _pick_batch_tile(b_sz, s_ch, target_rows):
    """Rows per grid step ~= target_rows (MXU-friendly); >= 2 steps when possible."""
    b_tile = max(1, min(b_sz, max(1, target_rows // s_ch)))
    if b_sz >= 2:
        b_tile = min(b_tile, (b_sz + 1) // 2)   # v7x has 2 TensorCores: keep >= 2 steps
    while (b_tile * s_ch) % 8 != 0:             # sublane alignment of the row tile
        b_tile += 1
    return b_tile


def specific_encoder_forward(x, params, *, filter_num, activation="ReLU",
                             target_rows=128):
    """JAX/Pallas equivalent of SpecificEncoder.forward.

    x: (B, C_in, T, S) float32.  Returns (B, S, 2 * filter_num) float32.
    target_rows: rows per grid step (B_tile * S); 128 suits v5e, 256 suits v6e/v7x.
    """
    b_sz, c_in, t_len, s_ch = x.shape
    f_num = filter_num
    fd = int(np.asarray(params["wq"]).shape[0])

    # ---- host-side weight preprocessing (layout plumbing only, tiny arrays) ----
    gs, d_outs, bias_parts = [], [], []
    t_cur = t_len
    for w, b in params["convs"]:
        g, t_cur = _conv_band(w, t_cur, stride=2)
        gs.append(jnp.asarray(g, jnp.bfloat16))
        d_outs.append(t_cur * f_num)
        bias_parts.append(np.tile(np.asarray(b, np.float32), t_cur))
    t_final = t_cur
    bias_parts.append(np.asarray(params["bfc"], np.float32))
    bias_pack = jnp.asarray(np.concatenate(bias_parts)[None, :])      # (1, sum+2F) f32

    qkv_w = 2 * fd + f_num
    qkv_cols = t_final * qkv_w
    wbig = np.zeros((t_final * f_num, qkv_cols + 2 * f_num), np.float32)
    wq_t = np.asarray(params["wq"], np.float32).T                     # (F, Fd)
    wk_t = np.asarray(params["wk"], np.float32).T                     # (F, Fd)
    wv_t = float(params["gamma"]) * np.asarray(params["wv"], np.float32).T  # gamma folded
    for t in range(t_final):
        r0, c0 = t * f_num, t * qkv_w
        wbig[r0:r0 + f_num, c0:c0 + fd] = wq_t
        wbig[r0:r0 + f_num, c0 + fd:c0 + 2 * fd] = wk_t
        wbig[r0:r0 + f_num, c0 + 2 * fd:c0 + qkv_w] = wv_t
    wfc_np = np.asarray(params["wfc"], np.float32)                    # (2F, F*T), col = f*T + t
    assert wfc_np.shape == (2 * f_num, f_num * t_final)
    wbig[:, qkv_cols:] = (wfc_np.reshape(2 * f_num, f_num, t_final)
                          .transpose(2, 1, 0).reshape(t_final * f_num, 2 * f_num))
    wbig = jnp.asarray(wbig, jnp.bfloat16)

    # ---- batch-stacked row layout: (B, C, T, S) -> (B*S, T*C), time-major columns ----
    d0 = t_len * c_in
    rows = b_sz * s_ch
    a0 = jnp.transpose(x, (0, 3, 2, 1)).reshape(rows, d0).astype(jnp.bfloat16)

    b_tile = _pick_batch_tile(b_sz, s_ch, target_rows)
    num_steps = -(-b_sz // b_tile)
    rows_tile = b_tile * s_ch
    rows_pad = num_steps * rows_tile
    if rows_pad != rows:
        a0 = jnp.pad(a0, ((0, rows_pad - rows), (0, 0)))

    # Block-diagonal additive mask: channels attend only within their own batch element.
    rid = np.arange(rows_tile) // s_ch
    mask = jnp.asarray(np.where(rid[:, None] == rid[None, :], 0.0, -1e30), jnp.float32)

    d_out = 2 * f_num
    const2d = lambda arr: pl.BlockSpec(arr.shape, lambda i: (0, 0))
    kernel = functools.partial(_encoder_kernel, filter_num=f_num, fd=fd,
                               t_final=t_final, d_outs=tuple(d_outs),
                               activation=activation)

    out = pl.pallas_call(
        kernel,
        out_shape=jax.ShapeDtypeStruct((rows_pad, d_out), jnp.float32),
        grid=(num_steps,),
        in_specs=[
            pl.BlockSpec((rows_tile, d0), lambda i: (i, 0)),
            const2d(gs[0]), const2d(gs[1]), const2d(gs[2]), const2d(gs[3]),
            const2d(bias_pack), const2d(wbig), const2d(mask),
        ],
        out_specs=pl.BlockSpec((rows_tile, d_out), lambda i: (i, 0)),
        scratch_shapes=[
            pltpu.VMEM((rows_tile, qkv_cols + d_out), jnp.float32),   # q/k/v + resid-FC
            pltpu.VMEM((rows_tile, t_final * f_num), jnp.float32),    # attention outputs
        ],
        compiler_params=pltpu.CompilerParams(dimension_semantics=("parallel",)),
    )(a0, gs[0], gs[1], gs[2], gs[3], bias_pack, wbig, mask)

    return out[:rows].reshape(b_sz, s_ch, d_out)


def reference_forward(x, params, *, activation="ReLU", mm_dtype=jnp.float32,
                      precision=lax.Precision.HIGHEST):
    """Pure-JAX reference mirroring the PyTorch module op-for-op.

    mm_dtype/precision control matmul-operand precision so this doubles as (a) the
    exact f32 module reference and (b) a matched-precision reference for the bf16
    single-pass MXU kernel (operands cast to bf16, f32 accumulation).
    """
    cast = lambda t: t.astype(mm_dtype)

    a = x
    for w, b in params["convs"]:
        a = lax.conv_general_dilated(
            cast(a), cast(w)[:, :, :, None], window_strides=(2, 1), padding="VALID",
            dimension_numbers=("NCHW", "OIHW", "NCHW"), precision=precision,
            preferred_element_type=jnp.float32)
        a = _act(a + b[None, :, None, None], activation)
    b_sz, f_num, t_ds, s_ch = a.shape

    def ein(eq, lhs, rhs):
        return jnp.einsum(eq, cast(lhs), cast(rhs), precision=precision,
                          preferred_element_type=jnp.float32)

    wq, wk, wv, gamma = params["wq"], params["wk"], params["wv"], params["gamma"]
    refined = []
    for t in range(t_ds):
        xt = a[:, :, t, :]                                            # (B, F, S)
        fq = ein("df,bfs->bds", wq, xt)
        gk = ein("df,bfs->bds", wk, xt)
        hv = ein("of,bfs->bos", wv, xt)
        sc = ein("bdi,bdj->bij", fq, gk)                              # (B, S, S)
        beta = jax.nn.softmax(sc, axis=1)
        o = gamma * ein("bfi,bij->bfj", hv, beta) + xt
        refined.append(o[..., None])
    refined = jnp.concatenate(refined, axis=-1)                       # (B, F, S, T)
    z = jnp.transpose(refined, (0, 2, 1, 3)).reshape(b_sz, s_ch, f_num * t_ds)
    return ein("bsk,ok->bso", z, params["wfc"]) + params["bfc"]


if __name__ == "__main__":
    B, C_IN, T_LEN, S_CH = 32, 1, 64, 8
    FILTER_NUM, FILTER_SIZE, SA_DIV = 16, 3, 2
    ACTIVATION = "ReLU"

    key = jax.random.PRNGKey(0)
    ks = jax.random.split(key, 16)

    def _w(k, shape, fan_in):
        return jax.random.normal(k, shape, jnp.float32) / np.sqrt(fan_in)

    convs = []
    c_prev = C_IN
    for i in range(4):
        w = _w(ks[2 * i], (FILTER_NUM, c_prev, FILTER_SIZE), c_prev * FILTER_SIZE)
        b = 0.1 * jax.random.normal(ks[2 * i + 1], (FILTER_NUM,), jnp.float32)
        convs.append((w, b))
        c_prev = FILTER_NUM

    # Downsampled length after 4 stride-2 valid convs (matches get_downsampled_length).
    t_cur = T_LEN
    for _ in range(4):
        t_cur = (t_cur - FILTER_SIZE) // 2 + 1
    T_DS = t_cur

    f_div = max(FILTER_NUM // SA_DIV, 1)
    params = dict(
        convs=convs,
        wq=_w(ks[8], (f_div, FILTER_NUM), FILTER_NUM),
        wk=_w(ks[9], (f_div, FILTER_NUM), FILTER_NUM),
        wv=_w(ks[10], (FILTER_NUM, FILTER_NUM), FILTER_NUM),
        gamma=jnp.float32(0.5),   # nn.Parameter (init 0 in torch); nonzero to exercise attention
        wfc=_w(ks[11], (2 * FILTER_NUM, T_DS * FILTER_NUM), T_DS * FILTER_NUM),
        bfc=0.1 * jax.random.normal(ks[12], (2 * FILTER_NUM,), jnp.float32),
    )

    x = jax.random.normal(ks[13], (B, C_IN, T_LEN, S_CH), jnp.float32)

    out = specific_encoder_forward(x, params, filter_num=FILTER_NUM,
                                   activation=ACTIVATION)
    out = jax.block_until_ready(out)
    assert out.shape == (B, S_CH, 2 * FILTER_NUM), out.shape
    assert bool(jnp.all(jnp.isfinite(out)))

    # Wiring/layout check against a matched-precision (bf16-operand, f32-accumulate)
    # reference: remaining differences are only rounding-order + approx-reciprocal.
    ref_bf16 = reference_forward(x, params, activation=ACTIVATION,
                                 mm_dtype=jnp.bfloat16,
                                 precision=lax.Precision.DEFAULT)
    max_diff = float(jnp.max(jnp.abs(out - ref_bf16)))
    assert jnp.allclose(out, ref_bf16, atol=2e-2, rtol=2e-2), max_diff

    # Numerical sanity vs exact f32 module semantics (bf16 single-pass MXU trades a
    # little precision for 3-6x fewer MXU passes on the serial chain).
    ref_f32 = reference_forward(x, params, activation=ACTIVATION)
    rel = float(jnp.linalg.norm(out - ref_f32) / jnp.linalg.norm(ref_f32))
    assert rel < 0.08, rel

    print("KERNEL_OK")
</pallas_src>

<mosaic_0001>
module attributes {stable_mosaic.version = 11 : i64} {
  func.func @_encoder_kernel(%arg0: i32, %arg1: memref<128x64xbf16, #tpu.memory_space<vmem>>, %arg2: memref<64x496xbf16, #tpu.memory_space<vmem>>, %arg3: memref<496x240xbf16, #tpu.memory_space<vmem>>, %arg4: memref<240x112xbf16, #tpu.memory_space<vmem>>, %arg5: memref<112x48xbf16, #tpu.memory_space<vmem>>, %arg6: memref<1x928xf32, #tpu.memory_space<vmem>>, %arg7: memref<48x128xbf16, #tpu.memory_space<vmem>>, %arg8: memref<128x128xf32, #tpu.memory_space<vmem>>, %arg9: memref<128x32xf32, #tpu.memory_space<vmem>>, %arg10: memref<128x128xf32, #tpu.memory_space<vmem>>, %arg11: memref<128x48xf32, #tpu.memory_space<vmem>>) attributes {dimension_semantics = [#tpu.dimension_semantics<parallel>], iteration_bounds = array<i64: 2>, scalar_prefetch = 0 : i64, scratch_operands = 2 : i64, tpu.core_type = #tpu.core_type<tc>, window_params = [{transform_indices = @transform_0, window_bounds = array<i64: 128, 64>}, {pipeline_mode = #tpu.pipeline_mode<synchronous>, transform_indices = @transform_1, window_bounds = array<i64: 64, 496>}, {pipeline_mode = #tpu.pipeline_mode<synchronous>, transform_indices = @transform_2, window_bounds = array<i64: 496, 240>}, {pipeline_mode = #tpu.pipeline_mode<synchronous>, transform_indices = @transform_3, window_bounds = array<i64: 240, 112>}, {pipeline_mode = #tpu.pipeline_mode<synchronous>, transform_indices = @transform_4, window_bounds = array<i64: 112, 48>}, {pipeline_mode = #tpu.pipeline_mode<synchronous>, transform_indices = @transform_5, window_bounds = array<i64: 1, 928>}, {pipeline_mode = #tpu.pipeline_mode<synchronous>, transform_indices = @transform_6, window_bounds = array<i64: 48, 128>}, {pipeline_mode = #tpu.pipeline_mode<synchronous>, transform_indices = @transform_7, window_bounds = array<i64: 128, 128>}, {transform_indices = @transform_8, window_bounds = array<i64: 128, 32>}]} {
    %c0 = arith.constant 0 : index
    %c0_0 = arith.constant 0 : index
    %0 = vector.load %arg1[%c0, %c0_0] : memref<128x64xbf16, #tpu.memory_space<vmem>>, vector<128x64xbf16>
    %c0_1 = arith.constant 0 : index
    %c0_2 = arith.constant 0 : index
    %1 = vector.load %arg2[%c0_1, %c0_2] : memref<64x496xbf16, #tpu.memory_space<vmem>>, vector<64x496xbf16>
    %cst = arith.constant dense<0.000000e+00> : vector<128x496xf32>
    %2 = tpu.matmul %0, %1, %cst {dimension_numbers = #tpu.dot_dimension_numbers<[1], [0], [0], [1], [0, 0, 1, 1], [], []>} : vector<128x64xbf16>, vector<64x496xbf16>, vector<128x496xf32> -> vector<128x496xf32>
    %c0_3 = arith.constant 0 : index
    %c0_4 = arith.constant 0 : index
    %3 = vector.load %arg6[%c0_3, %c0_4] : memref<1x928xf32, #tpu.memory_space<vmem>>, vector<1x496xf32>
    %4 = vector.broadcast %3 : vector<1x496xf32> to vector<128x496xf32>
    %5 = arith.addf %2, %4 : vector<128x496xf32>
    %cst_5 = arith.constant 0.000000e+00 : f32
    %6 = vector.broadcast %cst_5 : f32 to vector<128x496xf32>
    %7 = arith.maximumf %5, %6 : vector<128x496xf32>
    %8 = arith.truncf %7 : vector<128x496xf32> to vector<128x496xbf16>
    %c0_6 = arith.constant 0 : index
    %c0_7 = arith.constant 0 : index
    %9 = vector.load %arg3[%c0_6, %c0_7] : memref<496x240xbf16, #tpu.memory_space<vmem>>, vector<496x240xbf16>
    %cst_8 = arith.constant dense<0.000000e+00> : vector<128x240xf32>
    %10 = tpu.matmul %8, %9, %cst_8 {dimension_numbers = #tpu.dot_dimension_numbers<[1], [0], [0], [1], [0, 0, 1, 1], [], []>} : vector<128x496xbf16>, vector<496x240xbf16>, vector<128x240xf32> -> vector<128x240xf32>
    %c0_9 = arith.constant 0 : index
    %c496 = arith.constant 496 : index
    %11 = vector.load %arg6[%c0_9, %c496] : memref<1x928xf32, #tpu.memory_space<vmem>>, vector<1x240xf32>
    %12 = vector.broadcast %11 : vector<1x240xf32> to vector<128x240xf32>
    %13 = arith.addf %10, %12 : vector<128x240xf32>
    %cst_10 = arith.constant 0.000000e+00 : f32
    %14 = vector.broadcast %cst_10 : f32 to vector<128x240xf32>
    %15 = arith.maximumf %13, %14 : vector<128x240xf32>
    %16 = arith.truncf %15 : vector<128x240xf32> to vector<128x240xbf16>
    %c0_11 = arith.constant 0 : index
    %c0_12 = arith.constant 0 : index
    %17 = vector.load %arg4[%c0_11, %c0_12] : memref<240x112xbf16, #tpu.memory_space<vmem>>, vector<240x112xbf16>
    %cst_13 = arith.constant dense<0.000000e+00> : vector<128x112xf32>
    %18 = tpu.matmul %16, %17, %cst_13 {dimension_numbers = #tpu.dot_dimension_numbers<[1], [0], [0], [1], [0, 0, 1, 1], [], []>} : vector<128x240xbf16>, vector<240x112xbf16>, vector<128x112xf32> -> vector<128x112xf32>
    %c0_14 = arith.constant 0 : index
    %c736 = arith.constant 736 : index
    %19 = vector.load %arg6[%c0_14, %c736] : memref<1x928xf32, #tpu.memory_space<vmem>>, vector<1x112xf32>
    %20 = vector.broadcast %19 : vector<1x112xf32> to vector<128x112xf32>
    %21 = arith.addf %18, %20 : vector<128x112xf32>
    %cst_15 = arith.constant 0.000000e+00 : f32
    %22 = vector.broadcast %cst_15 : f32 to vector<128x112xf32>
    %23 = arith.maximumf %21, %22 : vector<128x112xf32>
    %24 = arith.truncf %23 : vector<128x112xf32> to vector<128x112xbf16>
    %c0_16 = arith.constant 0 : index
    %c0_17 = arith.constant 0 : index
    %25 = vector.load %arg5[%c0_16, %c0_17] : memref<112x48xbf16, #tpu.memory_space<vmem>>, vector<112x48xbf16>
    %cst_18 = arith.constant dense<0.000000e+00> : vector<128x48xf32>
    %26 = tpu.matmul %24, %25, %cst_18 {dimension_numbers = #tpu.dot_dimension_numbers<[1], [0], [0], [1], [0, 0, 1, 1], [], []>} : vector<128x112xbf16>, vector<112x48xbf16>, vector<128x48xf32> -> vector<128x48xf32>
    %c0_19 = arith.constant 0 : index
    %c848 = arith.constant 848 : index
    %27 = vector.load %arg6[%c0_19, %c848] : memref<1x928xf32, #tpu.memory_space<vmem>>, vector<1x48xf32>
    %28 = vector.broadcast %27 : vector<1x48xf32> to vector<128x48xf32>
    %29 = arith.addf %26, %28 : vector<128x48xf32>
    %cst_20 = arith.constant 0.000000e+00 : f32
    %30 = vector.broadcast %cst_20 : f32 to vector<128x48xf32>
    %31 = arith.maximumf %29, %30 : vector<128x48xf32>
    %32 = arith.truncf %31 : vector<128x48xf32> to vector<128x48xbf16>
    %c0_21 = arith.constant 0 : index
    %c0_22 = arith.constant 0 : index
    %33 = vector.load %arg7[%c0_21, %c0_22] : memref<48x128xbf16, #tpu.memory_space<vmem>>, vector<48x128xbf16>
    %cst_23 = arith.constant dense<0.000000e+00> : vector<128x128xf32>
    %34 = tpu.matmul %32, %33, %cst_23 {dimension_numbers = #tpu.dot_dimension_numbers<[1], [0], [0], [1], [0, 0, 1, 1], [], []>} : vector<128x48xbf16>, vector<48x128xbf16>, vector<128x128xf32> -> vector<128x128xf32>
    %c0_24 = arith.constant 0 : index
    %c0_25 = arith.constant 0 : index
    %35 = vector.load %arg10[%c0_24, %c0_25] : memref<128x128xf32, #tpu.memory_space<vmem>>, vector<128x128xf32>
    tpu.vector_store %arg10[%c0_24, %c0_25], %34 {strides = array<i32>} : memref<128x128xf32, #tpu.memory_space<vmem>>, vector<128x128xf32>,
    %c0_26 = arith.constant 0 : index
    %c0_27 = arith.constant 0 : index
    %36 = vector.load %arg10[%c0_26, %c0_27] : memref<128x128xf32, #tpu.memory_space<vmem>>, vector<128x8xf32>
    %37 = arith.truncf %36 : vector<128x8xf32> to vector<128x8xbf16>
    %c0_28 = arith.constant 0 : index
    %c8 = arith.constant 8 : index
    %38 = vector.load %arg10[%c0_28, %c8] : memref<128x128xf32, #tpu.memory_space<vmem>>, vector<128x8xf32>
    %39 = arith.truncf %38 : vector<128x8xf32> to vector<128x8xbf16>
    %c0_29 = arith.constant 0 : index
    %c16 = arith.constant 16 : index
    %40 = vector.load %arg10[%c0_29, %c16] : memref<128x128xf32, #tpu.memory_space<vmem>>, vector<128x16xf32>
    %41 = arith.truncf %40 : vector<128x16xf32> to vector<128x16xbf16>
    %cst_30 = arith.constant dense<0.000000e+00> : vector<128x128xf32>
    %42 = tpu.matmul %39, %37, %cst_30 {dimension_numbers = #tpu.dot_dimension_numbers<[1], [1], [0], [0], [0, 0, 1, 0], [], []>} : vector<128x8xbf16>, vector<128x8xbf16>, vector<128x128xf32> -> vector<128x128xf32>
    %c0_31 = arith.constant 0 : index
    %c0_32 = arith.constant 0 : index
    %43 = vector.load %arg8[%c0_31, %c0_32] : memref<128x128xf32, #tpu.memory_space<vmem>>, vector<128x128xf32>
    %44 = arith.addf %42, %43 : vector<128x128xf32>
    %cst_33 = arith.constant dense<0xFF800000> : vector<128xf32>
    %45 = vector.multi_reduction <maximumf>, %44, %cst_33 [1] : vector<128x128xf32> to vector<128xf32>
    %46 = vector.shape_cast %45 : vector<128xf32> to vector<128x1xf32>
    %47 = vector.broadcast %46 : vector<128x1xf32> to vector<128x128xf32>
    %48 = arith.subf %44, %47 : vector<128x128xf32>
    %49 = math.exp %48 : vector<128x128xf32>
    %cst_34 = arith.constant dense<0.000000e+00> : vector<128xf32>
    %50 = vector.multi_reduction <add>, %49, %cst_34 [1] : vector<128x128xf32> to vector<128xf32>
    %51 = vector.shape_cast %50 : vector<128xf32> to vector<128x1xf32>
    %52 = tpu.reciprocal %51 {approx = true} : vector<128x1xf32> -> vector<128x1xf32>
    %53 = vector.broadcast %52 : vector<128x1xf32> to vector<128x128xf32>
    %54 = arith.mulf %49, %53 : vector<128x128xf32>
    %55 = arith.truncf %54 : vector<128x128xf32> to vector<128x128xbf16>
    %cst_35 = arith.constant dense<0.000000e+00> : vector<128x16xf32>
    %56 = tpu.matmul %55, %41, %cst_35 {dimension_numbers = #tpu.dot_dimension_numbers<[1], [0], [0], [1], [0, 0, 1, 1], [], []>} : vector<128x128xbf16>, vector<128x16xbf16>, vector<128x16xf32> -> vector<128x16xf32>
    %c0_36 = arith.constant 0 : index
    %c0_37 = arith.constant 0 : index
    %57 = vector.load %arg11[%c0_36, %c0_37] : memref<128x48xf32, #tpu.memory_space<vmem>>, vector<128x16xf32>
    tpu.vector_store %arg11[%c0_36, %c0_37], %56 {strides = array<i32>} : memref<128x48xf32, #tpu.memory_space<vmem>>, vector<128x16xf32>,
    %c0_38 = arith.constant 0 : index
    %c32 = arith.constant 32 : index
    %58 = vector.load %arg10[%c0_38, %c32] : memref<128x128xf32, #tpu.memory_space<vmem>>, vector<128x8xf32>
    %59 = arith.truncf %58 : vector<128x8xf32> to vector<128x8xbf16>
    %c0_39 = arith.constant 0 : index
    %c40 = arith.constant 40 : index
    %60 = vector.load %arg10[%c0_39, %c40] : memref<128x128xf32, #tpu.memory_space<vmem>>, vector<128x8xf32>
    %61 = arith.truncf %60 : vector<128x8xf32> to vector<128x8xbf16>
    %c0_40 = arith.constant 0 : index
    %c48 = arith.constant 48 : index
    %62 = vector.load %arg10[%c0_40, %c48] : memref<128x128xf32, #tpu.memory_space<vmem>>, vector<128x16xf32>
    %63 = arith.truncf %62 : vector<128x16xf32> to vector<128x16xbf16>
    %cst_41 = arith.constant dense<0.000000e+00> : vector<128x128xf32>
    %64 = tpu.matmul %61, %59, %cst_41 {dimension_numbers = #tpu.dot_dimension_numbers<[1], [1], [0], [0], [0, 0, 1, 0], [], []>} : vector<128x8xbf16>, vector<128x8xbf16>, vector<128x128xf32> -> vector<128x128xf32>
    %c0_42 = arith.constant 0 : index
    %c0_43 = arith.constant 0 : index
    %65 = vector.load %arg8[%c0_42, %c0_43] : memref<128x128xf32, #tpu.memory_space<vmem>>, vector<128x128xf32>
    %66 = arith.addf %64, %65 : vector<128x128xf32>
    %cst_44 = arith.constant dense<0xFF800000> : vector<128xf32>
    %67 = vector.multi_reduction <maximumf>, %66, %cst_44 [1] : vector<128x128xf32> to vector<128xf32>
    %68 = vector.shape_cast %67 : vector<128xf32> to vector<128x1xf32>
    %69 = vector.broadcast %68 : vector<128x1xf32> to vector<128x128xf32>
    %70 = arith.subf %66, %69 : vector<128x128xf32>
    %71 = math.exp %70 : vector<128x128xf32>
    %cst_45 = arith.constant dense<0.000000e+00> : vector<128xf32>
    %72 = vector.multi_reduction <add>, %71, %cst_45 [1] : vector<128x128xf32> to vector<128xf32>
    %73 = vector.shape_cast %72 : vector<128xf32> to vector<128x1xf32>
    %74 = tpu.reciprocal %73 {approx = true} : vector<128x1xf32> -> vector<128x1xf32>
    %75 = vector.broadcast %74 : vector<128x1xf32> to vector<128x128xf32>
    %76 = arith.mulf %71, %75 : vector<128x128xf32>
    %77 = arith.truncf %76 : vector<128x128xf32> to vector<128x128xbf16>
    %cst_46 = arith.constant dense<0.000000e+00> : vector<128x16xf32>
    %78 = tpu.matmul %77, %63, %cst_46 {dimension_numbers = #tpu.dot_dimension_numbers<[1], [0], [0], [1], [0, 0, 1, 1], [], []>} : vector<128x128xbf16>, vector<128x16xbf16>, vector<128x16xf32> -> vector<128x16xf32>
    %c0_47 = arith.constant 0 : index
    %c16_48 = arith.constant 16 : index
    %79 = vector.load %arg11[%c0_47, %c16_48] : memref<128x48xf32, #tpu.memory_space<vmem>>, vector<128x16xf32>
    tpu.vector_store %arg11[%c0_47, %c16_48], %78 {strides = array<i32>} : memref<128x48xf32, #tpu.memory_space<vmem>>, vector<128x16xf32>,
    %c0_49 = arith.constant 0 : index
    %c64 = arith.constant 64 : index
    %80 = vector.load %arg10[%c0_49, %c64] : memref<128x128xf32, #tpu.memory_space<vmem>>, vector<128x8xf32>
    %81 = arith.truncf %80 : vector<128x8xf32> to vector<128x8xbf16>
    %c0_50 = arith.constant 0 : index
    %c72 = arith.constant 72 : index
    %82 = vector.load %arg10[%c0_50, %c72] : memref<128x128xf32, #tpu.memory_space<vmem>>, vector<128x8xf32>
    %83 = arith.truncf %82 : vector<128x8xf32> to vector<128x8xbf16>
    %c0_51 = arith.constant 0 : index
    %c80 = arith.constant 80 : index
    %84 = vector.load %arg10[%c0_51, %c80] : memref<128x128xf32, #tpu.memory_space<vmem>>, vector<128x16xf32>
    %85 = arith.truncf %84 : vector<128x16xf32> to vector<128x16xbf16>
    %cst_52 = arith.constant dense<0.000000e+00> : vector<128x128xf32>
    %86 = tpu.matmul %83, %81, %cst_52 {dimension_numbers = #tpu.dot_dimension_numbers<[1], [1], [0], [0], [0, 0, 1, 0], [], []>} : vector<128x8xbf16>, vector<128x8xbf16>, vector<128x128xf32> -> vector<128x128xf32>
    %c0_53 = arith.constant 0 : index
    %c0_54 = arith.constant 0 : index
    %87 = vector.load %arg8[%c0_53, %c0_54] : memref<128x128xf32, #tpu.memory_space<vmem>>, vector<128x128xf32>
    %88 = arith.addf %86, %87 : vector<128x128xf32>
    %cst_55 = arith.constant dense<0xFF800000> : vector<128xf32>
    %89 = vector.multi_reduction <maximumf>, %88, %cst_55 [1] : vector<128x128xf32> to vector<128xf32>
    %90 = vector.shape_cast %89 : vector<128xf32> to vector<128x1xf32>
    %91 = vector.broadcast %90 : vector<128x1xf32> to vector<128x128xf32>
    %92 = arith.subf %88, %91 : vector<128x128xf32>
    %93 = math.exp %92 : vector<128x128xf32>
    %cst_56 = arith.constant dense<0.000000e+00> : vector<128xf32>
    %94 = vector.multi_reduction <add>, %93, %cst_56 [1] : vector<128x128xf32> to vector<128xf32>
    %95 = vector.shape_cast %94 : vector<128xf32> to vector<128x1xf32>
    %96 = tpu.reciprocal %95 {approx = true} : vector<128x1xf32> -> vector<128x1xf32>
    %97 = vector.broadcast %96 : vector<128x1xf32> to vector<128x128xf32>
    %98 = arith.mulf %93, %97 : vector<128x128xf32>
    %99 = arith.truncf %98 : vector<128x128xf32> to vector<128x128xbf16>
    %cst_57 = arith.constant dense<0.000000e+00> : vector<128x16xf32>
    %100 = tpu.matmul %99, %85, %cst_57 {dimension_numbers = #tpu.dot_dimension_numbers<[1], [0], [0], [1], [0, 0, 1, 1], [], []>} : vector<128x128xbf16>, vector<128x16xbf16>, vector<128x16xf32> -> vector<128x16xf32>
    %c0_58 = arith.constant 0 : index
    %c32_59 = arith.constant 32 : index
    %101 = vector.load %arg11[%c0_58, %c32_59] : memref<128x48xf32, #tpu.memory_space<vmem>>, vector<128x16xf32>
    tpu.vector_store %arg11[%c0_58, %c32_59], %100 {strides = array<i32>} : memref<128x48xf32, #tpu.memory_space<vmem>>, vector<128x16xf32>,
    %c0_60 = arith.constant 0 : index
    %c96 = arith.constant 96 : index
    %102 = vector.load %arg7[%c0_60, %c96] : memref<48x128xbf16, #tpu.memory_space<vmem>>, vector<48x32xbf16>
    %c0_61 = arith.constant 0 : index
    %c0_62 = arith.constant 0 : index
    %103 = vector.load %arg11[%c0_61, %c0_62] : memref<128x48xf32, #tpu.memory_space<vmem>>, vector<128x48xf32>
    %104 = arith.truncf %103 : vector<128x48xf32> to vector<128x48xbf16>
    %cst_63 = arith.constant dense<0.000000e+00> : vector<128x32xf32>
    %105 = tpu.matmul %104, %102, %cst_63 {dimension_numbers = #tpu.dot_dimension_numbers<[1], [0], [0], [1], [0, 0, 1, 1], [], []>} : vector<128x48xbf16>, vector<48x32xbf16>, vector<128x32xf32> -> vector<128x32xf32>
    %c0_64 = arith.constant 0 : index
    %c96_65 = arith.constant 96 : index
    %106 = vector.load %arg10[%c0_64, %c96_65] : memref<128x128xf32, #tpu.memory_space<vmem>>, vector<128x32xf32>
    %107 = arith.addf %106, %105 : vector<128x32xf32>
    %c0_66 = arith.constant 0 : index
    %c896 = arith.constant 896 : index
    %108 = vector.load %arg6[%c0_66, %c896] : memref<1x928xf32, #tpu.memory_space<vmem>>, vector<1x32xf32>
    %109 = vector.broadcast %108 : vector<1x32xf32> to vector<128x32xf32>
    %110 = arith.addf %107, %109 : vector<128x32xf32>
    %c0_67 = arith.constant 0 : index
    %c0_68 = arith.constant 0 : index
    %111 = vector.load %arg9[%c0_67, %c0_68] : memref<128x32xf32, #tpu.memory_space<vmem>>, vector<128x32xf32>
    tpu.vector_store %arg9[%c0_67, %c0_68], %110 {strides = array<i32>} : memref<128x32xf32, #tpu.memory_space<vmem>>, vector<128x32xf32>,
    return
  }
  func.func @transform_0(%arg0: i32) -> (i32, i32) {
    %c0_i32 = arith.constant 0 : i32
    %c0_i32_0 = arith.constant 0 : i32
    return %arg0, %c0_i32 : i32, i32
  }
  func.func @transform_1(%arg0: i32) -> (i32, i32) {
    %c0_i32 = arith.constant 0 : i32
    %c0_i32_0 = arith.constant 0 : i32
    %c0_i32_1 = arith.constant 0 : i32
    return %c0_i32, %c0_i32_0 : i32, i32
  }
  func.func @transform_2(%arg0: i32) -> (i32, i32) {
    %c0_i32 = arith.constant 0 : i32
    %c0_i32_0 = arith.constant 0 : i32
    %c0_i32_1 = arith.constant 0 : i32
    return %c0_i32, %c0_i32_0 : i32, i32
  }
  func.func @transform_3(%arg0: i32) -> (i32, i32) {
    %c0_i32 = arith.constant 0 : i32
    %c0_i32_0 = arith.constant 0 : i32
    %c0_i32_1 = arith.constant 0 : i32
    return %c0_i32, %c0_i32_0 : i32, i32
  }
  func.func @transform_4(%arg0: i32) -> (i32, i32) {
    %c0_i32 = arith.constant 0 : i32
    %c0_i32_0 = arith.constant 0 : i32
    %c0_i32_1 = arith.constant 0 : i32
    return %c0_i32, %c0_i32_0 : i32, i32
  }
  func.func @transform_5(%arg0: i32) -> (i32, i32) {
    %c0_i32 = arith.constant 0 : i32
    %c0_i32_0 = arith.constant 0 : i32
    %c0_i32_1 = arith.constant 0 : i32
    return %c0_i32, %c0_i32_0 : i32, i32
  }
  func.func @transform_6(%arg0: i32) -> (i32, i32) {
    %c0_i32 = arith.constant 0 : i32
    %c0_i32_0 = arith.constant 0 : i32
    %c0_i32_1 = arith.constant 0 : i32
    return %c0_i32, %c0_i32_0 : i32, i32
  }
  func.func @transform_7(%arg0: i32) -> (i32, i32) {
    %c0_i32 = arith.constant 0 : i32
    %c0_i32_0 = arith.constant 0 : i32
    %c0_i32_1 = arith.constant 0 : i32
    return %c0_i32, %c0_i32_0 : i32, i32
  }
  func.func @transform_8(%arg0: i32) -> (i32, i32) {
    %c0_i32 = arith.constant 0 : i32
    %c0_i32_0 = arith.constant 0 : i32
    return %arg0, %c0_i32 : i32, i32
  }
}

</mosaic_0001>

<llo_original>
// kernel: tpu_custom_call.1
$region0: #{tpu_custom_call.1}
  #allocation0 [shape = 'u32[]', space=smem, size = 0x4, offset = 0x4, fixed_abs, tag = 'smem constant byte address 0x4 - core index']
  #allocation1 [shape = 'u32[144,128]{1,0:T(1,128)}', space=vmem, size = 0x12000, scoped, tag = 'internal scratch']
  #allocation2 [shape = 'f32[128,128]{1,0:T(8,128)}', space=vmem, size = 0x10000, scoped, tag = 'scratch operand']
  #allocation3 [shape = 'f32[128,48]{1,0:T(8,128)}', space=vmem, size = 0x10000, scoped, tag = 'scratch operand']
  %s0 = inlined_call_operand.vmem [shape: bf16[256,64], index: 0, kind: input, shape index: {}]
  %s1 = inlined_call_operand.vmem [shape: bf16[64,496], index: 1, kind: input, shape index: {}]
  %s2 = inlined_call_operand.vmem [shape: bf16[496,240], index: 2, kind: input, shape index: {}]
  %s3 = inlined_call_operand.vmem [shape: bf16[240,112], index: 3, kind: input, shape index: {}]
  %s4 = inlined_call_operand.vmem [shape: bf16[112,48], index: 4, kind: input, shape index: {}]
  %s5 = inlined_call_operand.vmem [shape: f32[1,928], index: 5, kind: input, shape index: {}]
  %s6 = inlined_call_operand.vmem [shape: bf16[48,128], index: 6, kind: input, shape index: {}]
  %s7 = inlined_call_operand.vmem [shape: f32[128,128], index: 7, kind: input, shape index: {}]
  %s8 = inlined_call_operand.vmem [shape: f32[256,32], index: 8, kind: output, shape index: {}]
  %s9 = sld [smem:[#allocation0]]
  $region65: #{tpu_custom_call.1} parent=0
    _
  %s11 = ssub.s32 1, %s9
  %s12 = scalar_select 0, %s11, %s9
  loop: start=0, step=1, limit=4
  $region2: #{tpu_custom_call.1} parent=0 // loop_pre_header
    _
  $region3: #{tpu_custom_call.1} parent=0 // loop_header
    %s14 = sphi 0, %s18
    %p15 = scmp.ge.s32.totalorder %s14, 4
    %s24 = sphi 0, %s26
    %s27 = sphi 0, %s24
    %s28 = sphi 0, %s27
    %s44 = sphi 0, %s28
    %s48 = sphi 0, %s48
    %s50 = sphi 0, %s48
    %s51 = sphi 0, %s50
    %s65 = sphi 0, %s51
    %s69 = sphi 0, %s69
    %s71 = sphi 0, %s69
    %s72 = sphi 0, %s71
    %s86 = sphi 0, %s72
    %s90 = sphi 0, %s90
    %s92 = sphi 0, %s90
    %s93 = sphi 0, %s92
    %s107 = sphi 0, %s93
    %s111 = sphi 0, %s111
    %s113 = sphi 0, %s111
    %s114 = sphi 0, %s113
    %s128 = sphi 0, %s114
    %s132 = sphi 0, %s132
    %s134 = sphi 0, %s132
    %s135 = sphi 0, %s134
    %s149 = sphi 0, %s135
    %s153 = sphi 0, %s153
    %s155 = sphi 0, %s153
    %s156 = sphi 0, %s155
    %s170 = sphi 0, %s156
    %s174 = sphi 0, %s174
    %s176 = sphi 0, %s174
    %s177 = sphi 0, %s176
    %s191 = sphi 0, %s177
    %s197 = sphi 0, %s199
    %s200 = sphi 0, %s197
    %s201 = sphi 0, %s200
    %s217 = sphi 0, %s201
  $region4: #{tpu_custom_call.1} parent=0 // loop_header_branch
    %17 = sbr.rel (%p15) target = $region8
  $region5: #{tpu_custom_call.1} parent=0 // loop_body
    %s19 = ssub.s32 %s14, 1
    %s20 = ssub.s32 %s14, 2
    %s21 = sadd.s32 %s14, 1
    %s22 = ssub.s32 %s14, %s21
    %p23 = scmp.eq.s32.totalorder %s22, 0
    %s25 = sadd.s32 %s24, 1
    %s26 = scalar_select %p23, %s24, %s25
    %p29 = pneg %p23
    %p30 = scmp.eq.s32.totalorder %s14, 1
    %p31 = por %p29, %p30
    %p32 = scmp.ne.s32.totalorder %s24, %s27
    %p33 = scmp.eq.s32.totalorder %s14, 0
    %p34 = por %p32, %p33
    %p35 = scmp.ne.s32.totalorder %s24, %s27
    %p36 = scmp.eq.s32.totalorder %s19, 1
    %p37 = por %p35, %p36
    %p38 = scmp.ne.s32.totalorder %s27, %s28
    %p39 = scmp.eq.s32.totalorder %s19, 0
    %p40 = por %p38, %p39
    %p41 = scmp.ne.s32.totalorder %s27, %s28
    %p42 = scmp.eq.s32.totalorder %s20, 1
    %p43 = por %p41, %p42
    %p45 = scmp.ne.s32.totalorder %s28, %s44
    %p46 = scmp.eq.s32.totalorder %s20, 0
    %p47 = por %p45, %p46
    %s49 = sadd.s32 %s48, 1
    %p52 = scmp.eq.s32.totalorder %s14, 1
    %p53 = scmp.ne.s32.totalorder %s48, %s50
    %p54 = scmp.eq.s32.totalorder %s14, 0
    %p55 = por %p53, %p54
    %p56 = scmp.ne.s32.totalorder %s48, %s50
    %p57 = scmp.eq.s32.totalorder %s19, 1
    %p58 = por %p56, %p57
    %p59 = scmp.ne.s32.totalorder %s50, %s51
    %p60 = scmp.eq.s32.totalorder %s19, 0
    %p61 = por %p59, %p60
    %p62 = scmp.ne.s32.totalorder %s50, %s51
    %p63 = scmp.eq.s32.totalorder %s20, 1
    %p64 = por %p62, %p63
    %p66 = scmp.ne.s32.totalorder %s51, %s65
    %p67 = scmp.eq.s32.totalorder %s20, 0
    %p68 = por %p66, %p67
    %s70 = sadd.s32 %s69, 1
    %p73 = scmp.eq.s32.totalorder %s14, 1
    %p74 = scmp.ne.s32.totalorder %s69, %s71
    %p75 = scmp.eq.s32.totalorder %s14, 0
    %p76 = por %p74, %p75
    %p77 = scmp.ne.s32.totalorder %s69, %s71
    %p78 = scmp.eq.s32.totalorder %s19, 1
    %p79 = por %p77, %p78
    %p80 = scmp.ne.s32.totalorder %s71, %s72
    %p81 = scmp.eq.s32.totalorder %s19, 0
    %p82 = por %p80, %p81
    %p83 = scmp.ne.s32.totalorder %s71, %s72
    %p84 = scmp.eq.s32.totalorder %s20, 1
    %p85 = por %p83, %p84
    %p87 = scmp.ne.s32.totalorder %s72, %s86
    %p88 = scmp.eq.s32.totalorder %s20, 0
    %p89 = por %p87, %p88
    %s91 = sadd.s32 %s90, 1
    %p94 = scmp.eq.s32.totalorder %s14, 1
    %p95 = scmp.ne.s32.totalorder %s90, %s92
    %p96 = scmp.eq.s32.totalorder %s14, 0
    %p97 = por %p95, %p96
    %p98 = scmp.ne.s32.totalorder %s90, %s92
    %p99 = scmp.eq.s32.totalorder %s19, 1
    %p100 = por %p98, %p99
    %p101 = scmp.ne.s32.totalorder %s92, %s93
    %p102 = scmp.eq.s32.totalorder %s19, 0
    %p103 = por %p101, %p102
    %p104 = scmp.ne.s32.totalorder %s92, %s93
    %p105 = scmp.eq.s32.totalorder %s20, 1
    %p106 = por %p104, %p105
    %p108 = scmp.ne.s32.totalorder %s93, %s107
    %p109 = scmp.eq.s32.totalorder %s20, 0
    %p110 = por %p108, %p109
    %s112 = sadd.s32 %s111, 1
    %p115 = scmp.eq.s32.totalorder %s14, 1
    %p116 = scmp.ne.s32.totalorder %s111, %s113
    %p117 = scmp.eq.s32.totalorder %s14, 0
    %p118 = por %p116, %p117
    %p119 = scmp.ne.s32.totalorder %s111, %s113
    %p120 = scmp.eq.s32.totalorder %s19, 1
    %p121 = por %p119, %p120
    %p122 = scmp.ne.s32.totalorder %s113, %s114
    %p123 = scmp.eq.s32.totalorder %s19, 0
    %p124 = por %p122, %p123
    %p125 = scmp.ne.s32.totalorder %s113, %s114
    %p126 = scmp.eq.s32.totalorder %s20, 1
    %p127 = por %p125, %p126
    %p129 = scmp.ne.s32.totalorder %s114, %s128
    %p130 = scmp.eq.s32.totalorder %s20, 0
    %p131 = por %p129, %p130
    %s133 = sadd.s32 %s132, 1
    %p136 = scmp.eq.s32.totalorder %s14, 1
    %p137 = scmp.ne.s32.totalorder %s132, %s134
    %p138 = scmp.eq.s32.totalorder %s14, 0
    %p139 = por %p137, %p138
    %p140 = scmp.ne.s32.totalorder %s132, %s134
    %p141 = scmp.eq.s32.totalorder %s19, 1
    %p142 = por %p140, %p141
    %p143 = scmp.ne.s32.totalorder %s134, %s135
    %p144 = scmp.eq.s32.totalorder %s19, 0
    %p145 = por %p143, %p144
    %p146 = scmp.ne.s32.totalorder %s134, %s135
    %p147 = scmp.eq.s32.totalorder %s20, 1
    %p148 = por %p146, %p147
    %p150 = scmp.ne.s32.totalorder %s135, %s149
    %p151 = scmp.eq.s32.totalorder %s20, 0
    %p152 = por %p150, %p151
    %s154 = sadd.s32 %s153, 1
    %p157 = scmp.eq.s32.totalorder %s14, 1
    %p158 = scmp.ne.s32.totalorder %s153, %s155
    %p159 = scmp.eq.s32.totalorder %s14, 0
    %p160 = por %p158, %p159
    %p161 = scmp.ne.s32.totalorder %s153, %s155
    %p162 = scmp.eq.s32.totalorder %s19, 1
    %p163 = por %p161, %p162
    %p164 = scmp.ne.s32.totalorder %s155, %s156
    %p165 = scmp.eq.s32.totalorder %s19, 0
    %p166 = por %p164, %p165
    %p167 = scmp.ne.s32.totalorder %s155, %s156
    %p168 = scmp.eq.s32.totalorder %s20, 1
    %p169 = por %p167, %p168
    %p171 = scmp.ne.s32.totalorder %s156, %s170
    %p172 = scmp.eq.s32.totalorder %s20, 0
    %p173 = por %p171, %p172
    %s175 = sadd.s32 %s174, 1
    %p178 = scmp.eq.s32.totalorder %s14, 1
    %p179 = scmp.ne.s32.totalorder %s174, %s176
    %p180 = scmp.eq.s32.totalorder %s14, 0
    %p181 = por %p179, %p180
    %p182 = scmp.ne.s32.totalorder %s174, %s176
    %p183 = scmp.eq.s32.totalorder %s19, 1
    %p184 = por %p182, %p183
    %p185 = scmp.ne.s32.totalorder %s176, %s177
    %p186 = scmp.eq.s32.totalorder %s19, 0
    %p187 = por %p185, %p186
    %p188 = scmp.ne.s32.totalorder %s176, %s177
    %p189 = scmp.eq.s32.totalorder %s20, 1
    %p190 = por %p188, %p189
    %p192 = scmp.ne.s32.totalorder %s177, %s191
    %p193 = scmp.eq.s32.totalorder %s20, 0
    %p194 = por %p192, %p193
    %s195 = ssub.s32 %s14, %s21
    %p196 = scmp.eq.s32.totalorder %s195, 0
    %s198 = sadd.s32 %s197, 1
    %s199 = scalar_select %p196, %s197, %s198
    %p202 = pneg %p196
    %p203 = scmp.eq.s32.totalorder %s14, 1
    %p204 = por %p202, %p203
    %p205 = scmp.ne.s32.totalorder %s197, %s200
    %p206 = scmp.eq.s32.totalorder %s14, 0
    %p207 = por %p205, %p206
    %p208 = scmp.ne.s32.totalorder %s197, %s200
    %p209 = scmp.eq.s32.totalorder %s19, 1
    %p210 = por %p208, %p209
    %p211 = scmp.ne.s32.totalorder %s200, %s201
    %p212 = scmp.eq.s32.totalorder %s19, 0
    %p213 = por %p211, %p212
    %p214 = scmp.ne.s32.totalorder %s200, %s201
    %p215 = scmp.eq.s32.totalorder %s20, 1
    %p216 = por %p214, %p215
    %p218 = scmp.ne.s32.totalorder %s201, %s217
    %p219 = scmp.eq.s32.totalorder %s20, 0
    %p220 = por %p218, %p219
    %p221 = scmp.le.s32.totalorder 1, %s14
    %p222 = scmp.lt.s32.totalorder %s14, 3
    %p223 = pnand %p221, %p222
    %p224 = pneg %p223
    // Predicated region
    $region9: #{tpu_custom_call.1} parent=5 // pred_check
      _
    $region10: #{tpu_custom_call.1} parent=5 // pred_check_branch
      %226 = sbr.rel (%p223) target = $region12
    $region11: #{tpu_custom_call.1} parent=5 // pred_region
      %s227 = ssub.s32 %s14, 1
      // Predicated region
      $region13: #{tpu_custom_call.1} parent=11 // pred_check
        %p228 = pneg %p61
      $region14: #{tpu_custom_call.1} parent=11 // pred_check_branch
        %230 = sbr.rel (%p228) target = $region16
      $region15: #{tpu_custom_call.1} parent=11 // pred_region
        _
      $region16: #{tpu_custom_call.1} parent=11 // pred_fallthru
        _
      // Predicated region
      $region17: #{tpu_custom_call.1} parent=11 // pred_check
        %p231 = pneg %p82
      $region18: #{tpu_custom_call.1} parent=11 // pred_check_branch
        %233 = sbr.rel (%p231) target = $region20
      $region19: #{tpu_custom_call.1} parent=11 // pred_region
        _
      $region20: #{tpu_custom_call.1} parent=11 // pred_fallthru
        _
      // Predicated region
      $region21: #{tpu_custom_call.1} parent=11 // pred_check
        %p234 = pneg %p103
      $region22: #{tpu_custom_call.1} parent=11 // pred_check_branch
        %236 = sbr.rel (%p234) target = $region24
      $region23: #{tpu_custom_call.1} parent=11 // pred_region
        _
      $region24: #{tpu_custom_call.1} parent=11 // pred_fallthru
        _
      // Predicated region
      $region25: #{tpu_custom_call.1} parent=11 // pred_check
        %p237 = pneg %p124
      $region26: #{tpu_custom_call.1} parent=11 // pred_check_branch
        %239 = sbr.rel (%p237) target = $region28
      $region27: #{tpu_custom_call.1} parent=11 // pred_region
        _
      $region28: #{tpu_custom_call.1} parent=11 // pred_fallthru
        _
      // Predicated region
      $region29: #{tpu_custom_call.1} parent=11 // pred_check
        %p240 = pneg %p145
      $region30: #{tpu_custom_call.1} parent=11 // pred_check_branch
        %242 = sbr.rel (%p240) target = $region32
      $region31: #{tpu_custom_call.1} parent=11 // pred_region
        _
      $region32: #{tpu_custom_call.1} parent=11 // pred_fallthru
        _
      // Predicated region
      $region33: #{tpu_custom_call.1} parent=11 // pred_check
        %p243 = pneg %p166
      $region34: #{tpu_custom_call.1} parent=11 // pred_check_branch
        %245 = sbr.rel (%p243) target = $region36
      $region35: #{tpu_custom_call.1} parent=11 // pred_region
        _
      $region36: #{tpu_custom_call.1} parent=11 // pred_fallthru
        _
      // Predicated region
      $region37: #{tpu_custom_call.1} parent=11 // pred_check
        %p246 = pneg %p187
      $region38: #{tpu_custom_call.1} parent=11 // pred_check_branch
        %248 = sbr.rel (%p246) target = $region40
      $region39: #{tpu_custom_call.1} parent=11 // pred_region
        _
      $region40: #{tpu_custom_call.1} parent=11 // pred_fallthru
        _
    $region12: #{tpu_custom_call.1} parent=5 // pred_fallthru
      _
    %p249 = scmp.lt.s32.totalorder %s14, 2
    // Predicated region
    $region41: #{tpu_custom_call.1} parent=5 // pred_check
      %p250 = pneg %p249
    $region42: #{tpu_custom_call.1} parent=5 // pred_check_branch
      %252 = sbr.rel (%p250) target = $region44
    $region43: #{tpu_custom_call.1} parent=5 // pred_region
      // Predicated region
      $region45: #{tpu_custom_call.1} parent=43 // pred_check
        %p253 = pneg %p34
      $region46: #{tpu_custom_call.1} parent=43 // pred_check_branch
        %255 = sbr.rel (%p253) target = $region48
      $region47: #{tpu_custom_call.1} parent=43 // pred_region
        %s256 = smul.u32 16, %s14
        %p257 = scmp.lt.s32.totalorder %s256, 31
        %s258 = scalar_select %p257, %s256, 31
        %s259 = smul.addr %s258, 4
        %s260 = scalar_lea.vmem %s0, %s259
        %s261 = smul.u32 16, %s14
      $region48: #{tpu_custom_call.1} parent=43 // pred_fallthru
        _
    $region44: #{tpu_custom_call.1} parent=5 // pred_fallthru
      _
    %p262 = scmp.le.s32.totalorder 1, %s14
    %p263 = scmp.lt.s32.totalorder %s14, 3
    %p264 = pnand %p262, %p263
    %p265 = pneg %p264
    // Predicated region
    $region49: #{tpu_custom_call.1} parent=5 // pred_check
      _
    $region50: #{tpu_custom_call.1} parent=5 // pred_check_branch
      %267 = sbr.rel (%p264) target = $region52
    $region51: #{tpu_custom_call.1} parent=5 // pred_region
      %s268 = ssub.s32 %s14, 1
      %s269 = smul.u32 16, %s19
      %p270 = scmp.lt.s32.totalorder %s269, 31
      %s271 = scalar_select %p270, %s269, 31
      %s272 = smul.addr %s271, 4
      %s273 = scalar_lea.vmem %s0, %s272
      %p274 = pneg %p40
      %p275 = pneg %p37
      %p276 = pneg %p61
      %p277 = pneg %p58
      %p278 = pneg %p82
      %p279 = pneg %p79
      %p280 = pneg %p103
      %p281 = pneg %p100
      %p282 = pneg %p124
      %p283 = pneg %p121
      %p284 = pneg %p145
      %p285 = pneg %p142
      %p286 = pneg %p166
      %p287 = pneg %p163
      %p288 = pneg %p187
      %p289 = pneg %p184
      %p290 = pneg %p213
      %p291 = pneg %p210
      %s292 = smul.u32 16, %s19
      %p293 = scmp.lt.s32.totalorder %s292, 31
      %s294 = scalar_select %p293, %s292, 31
      %s295 = smul.addr %s294, 8
      %s296 = scalar_lea.vmem %s8, %s295
      %s297 = smul.u32 16, %s19
      %p298 = scmp.lt.s32.totalorder %s297, 31
      %s299 = scalar_select %p298, %s297, 31
      %s300 = smul.addr %s299, 4
      %s301 = scalar_lea.vmem %s0, %s300
      %s302 = smul.u32 16, %s19
      %s303 = smul.u32 16, %s19
      %p304 = scmp.lt.s32.totalorder %s303, 31
      %s305 = scalar_select %p304, %s303, 31
      %s306 = smul.addr %s305, 8
      %s307 = scalar_lea.vmem %s8, %s306
      %s308 = smul.u32 16, %s19
      %v310 = vld [vmem:[%s301] sm:$0xf]
      %v311 = vld [vmem:[%s301 + $0x4] sm:$0xf]
      %v312 = vld [vmem:[%s301 + $0x8] sm:$0xf]
      %v313 = vld [vmem:[%s301 + $0xc] sm:$0xf]
      %v314 = vld [vmem:[%s301 + $0x10] sm:$0xf]
      %v315 = vld [vmem:[%s301 + $0x14] sm:$0xf]
      %v316 = vld [vmem:[%s301 + $0x18] sm:$0xf]
      %v317 = vld [vmem:[%s301 + $0x1c] sm:$0xf]
      %v318 = vld [vmem:[%s301 + $0x20] sm:$0xf]
      %v319 = vld [vmem:[%s301 + $0x24] sm:$0xf]
      %v320 = vld [vmem:[%s301 + $0x28] sm:$0xf]
      %v321 = vld [vmem:[%s301 + $0x2c] sm:$0xf]
      %v322 = vld [vmem:[%s301 + $0x30] sm:$0xf]
      %v323 = vld [vmem:[%s301 + $0x34] sm:$0xf]
      %v324 = vld [vmem:[%s301 + $0x38] sm:$0xf]
      %v325 = vld [vmem:[%s301 + $0x3c] sm:$0xf]
      %v326 = vld [vmem:[%s1] sm:$0xff]
      %v327 = vld [vmem:[%s1 + $0x8] sm:$0xff]
      %v328 = vld [vmem:[%s1 + $0x10] sm:$0xff]
      %v329 = vld [vmem:[%s1 + $0x18] sm:$0xff]
      %v330 = vld [vmem:[%s1 + $0x20] sm:$0xff]
      %v331 = vld [vmem:[%s1 + $0x28] sm:$0xff]
      %v332 = vld [vmem:[%s1 + $0x30] sm:$0xff]
      %v333 = vld [vmem:[%s1 + $0x38] sm:$0xff]
      %v334 = vld [vmem:[%s1 + $0x40] sm:$0xff]
      %v335 = vld [vmem:[%s1 + $0x48] sm:$0xff]
      %v336 = vld [vmem:[%s1 + $0x50] sm:$0xff]
      %v337 = vld [vmem:[%s1 + $0x58] sm:$0xff]
      %v338 = vld [vmem:[%s1 + $0x60] sm:$0xff]
      %v339 = vld [vmem:[%s1 + $0x68] sm:$0xff]
      %v340 = vld [vmem:[%s1 + $0x70] sm:$0xff]
      %v341 = vld [vmem:[%s1 + $0x78] sm:$0xff]
      %v342 = vld [vmem:[%s5] sm:$0xf]
      %v344 = vlaneseq
      %v345 = vshrl.u32 %v344, 7
      %v346 = vsub.s32 0, %v345
      %v347 = vrot.slane %v342, %v346
      %v348 = vlaneseq
      %v349 = vshrl.u32 %v348, 7
      %v350 = vsub.s32 1, %v349
      %v351 = vrot.slane %v342, %v350
      %v352 = vlaneseq
      %v353 = vshrl.u32 %v352, 7
      %v354 = vsub.s32 2, %v353
      %v355 = vrot.slane %v342, %v354
      %v356 = vlaneseq
      %v357 = vshrl.u32 %v356, 7
      %v358 = vsub.s32 3, %v357
      %v359 = vrot.slane %v342, %v358
      %v380 = vunpack.c.l.b16 %v310
      %v381 = vunpack.c.l.b16 %v311
      %v382 = vunpack.c.l.b16 %v312
      %v383 = vunpack.c.l.b16 %v313
      %v384 = vunpack.c.l.b16 %v314
      %v385 = vunpack.c.l.b16 %v315
      %v386 = vunpack.c.l.b16 %v316
      %v387 = vunpack.c.l.b16 %v317
      %v388 = vunpack.c.l.b16 %v318
      %v389 = vunpack.c.l.b16 %v319
      %v390 = vunpack.c.l.b16 %v320
      %v391 = vunpack.c.l.b16 %v321
      %v392 = vunpack.c.l.b16 %v322
      %v393 = vunpack.c.l.b16 %v323
      %v394 = vunpack.c.l.b16 %v324
      %v395 = vunpack.c.l.b16 %v325
      %v396 = vpack.c.b16 %v381, %v380
      %v397 = vpack.c.b16 %v383, %v382
      %v398 = vpack.c.b16 %v385, %v384
      %v399 = vpack.c.b16 %v387, %v386
      %v400 = vpack.c.b16 %v389, %v388
      %v401 = vpack.c.b16 %v391, %v390
      %v402 = vpack.c.b16 %v393, %v392
      %v403 = vpack.c.b16 %v395, %v394
      %v420 = vunpack.c.l.b16 %v326
      %v421 = vunpack.c.h.b16 %v326
      %v422 = vunpack.c.l.b16 %v327
      %v423 = vunpack.c.h.b16 %v327
      %v424 = vunpack.c.l.b16 %v328
      %v425 = vunpack.c.h.b16 %v328
      %v426 = vunpack.c.l.b16 %v329
      %v427 = vunpack.c.h.b16 %v329
      %v428 = vunpack.c.l.b16 %v330
      %v429 = vunpack.c.h.b16 %v330
      %v430 = vunpack.c.l.b16 %v331
      %v431 = vunpack.c.h.b16 %v331
      %v432 = vunpack.c.l.b16 %v332
      %v433 = vunpack.c.h.b16 %v332
      %v434 = vunpack.c.l.b16 %v333
      %v435 = vunpack.c.h.b16 %v333
      %v436 = vunpack.c.l.b16 %v334
      %v437 = vunpack.c.h.b16 %v334
      %v438 = vunpack.c.l.b16 %v335
      %v439 = vunpack.c.h.b16 %v335
      %v440 = vunpack.c.l.b16 %v336
      %v441 = vunpack.c.h.b16 %v336
      %v442 = vunpack.c.l.b16 %v337
      %v443 = vunpack.c.h.b16 %v337
      %v444 = vunpack.c.l.b16 %v338
      %v445 = vunpack.c.h.b16 %v338
      %v446 = vunpack.c.l.b16 %v339
      %v447 = vunpack.c.h.b16 %v339
      %v448 = vunpack.c.l.b16 %v340
      %v449 = vunpack.c.h.b16 %v340
      %v450 = vunpack.c.l.b16 %v341
      %v451 = vunpack.c.h.b16 %v341
      %v452 = vpack.c.b16 %v424, %v420
      %v453 = vpack.c.b16 %v425, %v421
      %v454 = vpack.c.b16 %v426, %v422
      %v455 = vpack.c.b16 %v427, %v423
      %v456 = vpack.c.b16 %v432, %v428
      %v457 = vpack.c.b16 %v433, %v429
      %v458 = vpack.c.b16 %v434, %v430
      %v459 = vpack.c.b16 %v435, %v431
      %v460 = vpack.c.b16 %v440, %v436
      %v461 = vpack.c.b16 %v441, %v437
      %v462 = vpack.c.b16 %v442, %v438
      %v463 = vpack.c.b16 %v443, %v439
      %v464 = vpack.c.b16 %v448, %v444
      %v465 = vpack.c.b16 %v449, %v445
      %v466 = vpack.c.b16 %v450, %v446
      %v467 = vpack.c.b16 %v451, %v447
      %vm484 = vcmask 523264
      %v486 = vsel %vm484, %v396, 0
      %v489 = vsel %vm484, %v397, 0
      %v492 = vsel %vm484, %v398, 0
      %v495 = vsel %vm484, %v399, 0
      %v498 = vsel %vm484, %v400, 0
      %v501 = vsel %vm484, %v401, 0
      %v504 = vsel %vm484, %v402, 0
      %v507 = vsel %vm484, %v403, 0
      %509 = vmatprep.subr.bf16.mxu0 %v453
      %510 = vmatpush1.bf16.msra.mxu0 %v452
      %511 = vmatprep.subr.bf16.mxu0 %v457
      %512 = vmatpush1.bf16.msra.mxu0 %v456
      %513 = vmatprep.subr.bf16.mxu0 %v461
      %514 = vmatpush1.bf16.msra.mxu0 %v460
      %515 = vmatprep.subr.bf16.mxu0 %v465
      %516 = vmatpush1.bf16.msra.mxu0 %v464
      %517 = vmatprep.subr.bf16.mxu0 0
      %518 = vmatpush1.bf16.msra.mxu0 0
      %519 = vmatprep.subr.bf16.mxu0 0
      %520 = vmatpush1.bf16.msra.mxu0 0
      %521 = vmatprep.subr.bf16.mxu0 0
      %522 = vmatpush1.bf16.msra.mxu0 0
      %523 = vmatprep.subr.bf16.mxu0 0
      %524 = vmatpush1.bf16.msra.mxu0 0
      %525 = vmatprep.subr.bf16.mxu0 0
      %526 = vmatpush1.bf16.msra.mxu0 0
      %527 = vmatprep.subr.bf16.mxu0 0
      %528 = vmatpush1.bf16.msra.mxu0 0
      %529 = vmatprep.subr.bf16.mxu0 0
      %530 = vmatpush1.bf16.msra.mxu0 0
      %531 = vmatprep.subr.bf16.mxu0 0
      %532 = vmatpush1.bf16.msra.mxu0 0
      %533 = vmatprep.subr.bf16.mxu0 0
      %534 = vmatpush1.bf16.msra.mxu0 0
      %535 = vmatprep.subr.bf16.mxu0 0
      %536 = vmatpush1.bf16.msra.mxu0 0
      %537 = vmatprep.subr.bf16.mxu0 0
      %538 = vmatpush1.bf16.msra.mxu0 0
      %539 = vmatprep.subr.bf16.mxu0 0
      %540 = vmatpush1.bf16.msra.mxu0 0
      %541 = vmatprep.mubr.bf16.mxu0 0
      %542 = vmatmul.mubr.bf16.gmra.mrb[0].mxu0 %v486
      %v543 = vpop.f32.mrb[0].mxu0
      %v544 = vadd.f32 %v347, %v543
      %v545 = vpop.f32.mrb[0].mxu0
      %v546 = vadd.f32 %v351, %v545
      %v547 = vpop.f32.mrb[0].mxu0
      %v548 = vadd.f32 %v347, %v547
      %v549 = vpop.f32.mrb[0].mxu0
      %v550 = vadd.f32 %v351, %v549
      %551 = vmatprep.mubr.bf16.mxu0 0
      %552 = vmatmul.mubr.bf16.gmra.mrb[0].mxu0 %v489
      %v553 = vpop.f32.mrb[0].mxu0
      %v554 = vadd.f32 %v347, %v553
      %v555 = vpop.f32.mrb[0].mxu0
      %v556 = vadd.f32 %v351, %v555
      %v557 = vpop.f32.mrb[0].mxu0
      %v558 = vadd.f32 %v347, %v557
      %v559 = vpop.f32.mrb[0].mxu0
      %v560 = vadd.f32 %v351, %v559
      %561 = vmatprep.mubr.bf16.mxu0 0
      %562 = vmatmul.mubr.bf16.gmra.mrb[0].mxu0 %v492
      %v563 = vpop.f32.mrb[0].mxu0
      %v564 = vadd.f32 %v347, %v563
      %v565 = vpop.f32.mrb[0].mxu0
      %v566 = vadd.f32 %v351, %v565
      %v567 = vpop.f32.mrb[0].mxu0
      %v568 = vadd.f32 %v347, %v567
      %v569 = vpop.f32.mrb[0].mxu0
      %v570 = vadd.f32 %v351, %v569
      %571 = vmatprep.mubr.bf16.mxu0 0
      %572 = vmatmul.mubr.bf16.gmra.mrb[0].mxu0 %v495
      %v573 = vpop.f32.mrb[0].mxu0
      %v574 = vadd.f32 %v347, %v573
      %v575 = vpop.f32.mrb[0].mxu0
      %v576 = vadd.f32 %v351, %v575
      %v577 = vpop.f32.mrb[0].mxu0
      %v578 = vadd.f32 %v347, %v577
      %v579 = vpop.f32.mrb[0].mxu0
      %v580 = vadd.f32 %v351, %v579
      %581 = vmatprep.mubr.bf16.mxu0 0
      %582 = vmatmul.mubr.bf16.gmra.mrb[0].mxu0 %v498
      %v583 = vpop.f32.mrb[0].mxu0
      %v584 = vadd.f32 %v347, %v583
      %v585 = vpop.f32.mrb[0].mxu0
      %v586 = vadd.f32 %v351, %v585
      %v587 = vpop.f32.mrb[0].mxu0
      %v588 = vadd.f32 %v347, %v587
      %v589 = vpop.f32.mrb[0].mxu0
      %v590 = vadd.f32 %v351, %v589
      %591 = vmatprep.mubr.bf16.mxu0 0
      %592 = vmatmul.mubr.bf16.gmra.mrb[0].mxu0 %v501
      %v593 = vpop.f32.mrb[0].mxu0
      %v594 = vadd.f32 %v347, %v593
      %v595 = vpop.f32.mrb[0].mxu0
      %v596 = vadd.f32 %v351, %v595
      %v597 = vpop.f32.mrb[0].mxu0
      %v598 = vadd.f32 %v347, %v597
      %v599 = vpop.f32.mrb[0].mxu0
      %v600 = vadd.f32 %v351, %v599
      %601 = vmatprep.mubr.bf16.mxu0 0
      %602 = vmatmul.mubr.bf16.gmra.mrb[0].mxu0 %v504
      %v603 = vpop.f32.mrb[0].mxu0
      %v604 = vadd.f32 %v347, %v603
      %v605 = vpop.f32.mrb[0].mxu0
      %v606 = vadd.f32 %v351, %v605
      %v607 = vpop.f32.mrb[0].mxu0
      %v608 = vadd.f32 %v347, %v607
      %v609 = vpop.f32.mrb[0].mxu0
      %v610 = vadd.f32 %v351, %v609
      %611 = vmatprep.mubr.bf16.mxu0 0
      %612 = vmatmul.mubr.bf16.gmra.mrb[0].mxu0 %v507
      %v613 = vpop.f32.mrb[0].mxu0
      %v614 = vadd.f32 %v347, %v613
      %v615 = vpop.f32.mrb[0].mxu0
      %v616 = vadd.f32 %v351, %v615
      %v617 = vpop.f32.mrb[0].mxu0
      %v618 = vadd.f32 %v347, %v617
      %v619 = vpop.f32.mrb[0].mxu0
      %v620 = vadd.f32 %v351, %v619
      %621 = vdwg.mxu0
      %622 = vmatprep.subr.bf16.mxu0 %v455
      %623 = vmatpush1.bf16.msra.mxu0 %v454
      %624 = vmatprep.subr.bf16.mxu0 %v459
      %625 = vmatpush1.bf16.msra.mxu0 %v458
      %626 = vmatprep.subr.bf16.mxu0 %v463
      %627 = vmatpush1.bf16.msra.mxu0 %v462
      %628 = vmatprep.subr.bf16.mxu0 %v467
      %629 = vmatpush1.bf16.msra.mxu0 %v466
      %630 = vmatprep.subr.bf16.mxu0 0
      %631 = vmatpush1.bf16.msra.mxu0 0
      %632 = vmatprep.subr.bf16.mxu0 0
      %633 = vmatpush1.bf16.msra.mxu0 0
      %634 = vmatprep.subr.bf16.mxu0 0
      %635 = vmatpush1.bf16.msra.mxu0 0
      %636 = vmatprep.subr.bf16.mxu0 0
      %637 = vmatpush1.bf16.msra.mxu0 0
      %638 = vmatprep.subr.bf16.mxu0 0
      %639 = vmatpush1.bf16.msra.mxu0 0
      %640 = vmatprep.subr.bf16.mxu0 0
      %641 = vmatpush1.bf16.msra.mxu0 0
      %642 = vmatprep.subr.bf16.mxu0 0
      %643 = vmatpush1.bf16.msra.mxu0 0
      %644 = vmatprep.subr.bf16.mxu0 0
      %645 = vmatpush1.bf16.msra.mxu0 0
      %646 = vmatprep.subr.bf16.mxu0 0
      %647 = vmatpush1.bf16.msra.mxu0 0
      %648 = vmatprep.subr.bf16.mxu0 0
      %649 = vmatpush1.bf16.msra.mxu0 0
      %650 = vmatprep.subr.bf16.mxu0 0
      %651 = vmatpush1.bf16.msra.mxu0 0
      %652 = vmatprep.subr.bf16.mxu0 0
      %653 = vmatpush1.bf16.msra.mxu0 0
      %654 = vmatprep.mubr.bf16.mxu0 0
      %655 = vmatmul.mubr.bf16.gmra.mrb[0].mxu0 %v486
      %v656 = vpop.f32.mrb[0].mxu0
      %v657 = vadd.f32 %v355, %v656
      %v658 = vpop.f32.mrb[0].mxu0
      %v659 = vadd.f32 %v359, %v658
      %v660 = vpop.f32.mrb[0].mxu0
      %v661 = vadd.f32 %v355, %v660
      %v662 = vpop.f32.mrb[0].mxu0
      %v663 = vadd.f32 %v359, %v662
      %664 = vmatprep.mubr.bf16.mxu0 0
      %665 = vmatmul.mubr.bf16.gmra.mrb[0].mxu0 %v489
      %v666 = vpop.f32.mrb[0].mxu0
      %v667 = vadd.f32 %v355, %v666
      %v668 = vpop.f32.mrb[0].mxu0
      %v669 = vadd.f32 %v359, %v668
      %v670 = vpop.f32.mrb[0].mxu0
      %v671 = vadd.f32 %v355, %v670
      %v672 = vpop.f32.mrb[0].mxu0
      %v673 = vadd.f32 %v359, %v672
      %674 = vmatprep.mubr.bf16.mxu0 0
      %675 = vmatmul.mubr.bf16.gmra.mrb[0].mxu0 %v492
      %v676 = vpop.f32.mrb[0].mxu0
      %v677 = vadd.f32 %v355, %v676
      %v678 = vpop.f32.mrb[0].mxu0
      %v679 = vadd.f32 %v359, %v678
      %v680 = vpop.f32.mrb[0].mxu0
      %v681 = vadd.f32 %v355, %v680
      %v682 = vpop.f32.mrb[0].mxu0
      %v683 = vadd.f32 %v359, %v682
      %684 = vmatprep.mubr.bf16.mxu0 0
      %685 = vmatmul.mubr.bf16.gmra.mrb[0].mxu0 %v495
      %v686 = vpop.f32.mrb[0].mxu0
      %v687 = vadd.f32 %v355, %v686
      %v688 = vpop.f32.mrb[0].mxu0
      %v689 = vadd.f32 %v359, %v688
      %v690 = vpop.f32.mrb[0].mxu0
      %v691 = vadd.f32 %v355, %v690
      %v692 = vpop.f32.mrb[0].mxu0
      %v693 = vadd.f32 %v359, %v692
      %694 = vmatprep.mubr.bf16.mxu0 0
      %695 = vmatmul.mubr.bf16.gmra.mrb[0].mxu0 %v498
      %v696 = vpop.f32.mrb[0].mxu0
      %v697 = vadd.f32 %v355, %v696
      %v698 = vpop.f32.mrb[0].mxu0
      %v699 = vadd.f32 %v359, %v698
      %v700 = vpop.f32.mrb[0].mxu0
      %v701 = vadd.f32 %v355, %v700
      %v702 = vpop.f32.mrb[0].mxu0
      %v703 = vadd.f32 %v359, %v702
      %704 = vmatprep.mubr.bf16.mxu0 0
      %705 = vmatmul.mubr.bf16.gmra.mrb[0].mxu0 %v501
      %v706 = vpop.f32.mrb[0].mxu0
      %v707 = vadd.f32 %v355, %v706
      %v708 = vpop.f32.mrb[0].mxu0
      %v709 = vadd.f32 %v359, %v708
      %v710 = vpop.f32.mrb[0].mxu0
      %v711 = vadd.f32 %v355, %v710
      %v712 = vpop.f32.mrb[0].mxu0
      %v713 = vadd.f32 %v359, %v712
      %714 = vmatprep.mubr.bf16.mxu0 0
      %715 = vmatmul.mubr.bf16.gmra.mrb[0].mxu0 %v504
      %v716 = vpop.f32.mrb[0].mxu0
      %v717 = vadd.f32 %v355, %v716
      %v718 = vpop.f32.mrb[0].mxu0
      %v719 = vadd.f32 %v359, %v718
      %v720 = vpop.f32.mrb[0].mxu0
      %v721 = vadd.f32 %v355, %v720
      %v722 = vpop.f32.mrb[0].mxu0
      %v723 = vadd.f32 %v359, %v722
      %724 = vmatprep.mubr.bf16.mxu0 0
      %725 = vmatmul.mubr.bf16.gmra.mrb[0].mxu0 %v507
      %v726 = vpop.f32.mrb[0].mxu0
      %v727 = vadd.f32 %v355, %v726
      %v728 = vpop.f32.mrb[0].mxu0
      %v729 = vadd.f32 %v359, %v728
      %v730 = vpop.f32.mrb[0].mxu0
      %v731 = vadd.f32 %v355, %v730
      %v732 = vpop.f32.mrb[0].mxu0
      %v733 = vadd.f32 %v359, %v732
      %734 = vdwg.mxu0
      %v735 = vmax.f32 %v544, 0.0
      %v736 = vmax.f32 %v546, 0.0
      %v737 = vmax.f32 %v657, 0.0
      %v738 = vmax.f32 %v659, 0.0
      %v739 = vmax.f32 %v548, 0.0
      %v740 = vmax.f32 %v550, 0.0
      %v741 = vmax.f32 %v661, 0.0
      %v742 = vmax.f32 %v663, 0.0
      %v743 = vmax.f32 %v554, 0.0
      %v744 = vmax.f32 %v556, 0.0
      %v745 = vmax.f32 %v667, 0.0
      %v746 = vmax.f32 %v669, 0.0
      %v747 = vmax.f32 %v558, 0.0
      %v748 = vmax.f32 %v560, 0.0
      %v749 = vmax.f32 %v671, 0.0
      %v750 = vmax.f32 %v673, 0.0
      %v751 = vmax.f32 %v564, 0.0
      %v752 = vmax.f32 %v566, 0.0
      %v753 = vmax.f32 %v677, 0.0
      %v754 = vmax.f32 %v679, 0.0
      %v755 = vmax.f32 %v568, 0.0
      %v756 = vmax.f32 %v570, 0.0
      %v757 = vmax.f32 %v681, 0.0
      %v758 = vmax.f32 %v683, 0.0
      %v759 = vmax.f32 %v574, 0.0
      %v760 = vmax.f32 %v576, 0.0
      %v761 = vmax.f32 %v687, 0.0
      %v762 = vmax.f32 %v689, 0.0
      %v763 = vmax.f32 %v578, 0.0
      %v764 = vmax.f32 %v580, 0.0
      %v765 = vmax.f32 %v691, 0.0
      %v766 = vmax.f32 %v693, 0.0
      %v767 = vmax.f32 %v584, 0.0
      %v768 = vmax.f32 %v586, 0.0
      %v769 = vmax.f32 %v697, 0.0
      %v770 = vmax.f32 %v699, 0.0
      %v771 = vmax.f32 %v588, 0.0
      %v772 = vmax.f32 %v590, 0.0
      %v773 = vmax.f32 %v701, 0.0
      %v774 = vmax.f32 %v703, 0.0
      %v775 = vmax.f32 %v594, 0.0
      %v776 = vmax.f32 %v596, 0.0
      %v777 = vmax.f32 %v707, 0.0
      %v778 = vmax.f32 %v709, 0.0
      %v779 = vmax.f32 %v598, 0.0
      %v780 = vmax.f32 %v600, 0.0
      %v781 = vmax.f32 %v711, 0.0
      %v782 = vmax.f32 %v713, 0.0
      %v783 = vmax.f32 %v604, 0.0
      %v784 = vmax.f32 %v606, 0.0
      %v785 = vmax.f32 %v717, 0.0
      %v786 = vmax.f32 %v719, 0.0
      %v787 = vmax.f32 %v608, 0.0
      %v788 = vmax.f32 %v610, 0.0
      %v789 = vmax.f32 %v721, 0.0
      %v790 = vmax.f32 %v723, 0.0
      %v791 = vmax.f32 %v614, 0.0
      %v792 = vmax.f32 %v616, 0.0
      %v793 = vmax.f32 %v727, 0.0
      %v794 = vmax.f32 %v729, 0.0
      %v795 = vmax.f32 %v618, 0.0
      %v796 = vmax.f32 %v620, 0.0
      %v797 = vmax.f32 %v731, 0.0
      %v798 = vmax.f32 %v733, 0.0
      %v799 = vpack.c.bf16 %v739, %v735
      %v800 = vpack.c.bf16 %v740, %v736
      %v801 = vpack.c.bf16 %v741, %v737
      %v802 = vpack.c.bf16 %v742, %v738
      %v803 = vpack.c.bf16 %v747, %v743
      %v804 = vpack.c.bf16 %v748, %v744
      %v805 = vpack.c.bf16 %v749, %v745
      %v806 = vpack.c.bf16 %v750, %v746
      %v807 = vpack.c.bf16 %v755, %v751
      %v808 = vpack.c.bf16 %v756, %v752
      %v809 = vpack.c.bf16 %v757, %v753
      %v810 = vpack.c.bf16 %v758, %v754
      %v811 = vpack.c.bf16 %v763, %v759
      %v812 = vpack.c.bf16 %v764, %v760
      %v813 = vpack.c.bf16 %v765, %v761
      %v814 = vpack.c.bf16 %v766, %v762
      %v815 = vpack.c.bf16 %v771, %v767
      %v816 = vpack.c.bf16 %v772, %v768
      %v817 = vpack.c.bf16 %v773, %v769
      %v818 = vpack.c.bf16 %v774, %v770
      %v819 = vpack.c.bf16 %v779, %v775
      %v820 = vpack.c.bf16 %v780, %v776
      %v821 = vpack.c.bf16 %v781, %v777
      %v822 = vpack.c.bf16 %v782, %v778
      %v823 = vpack.c.bf16 %v787, %v783
      %v824 = vpack.c.bf16 %v788, %v784
      %v825 = vpack.c.bf16 %v789, %v785
      %v826 = vpack.c.bf16 %v790, %v786
      %v827 = vpack.c.bf16 %v795, %v791
      %v828 = vpack.c.bf16 %v796, %v792
      %v829 = vpack.c.bf16 %v797, %v793
      %v830 = vpack.c.bf16 %v798, %v794
      %v831 = vld [vmem:[%s2] sm:$0xff]
      %v832 = vld [vmem:[%s2 + $0x8] sm:$0xff]
      %v833 = vld [vmem:[%s2 + $0x10] sm:$0xff]
      %v834 = vld [vmem:[%s2 + $0x18] sm:$0xff]
      %v835 = vld [vmem:[%s2 + $0x20] sm:$0xff]
      %v836 = vld [vmem:[%s2 + $0x28] sm:$0xff]
      %v837 = vld [vmem:[%s2 + $0x30] sm:$0xff]
      %v838 = vld [vmem:[%s2 + $0x38] sm:$0xff]
      %v839 = vld [vmem:[%s2 + $0x40] sm:$0xff]
      %v840 = vld [vmem:[%s2 + $0x48] sm:$0xff]
      %v841 = vld [vmem:[%s2 + $0x50] sm:$0xff]
      %v842 = vld [vmem:[%s2 + $0x58] sm:$0xff]
      %v843 = vld [vmem:[%s2 + $0x60] sm:$0xff]
      %v844 = vld [vmem:[%s2 + $0x68] sm:$0xff]
      %v845 = vld [vmem:[%s2 + $0x70] sm:$0xff]
      %v846 = vld [vmem:[%s2 + $0x78] sm:$0xff]
      %v847 = vld [vmem:[%s2 + $0x80] sm:$0xff]
      %v848 = vld [vmem:[%s2 + $0x88] sm:$0xff]
      %v849 = vld [vmem:[%s2 + $0x90] sm:$0xff]
      %v850 = vld [vmem:[%s2 + $0x98] sm:$0xff]
      %v851 = vld [vmem:[%s2 + $0xa0] sm:$0xff]
      %v852 = vld [vmem:[%s2 + $0xa8] sm:$0xff]
      %v853 = vld [vmem:[%s2 + $0xb0] sm:$0xff]
      %v854 = vld [vmem:[%s2 + $0xb8] sm:$0xff]
      %v855 = vld [vmem:[%s2 + $0xc0] sm:$0xff]
      %v856 = vld [vmem:[%s2 + $0xc8] sm:$0xff]
      %v857 = vld [vmem:[%s2 + $0xd0] sm:$0xff]
      %v858 = vld [vmem:[%s2 + $0xd8] sm:$0xff]
      %v859 = vld [vmem:[%s2 + $0xe0] sm:$0xff]
      %v860 = vld [vmem:[%s2 + $0xe8] sm:$0xff]
      %v861 = vld [vmem:[%s2 + $0xf0] sm:$0xff]
      %v862 = vld [vmem:[%s2 + $0xf8] sm:$0xff]
      %v863 = vld [vmem:[%s2 + $0x100] sm:$0xff]
      %v864 = vld [vmem:[%s2 + $0x108] sm:$0xff]
      %v865 = vld [vmem:[%s2 + $0x110] sm:$0xff]
      %v866 = vld [vmem:[%s2 + $0x118] sm:$0xff]
      %v867 = vld [vmem:[%s2 + $0x120] sm:$0xff]
      %v868 = vld [vmem:[%s2 + $0x128] sm:$0xff]
      %v869 = vld [vmem:[%s2 + $0x130] sm:$0xff]
      %v870 = vld [vmem:[%s2 + $0x138] sm:$0xff]
      %v871 = vld [vmem:[%s2 + $0x140] sm:$0xff]
      %v872 = vld [vmem:[%s2 + $0x148] sm:$0xff]
      %v873 = vld [vmem:[%s2 + $0x150] sm:$0xff]
      %v874 = vld [vmem:[%s2 + $0x158] sm:$0xff]
      %v875 = vld [vmem:[%s2 + $0x160] sm:$0xff]
      %v876 = vld [vmem:[%s2 + $0x168] sm:$0xff]
      %v877 = vld [vmem:[%s2 + $0x170] sm:$0xff]
      %v878 = vld [vmem:[%s2 + $0x178] sm:$0xff]
      %v879 = vld [vmem:[%s2 + $0x180] sm:$0xff]
      %v880 = vld [vmem:[%s2 + $0x188] sm:$0xff]
      %v881 = vld [vmem:[%s2 + $0x190] sm:$0xff]
      %v882 = vld [vmem:[%s2 + $0x198] sm:$0xff]
      %v883 = vld [vmem:[%s2 + $0x1a0] sm:$0xff]
      %v884 = vld [vmem:[%s2 + $0x1a8] sm:$0xff]
      %v885 = vld [vmem:[%s2 + $0x1b0] sm:$0xff]
      %v886 = vld [vmem:[%s2 + $0x1b8] sm:$0xff]
      %v887 = vld [vmem:[%s2 + $0x1c0] sm:$0xff]
      %v888 = vld [vmem:[%s2 + $0x1c8] sm:$0xff]
      %v889 = vld [vmem:[%s2 + $0x1d0] sm:$0xff]
      %v890 = vld [vmem:[%s2 + $0x1d8] sm:$0xff]
      %v891 = vld [vmem:[%s2 + $0x1e0] sm:$0xff]
      %v892 = vld [vmem:[%s2 + $0x1e8] sm:$0xff]
      %v893 = vld [vmem:[%s5 + $0x3] sm:$0x7]
      %v895 = vlaneseq
      %v896 = vshrl.u32 %v895, 7
      %v897 = vsub.s32 0, %v896
      %v898 = vrot.slane %v893, %v897
      %v899 = vlaneseq
      %v900 = vshrl.u32 %v899, 7
      %v901 = vsub.s32 1, %v900
      %v902 = vrot.slane %v893, %v901
      %v903 = vlaneseq
      %v904 = vshrl.u32 %v903, 7
      %v905 = vsub.s32 2, %v904
      %v906 = vrot.slane %v893, %v905
      %v969 = vunpack.c.l.b16 %v831
      %v970 = vunpack.c.h.b16 %v831
      %v971 = vunpack.c.l.b16 %v832
      %v972 = vunpack.c.h.b16 %v832
      %v973 = vunpack.c.l.b16 %v833
      %v974 = vunpack.c.h.b16 %v833
      %v975 = vunpack.c.l.b16 %v834
      %v976 = vunpack.c.h.b16 %v834
      %v977 = vunpack.c.l.b16 %v835
      %v978 = vunpack.c.h.b16 %v835
      %v979 = vunpack.c.l.b16 %v836
      %v980 = vunpack.c.h.b16 %v836
      %v981 = vunpack.c.l.b16 %v837
      %v982 = vunpack.c.h.b16 %v837
      %v983 = vunpack.c.l.b16 %v838
      %v984 = vunpack.c.h.b16 %v838
      %v985 = vunpack.c.l.b16 %v839
      %v986 = vunpack.c.h.b16 %v839
      %v987 = vunpack.c.l.b16 %v840
      %v988 = vunpack.c.h.b16 %v840
      %v989 = vunpack.c.l.b16 %v841
      %v990 = vunpack.c.h.b16 %v841
      %v991 = vunpack.c.l.b16 %v842
      %v992 = vunpack.c.h.b16 %v842
      %v993 = vunpack.c.l.b16 %v843
      %v994 = vunpack.c.h.b16 %v843
      %v995 = vunpack.c.l.b16 %v844
      %v996 = vunpack.c.h.b16 %v844
      %v997 = vunpack.c.l.b16 %v845
      %v998 = vunpack.c.h.b16 %v845
      %v999 = vunpack.c.l.b16 %v846
      %v1000 = vunpack.c.h.b16 %v846
      %v1001 = vunpack.c.l.b16 %v847
      %v1002 = vunpack.c.h.b16 %v847
      %v1003 = vunpack.c.l.b16 %v848
      %v1004 = vunpack.c.h.b16 %v848
      %v1005 = vunpack.c.l.b16 %v849
      %v1006 = vunpack.c.h.b16 %v849
      %v1007 = vunpack.c.l.b16 %v850
      %v1008 = vunpack.c.h.b16 %v850
      %v1009 = vunpack.c.l.b16 %v851
      %v1010 = vunpack.c.h.b16 %v851
      %v1011 = vunpack.c.l.b16 %v852
      %v1012 = vunpack.c.h.b16 %v852
      %v1013 = vunpack.c.l.b16 %v853
      %v1014 = vunpack.c.h.b16 %v853
      %v1015 = vunpack.c.l.b16 %v854
      %v1016 = vunpack.c.h.b16 %v854
      %v1017 = vunpack.c.l.b16 %v855
      %v1018 = vunpack.c.h.b16 %v855
      %v1019 = vunpack.c.l.b16 %v856
      %v1020 = vunpack.c.h.b16 %v856
      %v1021 = vunpack.c.l.b16 %v857
      %v1022 = vunpack.c.h.b16 %v857
      %v1023 = vunpack.c.l.b16 %v858
      %v1024 = vunpack.c.h.b16 %v858
      %v1025 = vunpack.c.l.b16 %v859
      %v1026 = vunpack.c.h.b16 %v859
      %v1027 = vunpack.c.l.b16 %v860
      %v1028 = vunpack.c.h.b16 %v860
      %v1029 = vunpack.c.l.b16 %v861
      %v1030 = vunpack.c.h.b16 %v861
      %v1031 = vunpack.c.l.b16 %v862
      %v1032 = vunpack.c.h.b16 %v862
      %v1033 = vunpack.c.l.b16 %v863
      %v1034 = vunpack.c.h.b16 %v863
      %v1035 = vunpack.c.l.b16 %v864
      %v1036 = vunpack.c.h.b16 %v864
      %v1037 = vunpack.c.l.b16 %v865
      %v1038 = vunpack.c.h.b16 %v865
      %v1039 = vunpack.c.l.b16 %v866
      %v1040 = vunpack.c.h.b16 %v866
      %v1041 = vunpack.c.l.b16 %v867
      %v1042 = vunpack.c.h.b16 %v867
      %v1043 = vunpack.c.l.b16 %v868
      %v1044 = vunpack.c.h.b16 %v868
      %v1045 = vunpack.c.l.b16 %v869
      %v1046 = vunpack.c.h.b16 %v869
      %v1047 = vunpack.c.l.b16 %v870
      %v1048 = vunpack.c.h.b16 %v870
      %v1049 = vunpack.c.l.b16 %v871
      %v1050 = vunpack.c.h.b16 %v871
      %v1051 = vunpack.c.l.b16 %v872
      %v1052 = vunpack.c.h.b16 %v872
      %v1053 = vunpack.c.l.b16 %v873
      %v1054 = vunpack.c.h.b16 %v873
      %v1055 = vunpack.c.l.b16 %v874
      %v1056 = vunpack.c.h.b16 %v874
      %v1057 = vunpack.c.l.b16 %v875
      %v1058 = vunpack.c.h.b16 %v875
      %v1059 = vunpack.c.l.b16 %v876
      %v1060 = vunpack.c.h.b16 %v876
      %v1061 = vunpack.c.l.b16 %v877
      %v1062 = vunpack.c.h.b16 %v877
      %v1063 = vunpack.c.l.b16 %v878
      %v1064 = vunpack.c.h.b16 %v878
      %v1065 = vunpack.c.l.b16 %v879
      %v1066 = vunpack.c.h.b16 %v879
      %v1067 = vunpack.c.l.b16 %v880
      %v1068 = vunpack.c.h.b16 %v880
      %v1069 = vunpack.c.l.b16 %v881
      %v1070 = vunpack.c.h.b16 %v881
      %v1071 = vunpack.c.l.b16 %v882
      %v1072 = vunpack.c.h.b16 %v882
      %v1073 = vunpack.c.l.b16 %v883
      %v1074 = vunpack.c.h.b16 %v883
      %v1075 = vunpack.c.l.b16 %v884
      %v1076 = vunpack.c.h.b16 %v884
      %v1077 = vunpack.c.l.b16 %v885
      %v1078 = vunpack.c.h.b16 %v885
      %v1079 = vunpack.c.l.b16 %v886
      %v1080 = vunpack.c.h.b16 %v886
      %v1081 = vunpack.c.l.b16 %v887
      %v1082 = vunpack.c.h.b16 %v887
      %v1083 = vunpack.c.l.b16 %v888
      %v1084 = vunpack.c.h.b16 %v888
      %v1085 = vunpack.c.l.b16 %v889
      %v1086 = vunpack.c.h.b16 %v889
      %v1087 = vunpack.c.l.b16 %v890
      %v1088 = vunpack.c.h.b16 %v890
      %v1089 = vunpack.c.l.b16 %v891
      %v1090 = vunpack.c.h.b16 %v891
      %v1091 = vunpack.c.l.b16 %v892
      %v1092 = vunpack.c.h.b16 %v892
      %v1093 = vpack.c.b16 %v971, %v969
      %v1094 = vpack.c.b16 %v972, %v970
      %v1095 = vpack.c.b16 %v975, %v973
      %v1096 = vpack.c.b16 %v976, %v974
      %v1097 = vpack.c.b16 %v979, %v977
      %v1098 = vpack.c.b16 %v980, %v978
      %v1099 = vpack.c.b16 %v983, %v981
      %v1100 = vpack.c.b16 %v984, %v982
      %v1101 = vpack.c.b16 %v987, %v985
      %v1102 = vpack.c.b16 %v988, %v986
      %v1103 = vpack.c.b16 %v991, %v989
      %v1104 = vpack.c.b16 %v992, %v990
      %v1105 = vpack.c.b16 %v995, %v993
      %v1106 = vpack.c.b16 %v996, %v994
      %v1107 = vpack.c.b16 %v999, %v997
      %v1108 = vpack.c.b16 %v1000, %v998
      %v1109 = vpack.c.b16 %v1003, %v1001
      %v1110 = vpack.c.b16 %v1004, %v1002
      %v1111 = vpack.c.b16 %v1007, %v1005
      %v1112 = vpack.c.b16 %v1008, %v1006
      %v1113 = vpack.c.b16 %v1011, %v1009
      %v1114 = vpack.c.b16 %v1012, %v1010
      %v1115 = vpack.c.b16 %v1015, %v1013
      %v1116 = vpack.c.b16 %v1016, %v1014
      %v1117 = vpack.c.b16 %v1019, %v1017
      %v1118 = vpack.c.b16 %v1020, %v1018
      %v1119 = vpack.c.b16 %v1023, %v1021
      %v1120 = vpack.c.b16 %v1024, %v1022
      %v1121 = vpack.c.b16 %v1027, %v1025
      %v1122 = vpack.c.b16 %v1028, %v1026
      %v1123 = vpack.c.b16 %v1031, %v1029
      %v1124 = vpack.c.b16 %v1032, %v1030
      %v1125 = vpack.c.b16 %v1035, %v1033
      %v1126 = vpack.c.b16 %v1036, %v1034
      %v1127 = vpack.c.b16 %v1039, %v1037
      %v1128 = vpack.c.b16 %v1040, %v1038
      %v1129 = vpack.c.b16 %v1043, %v1041
      %v1130 = vpack.c.b16 %v1044, %v1042
      %v1131 = vpack.c.b16 %v1047, %v1045
      %v1132 = vpack.c.b16 %v1048, %v1046
      %v1133 = vpack.c.b16 %v1051, %v1049
      %v1134 = vpack.c.b16 %v1052, %v1050
      %v1135 = vpack.c.b16 %v1055, %v1053
      %v1136 = vpack.c.b16 %v1056, %v1054
      %v1137 = vpack.c.b16 %v1059, %v1057
      %v1138 = vpack.c.b16 %v1060, %v1058
      %v1139 = vpack.c.b16 %v1063, %v1061
      %v1140 = vpack.c.b16 %v1064, %v1062
      %v1141 = vpack.c.b16 %v1067, %v1065
      %v1142 = vpack.c.b16 %v1068, %v1066
      %v1143 = vpack.c.b16 %v1071, %v1069
      %v1144 = vpack.c.b16 %v1072, %v1070
      %v1145 = vpack.c.b16 %v1075, %v1073
      %v1146 = vpack.c.b16 %v1076, %v1074
      %v1147 = vpack.c.b16 %v1079, %v1077
      %v1148 = vpack.c.b16 %v1080, %v1078
      %v1149 = vpack.c.b16 %v1083, %v1081
      %v1150 = vpack.c.b16 %v1084, %v1082
      %v1151 = vpack.c.b16 %v1087, %v1085
      %v1152 = vpack.c.b16 %v1088, %v1086
      %v1153 = vpack.c.b16 %v1091, %v1089
      %v1154 = vpack.c.b16 %v1092, %v1090
      %1217 = vrot.lane.b32.xlu0 %v898, 16
      %v1218 = vpop.permute.xlu0 %1217
      %1219 = vrot.lane.b32.xlu0 %v902, 16
      %v1220 = vpop.permute.xlu0 %1219
      %1221 = vrot.lane.b32.xlu0 %v906, 16
      %v1222 = vpop.permute.xlu0 %1221
      %vm1223 = vcmask 130048
      %v1224 = vsel %vm1223, %v1218, %v1220
      %v1225 = vsel %vm1223, %v1220, %v1222
      %vm1228 = vcmask 916480
      %v1230 = vsel %vm1228, %v802, 0
      %v1233 = vsel %vm1228, %v806, 0
      %v1236 = vsel %vm1228, %v810, 0
      %v1239 = vsel %vm1228, %v814, 0
      %v1242 = vsel %vm1228, %v818, 0
      %v1245 = vsel %vm1228, %v822, 0
      %v1248 = vsel %vm1228, %v826, 0
      %v1251 = vsel %vm1228, %v830, 0
      %1253 = vmatprep.subr.bf16.mxu0 %v1094
      %1254 = vmatpush1.bf16.msra.mxu0 %v1093
      %1255 = vmatprep.subr.bf16.mxu0 %v1096
      %1256 = vmatpush1.bf16.msra.mxu0 %v1095
      %1257 = vmatprep.subr.bf16.mxu0 %v1098
      %1258 = vmatpush1.bf16.msra.mxu0 %v1097
      %1259 = vmatprep.subr.bf16.mxu0 %v1100
      %1260 = vmatpush1.bf16.msra.mxu0 %v1099
      %1261 = vmatprep.subr.bf16.mxu0 %v1102
      %1262 = vmatpush1.bf16.msra.mxu0 %v1101
      %1263 = vmatprep.subr.bf16.mxu0 %v1104
      %1264 = vmatpush1.bf16.msra.mxu0 %v1103
      %1265 = vmatprep.subr.bf16.mxu0 %v1106
      %1266 = vmatpush1.bf16.msra.mxu0 %v1105
      %1267 = vmatprep.subr.bf16.mxu0 %v1108
      %1268 = vmatpush1.bf16.msra.mxu0 %v1107
      %1269 = vmatprep.subr.bf16.mxu0 %v1110
      %1270 = vmatpush1.bf16.msra.mxu0 %v1109
      %1271 = vmatprep.subr.bf16.mxu0 %v1112
      %1272 = vmatpush1.bf16.msra.mxu0 %v1111
      %1273 = vmatprep.subr.bf16.mxu0 %v1114
      %1274 = vmatpush1.bf16.msra.mxu0 %v1113
      %1275 = vmatprep.subr.bf16.mxu0 %v1116
      %1276 = vmatpush1.bf16.msra.mxu0 %v1115
      %1277 = vmatprep.subr.bf16.mxu0 %v1118
      %1278 = vmatpush1.bf16.msra.mxu0 %v1117
      %1279 = vmatprep.subr.bf16.mxu0 %v1120
      %1280 = vmatpush1.bf16.msra.mxu0 %v1119
      %1281 = vmatprep.subr.bf16.mxu0 %v1122
      %1282 = vmatpush1.bf16.msra.mxu0 %v1121
      %1283 = vmatprep.subr.bf16.mxu0 %v1124
      %1284 = vmatpush1.bf16.msra.mxu0 %v1123
      %1285 = vmatprep.mubr.bf16.mxu0 %v800
      %1286 = vmatmul.mubr.bf16.gmra.mrb[0].mxu0 %v799
      %v1287 = vpop.f32.mrb[0].mxu0
      %v1288 = vadd.f32 %v1224, %v1287
      %v1289 = vpop.f32.mrb[0].mxu0
      %v1290 = vadd.f32 %v1225, %v1289
      %v1291 = vpop.f32.mrb[0].mxu0
      %v1292 = vadd.f32 %v1224, %v1291
      %v1293 = vpop.f32.mrb[0].mxu0
      %v1294 = vadd.f32 %v1225, %v1293
      %1295 = vmatprep.mubr.bf16.mxu0 %v804
      %1296 = vmatmul.mubr.bf16.gmra.mrb[0].mxu0 %v803
      %v1297 = vpop.f32.mrb[0].mxu0
      %v1298 = vadd.f32 %v1224, %v1297
      %v1299 = vpop.f32.mrb[0].mxu0
      %v1300 = vadd.f32 %v1225, %v1299
      %v1301 = vpop.f32.mrb[0].mxu0
      %v1302 = vadd.f32 %v1224, %v1301
      %v1303 = vpop.f32.mrb[0].mxu0
      %v1304 = vadd.f32 %v1225, %v1303
      %1305 = vmatprep.mubr.bf16.mxu0 %v808
      %1306 = vmatmul.mubr.bf16.gmra.mrb[0].mxu0 %v807
      %v1307 = vpop.f32.mrb[0].mxu0
      %v1308 = vadd.f32 %v1224, %v1307
      %v1309 = vpop.f32.mrb[0].mxu0
      %v1310 = vadd.f32 %v1225, %v1309
      %v1311 = vpop.f32.mrb[0].mxu0
      %v1312 = vadd.f32 %v1224, %v1311
      %v1313 = vpop.f32.mrb[0].mxu0
      %v1314 = vadd.f32 %v1225, %v1313
      %1315 = vmatprep.mubr.bf16.mxu0 %v812
      %1316 = vmatmul.mubr.bf16.gmra.mrb[0].mxu0 %v811
      %v1317 = vpop.f32.mrb[0].mxu0
      %v1318 = vadd.f32 %v1224, %v1317
      %v1319 = vpop.f32.mrb[0].mxu0
      %v1320 = vadd.f32 %v1225, %v1319
      %v1321 = vpop.f32.mrb[0].mxu0
      %v1322 = vadd.f32 %v1224, %v1321
      %v1323 = vpop.f32.mrb[0].mxu0
      %v1324 = vadd.f32 %v1225, %v1323
      %1325 = vmatprep.mubr.bf16.mxu0 %v816
      %1326 = vmatmul.mubr.bf16.gmra.mrb[0].mxu0 %v815
      %v1327 = vpop.f32.mrb[0].mxu0
      %v1328 = vadd.f32 %v1224, %v1327
      %v1329 = vpop.f32.mrb[0].mxu0
      %v1330 = vadd.f32 %v1225, %v1329
      %v1331 = vpop.f32.mrb[0].mxu0
      %v1332 = vadd.f32 %v1224, %v1331
      %v1333 = vpop.f32.mrb[0].mxu0
      %v1334 = vadd.f32 %v1225, %v1333
      %1335 = vmatprep.mubr.bf16.mxu0 %v820
      %1336 = vmatmul.mubr.bf16.gmra.mrb[0].mxu0 %v819
      %v1337 = vpop.f32.mrb[0].mxu0
      %v1338 = vadd.f32 %v1224, %v1337
      %v1339 = vpop.f32.mrb[0].mxu0
      %v1340 = vadd.f32 %v1225, %v1339
      %v1341 = vpop.f32.mrb[0].mxu0
      %v1342 = vadd.f32 %v1224, %v1341
      %v1343 = vpop.f32.mrb[0].mxu0
      %v1344 = vadd.f32 %v1225, %v1343
      %1345 = vmatprep.mubr.bf16.mxu0 %v824
      %1346 = vmatmul.mubr.bf16.gmra.mrb[0].mxu0 %v823
      %v1347 = vpop.f32.mrb[0].mxu0
      %v1348 = vadd.f32 %v1224, %v1347
      %v1349 = vpop.f32.mrb[0].mxu0
      %v1350 = vadd.f32 %v1225, %v1349
      %v1351 = vpop.f32.mrb[0].mxu0
      %v1352 = vadd.f32 %v1224, %v1351
      %v1353 = vpop.f32.mrb[0].mxu0
      %v1354 = vadd.f32 %v1225, %v1353
      %1355 = vmatprep.mubr.bf16.mxu0 %v828
      %1356 = vmatmul.mubr.bf16.gmra.mrb[0].mxu0 %v827
      %v1357 = vpop.f32.mrb[0].mxu0
      %v1358 = vadd.f32 %v1224, %v1357
      %v1359 = vpop.f32.mrb[0].mxu0
      %v1360 = vadd.f32 %v1225, %v1359
      %v1361 = vpop.f32.mrb[0].mxu0
      %v1362 = vadd.f32 %v1224, %v1361
      %v1363 = vpop.f32.mrb[0].mxu0
      %v1364 = vadd.f32 %v1225, %v1363
      %1365 = vdwg.mxu0
      %1366 = vmatprep.subr.bf16.mxu0 %v1126
      %1367 = vmatpush1.bf16.msra.mxu0 %v1125
      %1368 = vmatprep.subr.bf16.mxu0 %v1128
      %1369 = vmatpush1.bf16.msra.mxu0 %v1127
      %1370 = vmatprep.subr.bf16.mxu0 %v1130
      %1371 = vmatpush1.bf16.msra.mxu0 %v1129
      %1372 = vmatprep.subr.bf16.mxu0 %v1132
      %1373 = vmatpush1.bf16.msra.mxu0 %v1131
      %1374 = vmatprep.subr.bf16.mxu0 %v1134
      %1375 = vmatpush1.bf16.msra.mxu0 %v1133
      %1376 = vmatprep.subr.bf16.mxu0 %v1136
      %1377 = vmatpush1.bf16.msra.mxu0 %v1135
      %1378 = vmatprep.subr.bf16.mxu0 %v1138
      %1379 = vmatpush1.bf16.msra.mxu0 %v1137
      %1380 = vmatprep.subr.bf16.mxu0 %v1140
      %1381 = vmatpush1.bf16.msra.mxu0 %v1139
      %1382 = vmatprep.subr.bf16.mxu0 %v1142
      %1383 = vmatpush1.bf16.msra.mxu0 %v1141
      %1384 = vmatprep.subr.bf16.mxu0 %v1144
      %1385 = vmatpush1.bf16.msra.mxu0 %v1143
      %1386 = vmatprep.subr.bf16.mxu0 %v1146
      %1387 = vmatpush1.bf16.msra.mxu0 %v1145
      %1388 = vmatprep.subr.bf16.mxu0 %v1148
      %1389 = vmatpush1.bf16.msra.mxu0 %v1147
      %1390 = vmatprep.subr.bf16.mxu0 %v1150
      %1391 = vmatpush1.bf16.msra.mxu0 %v1149
      %1392 = vmatprep.subr.bf16.mxu0 %v1152
      %1393 = vmatpush1.bf16.msra.mxu0 %v1151
      %1394 = vmatprep.subr.bf16.mxu0 %v1154
      %1395 = vmatpush1.bf16.msra.mxu0 %v1153
      %1396 = vmatprep.subr.bf16.mxu0 0
      %1397 = vmatpush1.bf16.msra.mxu0 0
      %1398 = vmatprep.mubr.bf16.mxu0 %v1230
      %1399 = vmatmul.mubr.bf16.gmra.mrb[0].mxu0 %v801
      %v1400 = vpop.f32.mrb[0].mxu0
      %v1401 = vadd.f32 %v1288, %v1400
      %v1402 = vpop.f32.mrb[0].mxu0
      %v1403 = vadd.f32 %v1290, %v1402
      %v1404 = vpop.f32.mrb[0].mxu0
      %v1405 = vadd.f32 %v1292, %v1404
      %v1406 = vpop.f32.mrb[0].mxu0
      %v1407 = vadd.f32 %v1294, %v1406
      %1408 = vmatprep.mubr.bf16.mxu0 %v1233
      %1409 = vmatmul.mubr.bf16.gmra.mrb[0].mxu0 %v805
      %v1410 = vpop.f32.mrb[0].mxu0
      %v1411 = vadd.f32 %v1298, %v1410
      %v1412 = vpop.f32.mrb[0].mxu0
      %v1413 = vadd.f32 %v1300, %v1412
      %v1414 = vpop.f32.mrb[0].mxu0
      %v1415 = vadd.f32 %v1302, %v1414
      %v1416 = vpop.f32.mrb[0].mxu0
      %v1417 = vadd.f32 %v1304, %v1416
      %1418 = vmatprep.mubr.bf16.mxu0 %v1236
      %1419 = vmatmul.mubr.bf16.gmra.mrb[0].mxu0 %v809
      %v1420 = vpop.f32.mrb[0].mxu0
      %v1421 = vadd.f32 %v1308, %v1420
      %v1422 = vpop.f32.mrb[0].mxu0
      %v1423 = vadd.f32 %v1310, %v1422
      %v1424 = vpop.f32.mrb[0].mxu0
      %v1425 = vadd.f32 %v1312, %v1424
      %v1426 = vpop.f32.mrb[0].mxu0
      %v1427 = vadd.f32 %v1314, %v1426
      %1428 = vmatprep.mubr.bf16.mxu0 %v1239
      %1429 = vmatmul.mubr.bf16.gmra.mrb[0].mxu0 %v813
      %v1430 = vpop.f32.mrb[0].mxu0
      %v1431 = vadd.f32 %v1318, %v1430
      %v1432 = vpop.f32.mrb[0].mxu0
      %v1433 = vadd.f32 %v1320, %v1432
      %v1434 = vpop.f32.mrb[0].mxu0
      %v1435 = vadd.f32 %v1322, %v1434
      %v1436 = vpop.f32.mrb[0].mxu0
      %v1437 = vadd.f32 %v1324, %v1436
      %1438 = vmatprep.mubr.bf16.mxu0 %v1242
      %1439 = vmatmul.mubr.bf16.gmra.mrb[0].mxu0 %v817
      %v1440 = vpop.f32.mrb[0].mxu0
      %v1441 = vadd.f32 %v1328, %v1440
      %v1442 = vpop.f32.mrb[0].mxu0
      %v1443 = vadd.f32 %v1330, %v1442
      %v1444 = vpop.f32.mrb[0].mxu0
      %v1445 = vadd.f32 %v1332, %v1444
      %v1446 = vpop.f32.mrb[0].mxu0
      %v1447 = vadd.f32 %v1334, %v1446
      %1448 = vmatprep.mubr.bf16.mxu0 %v1245
      %1449 = vmatmul.mubr.bf16.gmra.mrb[0].mxu0 %v821
      %v1450 = vpop.f32.mrb[0].mxu0
      %v1451 = vadd.f32 %v1338, %v1450
      %v1452 = vpop.f32.mrb[0].mxu0
      %v1453 = vadd.f32 %v1340, %v1452
      %v1454 = vpop.f32.mrb[0].mxu0
      %v1455 = vadd.f32 %v1342, %v1454
      %v1456 = vpop.f32.mrb[0].mxu0
      %v1457 = vadd.f32 %v1344, %v1456
      %1458 = vmatprep.mubr.bf16.mxu0 %v1248
      %1459 = vmatmul.mubr.bf16.gmra.mrb[0].mxu0 %v825
      %v1460 = vpop.f32.mrb[0].mxu0
      %v1461 = vadd.f32 %v1348, %v1460
      %v1462 = vpop.f32.mrb[0].mxu0
      %v1463 = vadd.f32 %v1350, %v1462
      %v1464 = vpop.f32.mrb[0].mxu0
      %v1465 = vadd.f32 %v1352, %v1464
      %v1466 = vpop.f32.mrb[0].mxu0
      %v1467 = vadd.f32 %v1354, %v1466
      %1468 = vmatprep.mubr.bf16.mxu0 %v1251
      %1469 = vmatmul.mubr.bf16.gmra.mrb[0].mxu0 %v829
      %v1470 = vpop.f32.mrb[0].mxu0
      %v1471 = vadd.f32 %v1358, %v1470
      %v1472 = vpop.f32.mrb[0].mxu0
      %v1473 = vadd.f32 %v1360, %v1472
      %v1474 = vpop.f32.mrb[0].mxu0
      %v1475 = vadd.f32 %v1362, %v1474
      %v1476 = vpop.f32.mrb[0].mxu0
      %v1477 = vadd.f32 %v1364, %v1476
      %1478 = vdwg.mxu0
      %v1479 = vmax.f32 %v1401, 0.0
      %v1480 = vmax.f32 %v1403, 0.0
      %v1481 = vmax.f32 %v1405, 0.0
      %v1482 = vmax.f32 %v1407, 0.0
      %v1483 = vmax.f32 %v1411, 0.0
      %v1484 = vmax.f32 %v1413, 0.0
      %v1485 = vmax.f32 %v1415, 0.0
      %v1486 = vmax.f32 %v1417, 0.0
      %v1487 = vmax.f32 %v1421, 0.0
      %v1488 = vmax.f32 %v1423, 0.0
      %v1489 = vmax.f32 %v1425, 0.0
      %v1490 = vmax.f32 %v1427, 0.0
      %v1491 = vmax.f32 %v1431, 0.0
      %v1492 = vmax.f32 %v1433, 0.0
      %v1493 = vmax.f32 %v1435, 0.0
      %v1494 = vmax.f32 %v1437, 0.0
      %v1495 = vmax.f32 %v1441, 0.0
      %v1496 = vmax.f32 %v1443, 0.0
      %v1497 = vmax.f32 %v1445, 0.0
      %v1498 = vmax.f32 %v1447, 0.0
      %v1499 = vmax.f32 %v1451, 0.0
      %v1500 = vmax.f32 %v1453, 0.0
      %v1501 = vmax.f32 %v1455, 0.0
      %v1502 = vmax.f32 %v1457, 0.0
      %v1503 = vmax.f32 %v1461, 0.0
      %v1504 = vmax.f32 %v1463, 0.0
      %v1505 = vmax.f32 %v1465, 0.0
      %v1506 = vmax.f32 %v1467, 0.0
      %v1507 = vmax.f32 %v1471, 0.0
      %v1508 = vmax.f32 %v1473, 0.0
      %v1509 = vmax.f32 %v1475, 0.0
      %v1510 = vmax.f32 %v1477, 0.0
      %v1511 = vpack.c.bf16 %v1481, %v1479
      %v1512 = vpack.c.bf16 %v1482, %v1480
      %v1513 = vpack.c.bf16 %v1485, %v1483
      %v1514 = vpack.c.bf16 %v1486, %v1484
      %v1515 = vpack.c.bf16 %v1489, %v1487
      %v1516 = vpack.c.bf16 %v1490, %v1488
      %v1517 = vpack.c.bf16 %v1493, %v1491
      %v1518 = vpack.c.bf16 %v1494, %v1492
      %v1519 = vpack.c.bf16 %v1497, %v1495
      %v1520 = vpack.c.bf16 %v1498, %v1496
      %v1521 = vpack.c.bf16 %v1501, %v1499
      %v1522 = vpack.c.bf16 %v1502, %v1500
      %v1523 = vpack.c.bf16 %v1505, %v1503
      %v1524 = vpack.c.bf16 %v1506, %v1504
      %v1525 = vpack.c.bf16 %v1509, %v1507
      %v1526 = vpack.c.bf16 %v1510, %v1508
      %v1527 = vld [vmem:[%s3] sm:$0xf]
      %v1528 = vld [vmem:[%s3 + $0x4] sm:$0xf]
      %v1529 = vld [vmem:[%s3 + $0x8] sm:$0xf]
      %v1530 = vld [vmem:[%s3 + $0xc] sm:$0xf]
      %v1531 = vld [vmem:[%s3 + $0x10] sm:$0xf]
      %v1532 = vld [vmem:[%s3 + $0x14] sm:$0xf]
      %v1533 = vld [vmem:[%s3 + $0x18] sm:$0xf]
      %v1534 = vld [vmem:[%s3 + $0x1c] sm:$0xf]
      %v1535 = vld [vmem:[%s3 + $0x20] sm:$0xf]
      %v1536 = vld [vmem:[%s3 + $0x24] sm:$0xf]
      %v1537 = vld [vmem:[%s3 + $0x28] sm:$0xf]
      %v1538 = vld [vmem:[%s3 + $0x2c] sm:$0xf]
      %v1539 = vld [vmem:[%s3 + $0x30] sm:$0xf]
      %v1540 = vld [vmem:[%s3 + $0x34] sm:$0xf]
      %v1541 = vld [vmem:[%s3 + $0x38] sm:$0xf]
      %v1542 = vld [vmem:[%s3 + $0x3c] sm:$0xf]
      %v1543 = vld [vmem:[%s3 + $0x40] sm:$0xf]
      %v1544 = vld [vmem:[%s3 + $0x44] sm:$0xf]
      %v1545 = vld [vmem:[%s3 + $0x48] sm:$0xf]
      %v1546 = vld [vmem:[%s3 + $0x4c] sm:$0xf]
      %v1547 = vld [vmem:[%s3 + $0x50] sm:$0xf]
      %v1548 = vld [vmem:[%s3 + $0x54] sm:$0xf]
      %v1549 = vld [vmem:[%s3 + $0x58] sm:$0xf]
      %v1550 = vld [vmem:[%s3 + $0x5c] sm:$0xf]
      %v1551 = vld [vmem:[%s3 + $0x60] sm:$0xf]
      %v1552 = vld [vmem:[%s3 + $0x64] sm:$0xf]
      %v1553 = vld [vmem:[%s3 + $0x68] sm:$0xf]
      %v1554 = vld [vmem:[%s3 + $0x6c] sm:$0xf]
      %v1555 = vld [vmem:[%s3 + $0x70] sm:$0xf]
      %v1556 = vld [vmem:[%s3 + $0x74] sm:$0xf]
      %v1557 = vld [vmem:[%s5 + $0x5] sm:$0x3]
      %v1559 = vlaneseq
      %v1560 = vshrl.u32 %v1559, 7
      %v1561 = vsub.s32 0, %v1560
      %v1562 = vrot.slane %v1557, %v1561
      %v1563 = vlaneseq
      %v1564 = vshrl.u32 %v1563, 7
      %v1565 = vsub.s32 1, %v1564
      %v1566 = vrot.slane %v1557, %v1565
      %v1597 = vunpack.c.l.b16 %v1527
      %v1598 = vunpack.c.l.b16 %v1528
      %v1599 = vunpack.c.l.b16 %v1529
      %v1600 = vunpack.c.l.b16 %v1530
      %v1601 = vunpack.c.l.b16 %v1531
      %v1602 = vunpack.c.l.b16 %v1532
      %v1603 = vunpack.c.l.b16 %v1533
      %v1604 = vunpack.c.l.b16 %v1534
      %v1605 = vunpack.c.l.b16 %v1535
      %v1606 = vunpack.c.l.b16 %v1536
      %v1607 = vunpack.c.l.b16 %v1537
      %v1608 = vunpack.c.l.b16 %v1538
      %v1609 = vunpack.c.l.b16 %v1539
      %v1610 = vunpack.c.l.b16 %v1540
      %v1611 = vunpack.c.l.b16 %v1541
      %v1612 = vunpack.c.l.b16 %v1542
      %v1613 = vunpack.c.l.b16 %v1543
      %v1614 = vunpack.c.l.b16 %v1544
      %v1615 = vunpack.c.l.b16 %v1545
      %v1616 = vunpack.c.l.b16 %v1546
      %v1617 = vunpack.c.l.b16 %v1547
      %v1618 = vunpack.c.l.b16 %v1548
      %v1619 = vunpack.c.l.b16 %v1549
      %v1620 = vunpack.c.l.b16 %v1550
      %v1621 = vunpack.c.l.b16 %v1551
      %v1622 = vunpack.c.l.b16 %v1552
      %v1623 = vunpack.c.l.b16 %v1553
      %v1624 = vunpack.c.l.b16 %v1554
      %v1625 = vunpack.c.l.b16 %v1555
      %v1626 = vunpack.c.l.b16 %v1556
      %v1627 = vpack.c.b16 %v1598, %v1597
      %v1628 = vpack.c.b16 %v1600, %v1599
      %v1629 = vpack.c.b16 %v1602, %v1601
      %v1630 = vpack.c.b16 %v1604, %v1603
      %v1631 = vpack.c.b16 %v1606, %v1605
      %v1632 = vpack.c.b16 %v1608, %v1607
      %v1633 = vpack.c.b16 %v1610, %v1609
      %v1634 = vpack.c.b16 %v1612, %v1611
      %v1635 = vpack.c.b16 %v1614, %v1613
      %v1636 = vpack.c.b16 %v1616, %v1615
      %v1637 = vpack.c.b16 %v1618, %v1617
      %v1638 = vpack.c.b16 %v1620, %v1619
      %v1639 = vpack.c.b16 %v1622, %v1621
      %v1640 = vpack.c.b16 %v1624, %v1623
      %v1641 = vpack.c.b16 %v1626, %v1625
      %1657 = vrot.lane.b32.xlu0 %v1562, 32
      %v1658 = vpop.permute.xlu0 %1657
      %1659 = vrot.lane.b32.xlu0 %v1566, 32
      %v1660 = vpop.permute.xlu0 %1659
      %vm1661 = vcmask 261120
      %v1662 = vsel %vm1661, %v1658, %v1660
      %v1665 = vsel %vm1228, %v1512, 0
      %v1668 = vsel %vm1228, %v1514, 0
      %v1671 = vsel %vm1228, %v1516, 0
      %v1674 = vsel %vm1228, %v1518, 0
      %v1677 = vsel %vm1228, %v1520, 0
      %v1680 = vsel %vm1228, %v1522, 0
      %v1683 = vsel %vm1228, %v1524, 0
      %v1686 = vsel %vm1228, %v1526, 0
      %1688 = vmatprep.subr.bf16.mxu0 0
      %1689 = vmatpush1.bf16.msra.mxu0 %v1627
      %1690 = vmatprep.subr.bf16.mxu0 0
      %1691 = vmatpush1.bf16.msra.mxu0 %v1628
      %1692 = vmatprep.subr.bf16.mxu0 0
      %1693 = vmatpush1.bf16.msra.mxu0 %v1629
      %1694 = vmatprep.subr.bf16.mxu0 0
      %1695 = vmatpush1.bf16.msra.mxu0 %v1630
      %1696 = vmatprep.subr.bf16.mxu0 0
      %1697 = vmatpush1.bf16.msra.mxu0 %v1631
      %1698 = vmatprep.subr.bf16.mxu0 0
      %1699 = vmatpush1.bf16.msra.mxu0 %v1632
      %1700 = vmatprep.subr.bf16.mxu0 0
      %1701 = vmatpush1.bf16.msra.mxu0 %v1633
      %1702 = vmatprep.subr.bf16.mxu0 0
      %1703 = vmatpush1.bf16.msra.mxu0 %v1634
      %1704 = vmatprep.subr.bf16.mxu0 0
      %1705 = vmatpush1.bf16.msra.mxu0 %v1635
      %1706 = vmatprep.subr.bf16.mxu0 0
      %1707 = vmatpush1.bf16.msra.mxu0 %v1636
      %1708 = vmatprep.subr.bf16.mxu0 0
      %1709 = vmatpush1.bf16.msra.mxu0 %v1637
      %1710 = vmatprep.subr.bf16.mxu0 0
      %1711 = vmatpush1.bf16.msra.mxu0 %v1638
      %1712 = vmatprep.subr.bf16.mxu0 0
      %1713 = vmatpush1.bf16.msra.mxu0 %v1639
      %1714 = vmatprep.subr.bf16.mxu0 0
      %1715 = vmatpush1.bf16.msra.mxu0 %v1640
      %1716 = vmatprep.subr.bf16.mxu0 0
      %1717 = vmatpush1.bf16.msra.mxu0 %v1641
      %1718 = vmatprep.subr.bf16.mxu0 0
      %1719 = vmatpush1.bf16.msra.mxu0 0
      %1720 = vmatprep.mubr.bf16.mxu0 %v1665
      %1721 = vmatmul.mubr.bf16.gmra.mrb[0].mxu0 %v1511
      %v1722 = vpop.f32.mrb[0].mxu0
      %v1723 = vadd.f32 %v1662, %v1722
      %v1724 = vpop.f32.mrb[0].mxu0
      %v1725 = vpop.f32.mrb[0].mxu0
      %v1726 = vadd.f32 %v1662, %v1725
      %v1727 = vpop.f32.mrb[0].mxu0
      %1728 = vmatprep.mubr.bf16.mxu0 %v1668
      %1729 = vmatmul.mubr.bf16.gmra.mrb[0].mxu0 %v1513
      %v1730 = vpop.f32.mrb[0].mxu0
      %v1731 = vadd.f32 %v1662, %v1730
      %v1732 = vpop.f32.mrb[0].mxu0
      %v1733 = vpop.f32.mrb[0].mxu0
      %v1734 = vadd.f32 %v1662, %v1733
      %v1735 = vpop.f32.mrb[0].mxu0
      %1736 = vmatprep.mubr.bf16.mxu0 %v1671
      %1737 = vmatmul.mubr.bf16.gmra.mrb[0].mxu0 %v1515
      %v1738 = vpop.f32.mrb[0].mxu0
      %v1739 = vadd.f32 %v1662, %v1738
      %v1740 = vpop.f32.mrb[0].mxu0
      %v1741 = vpop.f32.mrb[0].mxu0
      %v1742 = vadd.f32 %v1662, %v1741
      %v1743 = vpop.f32.mrb[0].mxu0
      %1744 = vmatprep.mubr.bf16.mxu0 %v1674
      %1745 = vmatmul.mubr.bf16.gmra.mrb[0].mxu0 %v1517
      %v1746 = vpop.f32.mrb[0].mxu0
      %v1747 = vadd.f32 %v1662, %v1746
      %v1748 = vpop.f32.mrb[0].mxu0
      %v1749 = vpop.f32.mrb[0].mxu0
      %v1750 = vadd.f32 %v1662, %v1749
      %v1751 = vpop.f32.mrb[0].mxu0
      %1752 = vmatprep.mubr.bf16.mxu0 %v1677
      %1753 = vmatmul.mubr.bf16.gmra.mrb[0].mxu0 %v1519
      %v1754 = vpop.f32.mrb[0].mxu0
      %v1755 = vadd.f32 %v1662, %v1754
      %v1756 = vpop.f32.mrb[0].mxu0
      %v1757 = vpop.f32.mrb[0].mxu0
      %v1758 = vadd.f32 %v1662, %v1757
      %v1759 = vpop.f32.mrb[0].mxu0
      %1760 = vmatprep.mubr.bf16.mxu0 %v1680
      %1761 = vmatmul.mubr.bf16.gmra.mrb[0].mxu0 %v1521
      %v1762 = vpop.f32.mrb[0].mxu0
      %v1763 = vadd.f32 %v1662, %v1762
      %v1764 = vpop.f32.mrb[0].mxu0
      %v1765 = vpop.f32.mrb[0].mxu0
      %v1766 = vadd.f32 %v1662, %v1765
      %v1767 = vpop.f32.mrb[0].mxu0
      %1768 = vmatprep.mubr.bf16.mxu0 %v1683
      %1769 = vmatmul.mubr.bf16.gmra.mrb[0].mxu0 %v1523
      %v1770 = vpop.f32.mrb[0].mxu0
      %v1771 = vadd.f32 %v1662, %v1770
      %v1772 = vpop.f32.mrb[0].mxu0
      %v1773 = vpop.f32.mrb[0].mxu0
      %v1774 = vadd.f32 %v1662, %v1773
      %v1775 = vpop.f32.mrb[0].mxu0
      %1776 = vmatprep.mubr.bf16.mxu0 %v1686
      %1777 = vmatmul.mubr.bf16.gmra.mrb[0].mxu0 %v1525
      %v1778 = vpop.f32.mrb[0].mxu0
      %v1779 = vadd.f32 %v1662, %v1778
      %v1780 = vpop.f32.mrb[0].mxu0
      %v1781 = vpop.f32.mrb[0].mxu0
      %v1782 = vadd.f32 %v1662, %v1781
      %v1783 = vpop.f32.mrb[0].mxu0
      %1784 = vdwg.mxu0
      %v1785 = vmax.f32 %v1723, 0.0
      %v1786 = vmax.f32 %v1726, 0.0
      %v1787 = vmax.f32 %v1731, 0.0
      %v1788 = vmax.f32 %v1734, 0.0
      %v1789 = vmax.f32 %v1739, 0.0
      %v1790 = vmax.f32 %v1742, 0.0
      %v1791 = vmax.f32 %v1747, 0.0
      %v1792 = vmax.f32 %v1750, 0.0
      %v1793 = vmax.f32 %v1755, 0.0
      %v1794 = vmax.f32 %v1758, 0.0
      %v1795 = vmax.f32 %v1763, 0.0
      %v1796 = vmax.f32 %v1766, 0.0
      %v1797 = vmax.f32 %v1771, 0.0
      %v1798 = vmax.f32 %v1774, 0.0
      %v1799 = vmax.f32 %v1779, 0.0
      %v1800 = vmax.f32 %v1782, 0.0
      %v1801 = vpack.c.bf16 %v1786, %v1785
      %v1802 = vpack.c.bf16 %v1788, %v1787
      %v1803 = vpack.c.bf16 %v1790, %v1789
      %v1804 = vpack.c.bf16 %v1792, %v1791
      %v1805 = vpack.c.bf16 %v1794, %v1793
      %v1806 = vpack.c.bf16 %v1796, %v1795
      %v1807 = vpack.c.bf16 %v1798, %v1797
      %v1808 = vpack.c.bf16 %v1800, %v1799
      %v1809 = vld [vmem:[%s4] sm:$0xf]
      %v1810 = vld [vmem:[%s4 + $0x4] sm:$0xf]
      %v1811 = vld [vmem:[%s4 + $0x8] sm:$0xf]
      %v1812 = vld [vmem:[%s4 + $0xc] sm:$0xf]
      %v1813 = vld [vmem:[%s4 + $0x10] sm:$0xf]
      %v1814 = vld [vmem:[%s4 + $0x14] sm:$0xf]
      %v1815 = vld [vmem:[%s4 + $0x18] sm:$0xf]
      %v1816 = vld [vmem:[%s4 + $0x1c] sm:$0xf]
      %v1817 = vld [vmem:[%s4 + $0x20] sm:$0xf]
      %v1818 = vld [vmem:[%s4 + $0x24] sm:$0xf]
      %v1819 = vld [vmem:[%s4 + $0x28] sm:$0xf]
      %v1820 = vld [vmem:[%s4 + $0x2c] sm:$0xf]
      %v1821 = vld [vmem:[%s4 + $0x30] sm:$0xf]
      %v1822 = vld [vmem:[%s4 + $0x34] sm:$0xf]
      %v1823 = vld [vmem:[%s5 + $0x6] sm:$0x1]
      %v1825 = vlaneseq
      %v1826 = vshrl.u32 %v1825, 7
      %v1827 = vsub.s32 0, %v1826
      %v1828 = vrot.slane %v1823, %v1827
      %v1843 = vunpack.c.l.b16 %v1809
      %v1844 = vunpack.c.l.b16 %v1810
      %v1845 = vunpack.c.l.b16 %v1811
      %v1846 = vunpack.c.l.b16 %v1812
      %v1847 = vunpack.c.l.b16 %v1813
      %v1848 = vunpack.c.l.b16 %v1814
      %v1849 = vunpack.c.l.b16 %v1815
      %v1850 = vunpack.c.l.b16 %v1816
      %v1851 = vunpack.c.l.b16 %v1817
      %v1852 = vunpack.c.l.b16 %v1818
      %v1853 = vunpack.c.l.b16 %v1819
      %v1854 = vunpack.c.l.b16 %v1820
      %v1855 = vunpack.c.l.b16 %v1821
      %v1856 = vunpack.c.l.b16 %v1822
      %v1857 = vpack.c.b16 %v1844, %v1843
      %v1858 = vpack.c.b16 %v1846, %v1845
      %v1859 = vpack.c.b16 %v1848, %v1847
      %v1860 = vpack.c.b16 %v1850, %v1849
      %v1861 = vpack.c.b16 %v1852, %v1851
      %v1862 = vpack.c.b16 %v1854, %v1853
      %v1863 = vpack.c.b16 %v1856, %v1855
      %1871 = vrot.lane.b32.xlu0 %v1828, 48
      %v1872 = vpop.permute.xlu0 %1871
      %v1875 = vsel %vm1228, %v1801, 0
      %v1878 = vsel %vm1228, %v1802, 0
      %v1881 = vsel %vm1228, %v1803, 0
      %v1884 = vsel %vm1228, %v1804, 0
      %v1887 = vsel %vm1228, %v1805, 0
      %v1890 = vsel %vm1228, %v1806, 0
      %v1893 = vsel %vm1228, %v1807, 0
      %v1896 = vsel %vm1228, %v1808, 0
      %1898 = vmatprep.subr.bf16.mxu0 0
      %1899 = vmatpush1.bf16.msra.mxu0 %v1857
      %1900 = vmatprep.subr.bf16.mxu0 0
      %1901 = vmatpush1.bf16.msra.mxu0 %v1858
      %1902 = vmatprep.subr.bf16.mxu0 0
      %1903 = vmatpush1.bf16.msra.mxu0 %v1859
      %1904 = vmatprep.subr.bf16.mxu0 0
      %1905 = vmatpush1.bf16.msra.mxu0 %v1860
      %1906 = vmatprep.subr.bf16.mxu0 0
      %1907 = vmatpush1.bf16.msra.mxu0 %v1861
      %1908 = vmatprep.subr.bf16.mxu0 0
      %1909 = vmatpush1.bf16.msra.mxu0 %v1862
      %1910 = vmatprep.subr.bf16.mxu0 0
      %1911 = vmatpush1.bf16.msra.mxu0 %v1863
      %1912 = vmatprep.subr.bf16.mxu0 0
      %1913 = vmatpush1.bf16.msra.mxu0 0
      %1914 = vmatprep.subr.bf16.mxu0 0
      %1915 = vmatpush1.bf16.msra.mxu0 0
      %1916 = vmatprep.subr.bf16.mxu0 0
      %1917 = vmatpush1.bf16.msra.mxu0 0
      %1918 = vmatprep.subr.bf16.mxu0 0
      %1919 = vmatpush1.bf16.msra.mxu0 0
      %1920 = vmatprep.subr.bf16.mxu0 0
      %1921 = vmatpush1.bf16.msra.mxu0 0
      %1922 = vmatprep.subr.bf16.mxu0 0
      %1923 = vmatpush1.bf16.msra.mxu0 0
      %1924 = vmatprep.subr.bf16.mxu0 0
      %1925 = vmatpush1.bf16.msra.mxu0 0
      %1926 = vmatprep.subr.bf16.mxu0 0
      %1927 = vmatpush1.bf16.msra.mxu0 0
      %1928 = vmatprep.subr.bf16.mxu0 0
      %1929 = vmatpush1.bf16.msra.mxu0 0
      %1930 = vmatprep.mubr.bf16.mxu0 0
      %1931 = vmatmul.mubr.bf16.gmra.mrb[0].mxu0 %v1875
      %v1932 = vpop.f32.mrb[0].mxu0
      %v1933 = vadd.f32 %v1872, %v1932
      %v1934 = vpop.f32.mrb[0].mxu0
      %v1935 = vpop.f32.mrb[0].mxu0
      %v1936 = vadd.f32 %v1872, %v1935
      %v1937 = vpop.f32.mrb[0].mxu0
      %1938 = vmatprep.mubr.bf16.mxu0 0
      %1939 = vmatmul.mubr.bf16.gmra.mrb[0].mxu0 %v1878
      %v1940 = vpop.f32.mrb[0].mxu0
      %v1941 = vadd.f32 %v1872, %v1940
      %v1942 = vpop.f32.mrb[0].mxu0
      %v1943 = vpop.f32.mrb[0].mxu0
      %v1944 = vadd.f32 %v1872, %v1943
      %v1945 = vpop.f32.mrb[0].mxu0
      %1946 = vmatprep.mubr.bf16.mxu0 0
      %1947 = vmatmul.mubr.bf16.gmra.mrb[0].mxu0 %v1881
      %v1948 = vpop.f32.mrb[0].mxu0
      %v1949 = vadd.f32 %v1872, %v1948
      %v1950 = vpop.f32.mrb[0].mxu0
      %v1951 = vpop.f32.mrb[0].mxu0
      %v1952 = vadd.f32 %v1872, %v1951
      %v1953 = vpop.f32.mrb[0].mxu0
      %1954 = vmatprep.mubr.bf16.mxu0 0
      %1955 = vmatmul.mubr.bf16.gmra.mrb[0].mxu0 %v1884
      %v1956 = vpop.f32.mrb[0].mxu0
      %v1957 = vadd.f32 %v1872, %v1956
      %v1958 = vpop.f32.mrb[0].mxu0
      %v1959 = vpop.f32.mrb[0].mxu0
      %v1960 = vadd.f32 %v1872, %v1959
      %v1961 = vpop.f32.mrb[0].mxu0
      %1962 = vmatprep.mubr.bf16.mxu0 0
      %1963 = vmatmul.mubr.bf16.gmra.mrb[0].mxu0 %v1887
      %v1964 = vpop.f32.mrb[0].mxu0
      %v1965 = vadd.f32 %v1872, %v1964
      %v1966 = vpop.f32.mrb[0].mxu0
      %v1967 = vpop.f32.mrb[0].mxu0
      %v1968 = vadd.f32 %v1872, %v1967
      %v1969 = vpop.f32.mrb[0].mxu0
      %1970 = vmatprep.mubr.bf16.mxu0 0
      %1971 = vmatmul.mubr.bf16.gmra.mrb[0].mxu0 %v1890
      %v1972 = vpop.f32.mrb[0].mxu0
      %v1973 = vadd.f32 %v1872, %v1972
      %v1974 = vpop.f32.mrb[0].mxu0
      %v1975 = vpop.f32.mrb[0].mxu0
      %v1976 = vadd.f32 %v1872, %v1975
      %v1977 = vpop.f32.mrb[0].mxu0
      %1978 = vmatprep.mubr.bf16.mxu0 0
      %1979 = vmatmul.mubr.bf16.gmra.mrb[0].mxu0 %v1893
      %v1980 = vpop.f32.mrb[0].mxu0
      %v1981 = vadd.f32 %v1872, %v1980
      %v1982 = vpop.f32.mrb[0].mxu0
      %v1983 = vpop.f32.mrb[0].mxu0
      %v1984 = vadd.f32 %v1872, %v1983
      %v1985 = vpop.f32.mrb[0].mxu0
      %1986 = vmatprep.mubr.bf16.mxu0 0
      %1987 = vmatmul.mubr.bf16.gmra.mrb[0].mxu0 %v1896
      %v1988 = vpop.f32.mrb[0].mxu0
      %v1989 = vadd.f32 %v1872, %v1988
      %v1990 = vpop.f32.mrb[0].mxu0
      %v1991 = vpop.f32.mrb[0].mxu0
      %v1992 = vadd.f32 %v1872, %v1991
      %v1993 = vpop.f32.mrb[0].mxu0
      %1994 = vdwg.mxu0
      %v1995 = vmax.f32 %v1933, 0.0
      %v1996 = vmax.f32 %v1936, 0.0
      %v1997 = vmax.f32 %v1941, 0.0
      %v1998 = vmax.f32 %v1944, 0.0
      %v1999 = vmax.f32 %v1949, 0.0
      %v2000 = vmax.f32 %v1952, 0.0
      %v2001 = vmax.f32 %v1957, 0.0
      %v2002 = vmax.f32 %v1960, 0.0
      %v2003 = vmax.f32 %v1965, 0.0
      %v2004 = vmax.f32 %v1968, 0.0
      %v2005 = vmax.f32 %v1973, 0.0
      %v2006 = vmax.f32 %v1976, 0.0
      %v2007 = vmax.f32 %v1981, 0.0
      %v2008 = vmax.f32 %v1984, 0.0
      %v2009 = vmax.f32 %v1989, 0.0
      %v2010 = vmax.f32 %v1992, 0.0
      %v2011 = vpack.c.bf16 %v1996, %v1995
      %v2012 = vpack.c.bf16 %v1998, %v1997
      %v2013 = vpack.c.bf16 %v2000, %v1999
      %v2014 = vpack.c.bf16 %v2002, %v2001
      %v2015 = vpack.c.bf16 %v2004, %v2003
      %v2016 = vpack.c.bf16 %v2006, %v2005
      %v2017 = vpack.c.bf16 %v2008, %v2007
      %v2018 = vpack.c.bf16 %v2010, %v2009
      %v2019 = vld [vmem:[%s6] sm:$0xf]
      %v2020 = vld [vmem:[%s6 + $0x4] sm:$0xf]
      %v2021 = vld [vmem:[%s6 + $0x8] sm:$0xf]
      %v2022 = vld [vmem:[%s6 + $0xc] sm:$0xf]
      %v2023 = vld [vmem:[%s6 + $0x10] sm:$0xf]
      %v2024 = vld [vmem:[%s6 + $0x14] sm:$0xf]
      %v2031 = vunpack.c.l.b16 %v2019
      %v2032 = vunpack.c.l.b16 %v2020
      %v2033 = vunpack.c.l.b16 %v2021
      %v2034 = vunpack.c.l.b16 %v2022
      %v2035 = vunpack.c.l.b16 %v2023
      %v2036 = vunpack.c.l.b16 %v2024
      %v2037 = vpack.c.b16 %v2032, %v2031
      %v2038 = vpack.c.b16 %v2034, %v2033
      %v2039 = vpack.c.b16 %v2036, %v2035
      %vm2043 = vcmask 392192
      %v2045 = vsel %vm2043, %v2011, 0
      %v2048 = vsel %vm2043, %v2012, 0
      %v2051 = vsel %vm2043, %v2013, 0
      %v2054 = vsel %vm2043, %v2014, 0
      %v2057 = vsel %vm2043, %v2015, 0
      %v2060 = vsel %vm2043, %v2016, 0
      %v2063 = vsel %vm2043, %v2017, 0
      %v2066 = vsel %vm2043, %v2018, 0
      %2068 = vmatprep.subr.bf16.mxu0 0
      %2069 = vmatpush1.bf16.msra.mxu0 %v2037
      %2070 = vmatprep.subr.bf16.mxu0 0
      %2071 = vmatpush1.bf16.msra.mxu0 %v2038
      %2072 = vmatprep.subr.bf16.mxu0 0
      %2073 = vmatpush1.bf16.msra.mxu0 %v2039
      %2074 = vmatprep.subr.bf16.mxu0 0
      %2075 = vmatpush1.bf16.msra.mxu0 0
      %2076 = vmatprep.subr.bf16.mxu0 0
      %2077 = vmatpush1.bf16.msra.mxu0 0
      %2078 = vmatprep.subr.bf16.mxu0 0
      %2079 = vmatpush1.bf16.msra.mxu0 0
      %2080 = vmatprep.subr.bf16.mxu0 0
      %2081 = vmatpush1.bf16.msra.mxu0 0
      %2082 = vmatprep.subr.bf16.mxu0 0
      %2083 = vmatpush1.bf16.msra.mxu0 0
      %2084 = vmatprep.subr.bf16.mxu0 0
      %2085 = vmatpush1.bf16.msra.mxu0 0
      %2086 = vmatprep.subr.bf16.mxu0 0
      %2087 = vmatpush1.bf16.msra.mxu0 0
      %2088 = vmatprep.subr.bf16.mxu0 0
      %2089 = vmatpush1.bf16.msra.mxu0 0
      %2090 = vmatprep.subr.bf16.mxu0 0
      %2091 = vmatpush1.bf16.msra.mxu0 0
      %2092 = vmatprep.subr.bf16.mxu0 0
      %2093 = vmatpush1.bf16.msra.mxu0 0
      %2094 = vmatprep.subr.bf16.mxu0 0
      %2095 = vmatpush1.bf16.msra.mxu0 0
      %2096 = vmatprep.subr.bf16.mxu0 0
      %2097 = vmatpush1.bf16.msra.mxu0 0
      %2098 = vmatprep.subr.bf16.mxu0 0
      %2099 = vmatpush1.bf16.msra.mxu0 0
      %2100 = vmatprep.mubr.bf16.mxu0 0
      %2101 = vmatmul.mubr.bf16.gmra.mrb[0].mxu0 %v2045
      %v2102 = vpop.f32.mrb[0].mxu0
      %v2103 = vadd.f32 0.0, %v2102
      %v2104 = vpop.f32.mrb[0].mxu0
      %v2105 = vpop.f32.mrb[0].mxu0
      %v2106 = vadd.f32 0.0, %v2105
      %v2107 = vpop.f32.mrb[0].mxu0
      %2108 = vmatprep.mubr.bf16.mxu0 0
      %2109 = vmatmul.mubr.bf16.gmra.mrb[0].mxu0 %v2048
      %v2110 = vpop.f32.mrb[0].mxu0
      %v2111 = vadd.f32 0.0, %v2110
      %v2112 = vpop.f32.mrb[0].mxu0
      %v2113 = vpop.f32.mrb[0].mxu0
      %v2114 = vadd.f32 0.0, %v2113
      %v2115 = vpop.f32.mrb[0].mxu0
      %2116 = vmatprep.mubr.bf16.mxu0 0
      %2117 = vmatmul.mubr.bf16.gmra.mrb[0].mxu0 %v2051
      %v2118 = vpop.f32.mrb[0].mxu0
      %v2119 = vadd.f32 0.0, %v2118
      %v2120 = vpop.f32.mrb[0].mxu0
      %v2121 = vpop.f32.mrb[0].mxu0
      %v2122 = vadd.f32 0.0, %v2121
      %v2123 = vpop.f32.mrb[0].mxu0
      %2124 = vmatprep.mubr.bf16.mxu0 0
      %2125 = vmatmul.mubr.bf16.gmra.mrb[0].mxu0 %v2054
      %v2126 = vpop.f32.mrb[0].mxu0
      %v2127 = vadd.f32 0.0, %v2126
      %v2128 = vpop.f32.mrb[0].mxu0
      %v2129 = vpop.f32.mrb[0].mxu0
      %v2130 = vadd.f32 0.0, %v2129
      %v2131 = vpop.f32.mrb[0].mxu0
      %2132 = vmatprep.mubr.bf16.mxu0 0
      %2133 = vmatmul.mubr.bf16.gmra.mrb[0].mxu0 %v2057
      %v2134 = vpop.f32.mrb[0].mxu0
      %v2135 = vadd.f32 0.0, %v2134
      %v2136 = vpop.f32.mrb[0].mxu0
      %v2137 = vpop.f32.mrb[0].mxu0
      %v2138 = vadd.f32 0.0, %v2137
      %v2139 = vpop.f32.mrb[0].mxu0
      %2140 = vmatprep.mubr.bf16.mxu0 0
      %2141 = vmatmul.mubr.bf16.gmra.mrb[0].mxu0 %v2060
      %v2142 = vpop.f32.mrb[0].mxu0
      %v2143 = vadd.f32 0.0, %v2142
      %v2144 = vpop.f32.mrb[0].mxu0
      %v2145 = vpop.f32.mrb[0].mxu0
      %v2146 = vadd.f32 0.0, %v2145
      %v2147 = vpop.f32.mrb[0].mxu0
      %2148 = vmatprep.mubr.bf16.mxu0 0
      %2149 = vmatmul.mubr.bf16.gmra.mrb[0].mxu0 %v2063
      %v2150 = vpop.f32.mrb[0].mxu0
      %v2151 = vadd.f32 0.0, %v2150
      %v2152 = vpop.f32.mrb[0].mxu0
      %v2153 = vpop.f32.mrb[0].mxu0
      %v2154 = vadd.f32 0.0, %v2153
      %v2155 = vpop.f32.mrb[0].mxu0
      %2156 = vmatprep.mubr.bf16.mxu0 0
      %2157 = vmatmul.mubr.bf16.gmra.mrb[0].mxu0 %v2066
      %v2158 = vpop.f32.mrb[0].mxu0
      %v2159 = vadd.f32 0.0, %v2158
      %v2160 = vpop.f32.mrb[0].mxu0
      %v2161 = vpop.f32.mrb[0].mxu0
      %v2162 = vadd.f32 0.0, %v2161
      %v2163 = vpop.f32.mrb[0].mxu0
      %2164 = vdwg.mxu0
      %2165 = vst [vmem:[#allocation2] sm:$0xff] %v2103
      %2166 = vst [vmem:[#allocation2 + $0x8] sm:$0xff] %v2106
      %2167 = vst [vmem:[#allocation2 + $0x10] sm:$0xff] %v2111
      %2168 = vst [vmem:[#allocation2 + $0x18] sm:$0xff] %v2114
      %2169 = vst [vmem:[#allocation2 + $0x20] sm:$0xff] %v2119
      %2170 = vst [vmem:[#allocation2 + $0x28] sm:$0xff] %v2122
      %2171 = vst [vmem:[#allocation2 + $0x30] sm:$0xff] %v2127
      %2172 = vst [vmem:[#allocation2 + $0x38] sm:$0xff] %v2130
      %2173 = vst [vmem:[#allocation2 + $0x40] sm:$0xff] %v2135
      %2174 = vst [vmem:[#allocation2 + $0x48] sm:$0xff] %v2138
      %2175 = vst [vmem:[#allocation2 + $0x50] sm:$0xff] %v2143
      %2176 = vst [vmem:[#allocation2 + $0x58] sm:$0xff] %v2146
      %2177 = vst [vmem:[#allocation2 + $0x60] sm:$0xff] %v2151
      %2178 = vst [vmem:[#allocation2 + $0x68] sm:$0xff] %v2154
      %2179 = vst [vmem:[#allocation2 + $0x70] sm:$0xff] %v2159
      %2180 = vst [vmem:[#allocation2 + $0x78] sm:$0xff] %v2162
      %v2181 = vld [vmem:[#allocation2] sm:$0xff]
      %v2182 = vld [vmem:[#allocation2 + $0x8] sm:$0xff]
      %v2183 = vld [vmem:[#allocation2 + $0x10] sm:$0xff]
      %v2184 = vld [vmem:[#allocation2 + $0x18] sm:$0xff]
      %v2185 = vld [vmem:[#allocation2 + $0x20] sm:$0xff]
      %v2186 = vld [vmem:[#allocation2 + $0x28] sm:$0xff]
      %v2187 = vld [vmem:[#allocation2 + $0x30] sm:$0xff]
      %v2188 = vld [vmem:[#allocation2 + $0x38] sm:$0xff]
      %v2189 = vld [vmem:[#allocation2 + $0x40] sm:$0xff]
      %v2190 = vld [vmem:[#allocation2 + $0x48] sm:$0xff]
      %v2191 = vld [vmem:[#allocation2 + $0x50] sm:$0xff]
      %v2192 = vld [vmem:[#allocation2 + $0x58] sm:$0xff]
      %v2193 = vld [vmem:[#allocation2 + $0x60] sm:$0xff]
      %v2194 = vld [vmem:[#allocation2 + $0x68] sm:$0xff]
      %v2195 = vld [vmem:[#allocation2 + $0x70] sm:$0xff]
      %v2196 = vld [vmem:[#allocation2 + $0x78] sm:$0xff]
      %v2197 = vpack.c.bf16 %v2182, %v2181
      %v2198 = vpack.c.bf16 %v2184, %v2183
      %v2199 = vpack.c.bf16 %v2186, %v2185
      %v2200 = vpack.c.bf16 %v2188, %v2187
      %v2201 = vpack.c.bf16 %v2190, %v2189
      %v2202 = vpack.c.bf16 %v2192, %v2191
      %v2203 = vpack.c.bf16 %v2194, %v2193
      %v2204 = vpack.c.bf16 %v2196, %v2195
      %v2205 = vld [vmem:[%s7] sm:$0xff]
      %v2206 = vld [vmem:[%s7 + $0x8] sm:$0xff]
      %v2207 = vld [vmem:[%s7 + $0x10] sm:$0xff]
      %v2208 = vld [vmem:[%s7 + $0x18] sm:$0xff]
      %v2209 = vld [vmem:[%s7 + $0x20] sm:$0xff]
      %v2210 = vld [vmem:[%s7 + $0x28] sm:$0xff]
      %v2211 = vld [vmem:[%s7 + $0x30] sm:$0xff]
      %v2212 = vld [vmem:[%s7 + $0x38] sm:$0xff]
      %v2213 = vld [vmem:[%s7 + $0x40] sm:$0xff]
      %v2214 = vld [vmem:[%s7 + $0x48] sm:$0xff]
      %v2215 = vld [vmem:[%s7 + $0x50] sm:$0xff]
      %v2216 = vld [vmem:[%s7 + $0x58] sm:$0xff]
      %v2217 = vld [vmem:[%s7 + $0x60] sm:$0xff]
      %v2218 = vld [vmem:[%s7 + $0x68] sm:$0xff]
      %v2219 = vld [vmem:[%s7 + $0x70] sm:$0xff]
      %v2220 = vld [vmem:[%s7 + $0x78] sm:$0xff]
      %2229 = vrot.lane.b32.xlu0 %v2197, 120
      %v2230 = vpop.permute.xlu0 %2229
      %2231 = vrot.lane.b32.xlu0 %v2198, 120
      %v2232 = vpop.permute.xlu0 %2231
      %2233 = vrot.lane.b32.xlu0 %v2199, 120
      %v2234 = vpop.permute.xlu0 %2233
      %2235 = vrot.lane.b32.xlu0 %v2200, 120
      %v2236 = vpop.permute.xlu0 %2235
      %2237 = vrot.lane.b32.xlu0 %v2201, 120
      %v2238 = vpop.permute.xlu0 %2237
      %2239 = vrot.lane.b32.xlu0 %v2202, 120
      %v2240 = vpop.permute.xlu0 %2239
      %2241 = vrot.lane.b32.xlu0 %v2203, 120
      %v2242 = vpop.permute.xlu0 %2241
      %2243 = vrot.lane.b32.xlu0 %v2204, 120
      %v2244 = vpop.permute.xlu0 %2243
      %vm2245 = vcmask 64512
      %v2247 = vsel %vm2245, %v2230, 0
      %v2250 = vsel %vm2245, %v2232, 0
      %v2253 = vsel %vm2245, %v2234, 0
      %v2256 = vsel %vm2245, %v2236, 0
      %v2259 = vsel %vm2245, %v2238, 0
      %v2262 = vsel %vm2245, %v2240, 0
      %v2265 = vsel %vm2245, %v2242, 0
      %v2268 = vsel %vm2245, %v2244, 0
      %v2271 = vsel %vm2245, %v2197, 0
      %v2274 = vsel %vm2245, %v2198, 0
      %v2277 = vsel %vm2245, %v2199, 0
      %v2280 = vsel %vm2245, %v2200, 0
      %v2283 = vsel %vm2245, %v2201, 0
      %v2286 = vsel %vm2245, %v2202, 0
      %v2289 = vsel %vm2245, %v2203, 0
      %v2292 = vsel %vm2245, %v2204, 0
      %2294 = vmatprep.subr.bf16.mxu0 0
      %2295 = vmatpush1.bf16.xpose.msra.mxu0 %v2271
      %2296 = vmatprep.subr.bf16.mxu0 0
      %2297 = vmatpush1.bf16.xpose.msra.mxu0 %v2274
      %2298 = vmatprep.subr.bf16.mxu0 0
      %2299 = vmatpush1.bf16.xpose.msra.mxu0 %v2277
      %2300 = vmatprep.subr.bf16.mxu0 0
      %2301 = vmatpush1.bf16.xpose.msra.mxu0 %v2280
      %2302 = vmatprep.subr.bf16.mxu0 0
      %2303 = vmatpush1.bf16.xpose.msra.mxu0 %v2283
      %2304 = vmatprep.subr.bf16.mxu0 0
      %2305 = vmatpush1.bf16.xpose.msra.mxu0 %v2286
      %2306 = vmatprep.subr.bf16.mxu0 0
      %2307 = vmatpush1.bf16.xpose.msra.mxu0 %v2289
      %2308 = vmatprep.subr.bf16.mxu0 0
      %2309 = vmatpush1.bf16.xpose.msra.mxu0 %v2292
      %2310 = vmatprep.subr.bf16.mxu0 0
      %2311 = vmatpush1.bf16.xpose.msra.mxu0 0
      %2312 = vmatprep.subr.bf16.mxu0 0
      %2313 = vmatpush1.bf16.xpose.msra.mxu0 0
      %2314 = vmatprep.subr.bf16.mxu0 0
      %2315 = vmatpush1.bf16.xpose.msra.mxu0 0
      %2316 = vmatprep.subr.bf16.mxu0 0
      %2317 = vmatpush1.bf16.xpose.msra.mxu0 0
      %2318 = vmatprep.subr.bf16.mxu0 0
      %2319 = vmatpush1.bf16.xpose.msra.mxu0 0
      %2320 = vmatprep.subr.bf16.mxu0 0
      %2321 = vmatpush1.bf16.xpose.msra.mxu0 0
      %2322 = vmatprep.subr.bf16.mxu0 0
      %2323 = vmatpush1.bf16.xpose.msra.mxu0 0
      %2324 = vmatprep.subr.bf16.mxu0 0
      %2325 = vmatpush1.bf16.xpose.msra.mxu0 0
      %2326 = vmatprep.mubr.bf16.mxu0 0
      %2327 = vmatmul.mubr.bf16.gmra.mrb[0].mxu0 %v2247
      %v2328 = vpop.f32.mrb[0].mxu0
      %v2329 = vadd.f32 %v2205, %v2328
      %v2330 = vpop.f32.mrb[0].mxu0
      %v2331 = vpop.f32.mrb[0].mxu0
      %v2332 = vadd.f32 %v2206, %v2331
      %v2333 = vpop.f32.mrb[0].mxu0
      %2334 = vmatprep.mubr.bf16.mxu0 0
      %2335 = vmatmul.mubr.bf16.gmra.mrb[0].mxu0 %v2250
      %v2336 = vpop.f32.mrb[0].mxu0
      %v2337 = vadd.f32 %v2207, %v2336
      %v2338 = vpop.f32.mrb[0].mxu0
      %v2339 = vpop.f32.mrb[0].mxu0
      %v2340 = vadd.f32 %v2208, %v2339
      %v2341 = vpop.f32.mrb[0].mxu0
      %2342 = vmatprep.mubr.bf16.mxu0 0
      %2343 = vmatmul.mubr.bf16.gmra.mrb[0].mxu0 %v2253
      %v2344 = vpop.f32.mrb[0].mxu0
      %v2345 = vadd.f32 %v2209, %v2344
      %v2346 = vpop.f32.mrb[0].mxu0
      %v2347 = vpop.f32.mrb[0].mxu0
      %v2348 = vadd.f32 %v2210, %v2347
      %v2349 = vpop.f32.mrb[0].mxu0
      %2350 = vmatprep.mubr.bf16.mxu0 0
      %2351 = vmatmul.mubr.bf16.gmra.mrb[0].mxu0 %v2256
      %v2352 = vpop.f32.mrb[0].mxu0
      %v2353 = vadd.f32 %v2211, %v2352
      %v2354 = vpop.f32.mrb[0].mxu0
      %v2355 = vpop.f32.mrb[0].mxu0
      %v2356 = vadd.f32 %v2212, %v2355
      %v2357 = vpop.f32.mrb[0].mxu0
      %2358 = vmatprep.mubr.bf16.mxu0 0
      %2359 = vmatmul.mubr.bf16.gmra.mrb[0].mxu0 %v2259
      %v2360 = vpop.f32.mrb[0].mxu0
      %v2361 = vadd.f32 %v2213, %v2360
      %v2362 = vpop.f32.mrb[0].mxu0
      %v2363 = vpop.f32.mrb[0].mxu0
      %v2364 = vadd.f32 %v2214, %v2363
      %v2365 = vpop.f32.mrb[0].mxu0
      %2366 = vmatprep.mubr.bf16.mxu0 0
      %2367 = vmatmul.mubr.bf16.gmra.mrb[0].mxu0 %v2262
      %v2368 = vpop.f32.mrb[0].mxu0
      %v2369 = vadd.f32 %v2215, %v2368
      %v2370 = vpop.f32.mrb[0].mxu0
      %v2371 = vpop.f32.mrb[0].mxu0
      %v2372 = vadd.f32 %v2216, %v2371
      %v2373 = vpop.f32.mrb[0].mxu0
      %2374 = vmatprep.mubr.bf16.mxu0 0
      %2375 = vmatmul.mubr.bf16.gmra.mrb[0].mxu0 %v2265
      %v2376 = vpop.f32.mrb[0].mxu0
      %v2377 = vadd.f32 %v2217, %v2376
      %v2378 = vpop.f32.mrb[0].mxu0
      %v2379 = vpop.f32.mrb[0].mxu0
      %v2380 = vadd.f32 %v2218, %v2379
      %v2381 = vpop.f32.mrb[0].mxu0
      %2382 = vmatprep.mubr.bf16.mxu0 0
      %2383 = vmatmul.mubr.bf16.gmra.mrb[0].mxu0 %v2268
      %v2384 = vpop.f32.mrb[0].mxu0
      %v2385 = vadd.f32 %v2219, %v2384
      %v2386 = vpop.f32.mrb[0].mxu0
      %v2387 = vpop.f32.mrb[0].mxu0
      %v2388 = vadd.f32 %v2220, %v2387
      %v2389 = vpop.f32.mrb[0].mxu0
      %2390 = vdwg.mxu0
      %2391 = vmax.xlane.f32.xlu0 %v2329
      %v2392 = vpop.xlane.xlu0 %2391
      %2393 = vmax.xlane.f32.xlu0 %v2332
      %v2394 = vpop.xlane.xlu0 %2393
      %2395 = vmax.xlane.f32.xlu0 %v2337
      %v2396 = vpop.xlane.xlu0 %2395
      %2397 = vmax.xlane.f32.xlu0 %v2340
      %v2398 = vpop.xlane.xlu0 %2397
      %2399 = vmax.xlane.f32.xlu0 %v2345
      %v2400 = vpop.xlane.xlu0 %2399
      %2401 = vmax.xlane.f32.xlu0 %v2348
      %v2402 = vpop.xlane.xlu0 %2401
      %2403 = vmax.xlane.f32.xlu0 %v2353
      %v2404 = vpop.xlane.xlu0 %2403
      %2405 = vmax.xlane.f32.xlu0 %v2356
      %v2406 = vpop.xlane.xlu0 %2405
      %2407 = vmax.xlane.f32.xlu0 %v2361
      %v2408 = vpop.xlane.xlu0 %2407
      %2409 = vmax.xlane.f32.xlu0 %v2364
      %v2410 = vpop.xlane.xlu0 %2409
      %2411 = vmax.xlane.f32.xlu0 %v2369
      %v2412 = vpop.xlane.xlu0 %2411
      %2413 = vmax.xlane.f32.xlu0 %v2372
      %v2414 = vpop.xlane.xlu0 %2413
      %2415 = vmax.xlane.f32.xlu0 %v2377
      %v2416 = vpop.xlane.xlu0 %2415
      %2417 = vmax.xlane.f32.xlu0 %v2380
      %v2418 = vpop.xlane.xlu0 %2417
      %2419 = vmax.xlane.f32.xlu0 %v2385
      %v2420 = vpop.xlane.xlu0 %2419
      %2421 = vmax.xlane.f32.xlu0 %v2388
      %v2422 = vpop.xlane.xlu0 %2421
      %v2423 = vsub.f32 %v2329, %v2392
      %v2424 = vsub.f32 %v2332, %v2394
      %v2425 = vsub.f32 %v2337, %v2396
      %v2426 = vsub.f32 %v2340, %v2398
      %v2427 = vsub.f32 %v2345, %v2400
      %v2428 = vsub.f32 %v2348, %v2402
      %v2429 = vsub.f32 %v2353, %v2404
      %v2430 = vsub.f32 %v2356, %v2406
      %v2431 = vsub.f32 %v2361, %v2408
      %v2432 = vsub.f32 %v2364, %v2410
      %v2433 = vsub.f32 %v2369, %v2412
      %v2434 = vsub.f32 %v2372, %v2414
      %v2435 = vsub.f32 %v2377, %v2416
      %v2436 = vsub.f32 %v2380, %v2418
      %v2437 = vsub.f32 %v2385, %v2420
      %v2438 = vsub.f32 %v2388, %v2422
      %v2439 = vmul.f32 %v2423, 1.442695
      %v2440 = vpow.pop %v2439
      %v2441 = vmul.f32 %v2424, 1.442695
      %v2442 = vpow.pop %v2441
      %v2443 = vmul.f32 %v2425, 1.442695
      %v2444 = vpow.pop %v2443
      %v2445 = vmul.f32 %v2426, 1.442695
      %v2446 = vpow.pop %v2445
      %v2447 = vmul.f32 %v2427, 1.442695
      %v2448 = vpow.pop %v2447
      %v2449 = vmul.f32 %v2428, 1.442695
      %v2450 = vpow.pop %v2449
      %v2451 = vmul.f32 %v2429, 1.442695
      %v2452 = vpow.pop %v2451
      %v2453 = vmul.f32 %v2430, 1.442695
      %v2454 = vpow.pop %v2453
      %v2455 = vmul.f32 %v2431, 1.442695
      %v2456 = vpow.pop %v2455
      %v2457 = vmul.f32 %v2432, 1.442695
      %v2458 = vpow.pop %v2457
      %v2459 = vmul.f32 %v2433, 1.442695
      %v2460 = vpow.pop %v2459
      %v2461 = vmul.f32 %v2434, 1.442695
      %v2462 = vpow.pop %v2461
      %v2463 = vmul.f32 %v2435, 1.442695
      %v2464 = vpow.pop %v2463
      %v2465 = vmul.f32 %v2436, 1.442695
      %v2466 = vpow.pop %v2465
      %v2467 = vmul.f32 %v2437, 1.442695
      %v2468 = vpow.pop %v2467
      %v2469 = vmul.f32 %v2438, 1.442695
      %v2470 = vpow.pop %v2469
      %2471 = vadd.xlane.f32.xlu0 %v2440
      %v2472 = vpop.xlane.xlu0 %2471
      %2473 = vadd.xlane.f32.xlu0 %v2442
      %v2474 = vpop.xlane.xlu0 %2473
      %2475 = vadd.xlane.f32.xlu0 %v2444
      %v2476 = vpop.xlane.xlu0 %2475
      %2477 = vadd.xlane.f32.xlu0 %v2446
      %v2478 = vpop.xlane.xlu0 %2477
      %2479 = vadd.xlane.f32.xlu0 %v2448
      %v2480 = vpop.xlane.xlu0 %2479
      %2481 = vadd.xlane.f32.xlu0 %v2450
      %v2482 = vpop.xlane.xlu0 %2481
      %2483 = vadd.xlane.f32.xlu0 %v2452
      %v2484 = vpop.xlane.xlu0 %2483
      %2485 = vadd.xlane.f32.xlu0 %v2454
      %v2486 = vpop.xlane.xlu0 %2485
      %2487 = vadd.xlane.f32.xlu0 %v2456
      %v2488 = vpop.xlane.xlu0 %2487
      %2489 = vadd.xlane.f32.xlu0 %v2458
      %v2490 = vpop.xlane.xlu0 %2489
      %2491 = vadd.xlane.f32.xlu0 %v2460
      %v2492 = vpop.xlane.xlu0 %2491
      %2493 = vadd.xlane.f32.xlu0 %v2462
      %v2494 = vpop.xlane.xlu0 %2493
      %2495 = vadd.xlane.f32.xlu0 %v2464
      %v2496 = vpop.xlane.xlu0 %2495
      %2497 = vadd.xlane.f32.xlu0 %v2466
      %v2498 = vpop.xlane.xlu0 %2497
      %2499 = vadd.xlane.f32.xlu0 %v2468
      %v2500 = vpop.xlane.xlu0 %2499
      %2501 = vadd.xlane.f32.xlu0 %v2470
      %v2502 = vpop.xlane.xlu0 %2501
      %v2503 = vrcp.pop %v2472
      %v2504 = vrcp.pop %v2474
      %v2505 = vrcp.pop %v2476
      %v2506 = vrcp.pop %v2478
      %v2507 = vrcp.pop %v2480
      %v2508 = vrcp.pop %v2482
      %v2509 = vrcp.pop %v2484
      %v2510 = vrcp.pop %v2486
      %v2511 = vrcp.pop %v2488
      %v2512 = vrcp.pop %v2490
      %v2513 = vrcp.pop %v2492
      %v2514 = vrcp.pop %v2494
      %v2515 = vrcp.pop %v2496
      %v2516 = vrcp.pop %v2498
      %v2517 = vrcp.pop %v2500
      %v2518 = vrcp.pop %v2502
      %v2519 = vmul.f32 %v2440, %v2503
      %v2520 = vmul.f32 %v2442, %v2504
      %v2521 = vmul.f32 %v2444, %v2505
      %v2522 = vmul.f32 %v2446, %v2506
      %v2523 = vmul.f32 %v2448, %v2507
      %v2524 = vmul.f32 %v2450, %v2508
      %v2525 = vmul.f32 %v2452, %v2509
      %v2526 = vmul.f32 %v2454, %v2510
      %v2527 = vmul.f32 %v2456, %v2511
      %v2528 = vmul.f32 %v2458, %v2512
      %v2529 = vmul.f32 %v2460, %v2513
      %v2530 = vmul.f32 %v2462, %v2514
      %v2531 = vmul.f32 %v2464, %v2515
      %v2532 = vmul.f32 %v2466, %v2516
      %v2533 = vmul.f32 %v2468, %v2517
      %v2534 = vmul.f32 %v2470, %v2518
      %v2535 = vpack.c.bf16 %v2520, %v2519
      %v2536 = vpack.c.bf16 %v2522, %v2521
      %v2537 = vpack.c.bf16 %v2524, %v2523
      %v2538 = vpack.c.bf16 %v2526, %v2525
      %v2539 = vpack.c.bf16 %v2528, %v2527
      %v2540 = vpack.c.bf16 %v2530, %v2529
      %v2541 = vpack.c.bf16 %v2532, %v2531
      %v2542 = vpack.c.bf16 %v2534, %v2533
      %2543 = vrot.lane.b32.xlu0 %v2197, 112
      %v2544 = vpop.permute.xlu0 %2543
      %2545 = vrot.lane.b32.xlu0 %v2198, 112
      %v2546 = vpop.permute.xlu0 %2545
      %2547 = vrot.lane.b32.xlu0 %v2199, 112
      %v2548 = vpop.permute.xlu0 %2547
      %2549 = vrot.lane.b32.xlu0 %v2200, 112
      %v2550 = vpop.permute.xlu0 %2549
      %2551 = vrot.lane.b32.xlu0 %v2201, 112
      %v2552 = vpop.permute.xlu0 %2551
      %2553 = vrot.lane.b32.xlu0 %v2202, 112
      %v2554 = vpop.permute.xlu0 %2553
      %2555 = vrot.lane.b32.xlu0 %v2203, 112
      %v2556 = vpop.permute.xlu0 %2555
      %2557 = vrot.lane.b32.xlu0 %v2204, 112
      %v2558 = vpop.permute.xlu0 %2557
      %2567 = vmatprep.subr.bf16.mxu0 0
      %2568 = vmatpush1.bf16.msra.mxu0 %v2544
      %2569 = vmatprep.subr.bf16.mxu0 0
      %2570 = vmatpush1.bf16.msra.mxu0 %v2546
      %2571 = vmatprep.subr.bf16.mxu0 0
      %2572 = vmatpush1.bf16.msra.mxu0 %v2548
      %2573 = vmatprep.subr.bf16.mxu0 0
      %2574 = vmatpush1.bf16.msra.mxu0 %v2550
      %2575 = vmatprep.subr.bf16.mxu0 0
      %2576 = vmatpush1.bf16.msra.mxu0 %v2552
      %2577 = vmatprep.subr.bf16.mxu0 0
      %2578 = vmatpush1.bf16.msra.mxu0 %v2554
      %2579 = vmatprep.subr.bf16.mxu0 0
      %2580 = vmatpush1.bf16.msra.mxu0 %v2556
      %2581 = vmatprep.subr.bf16.mxu0 0
      %2582 = vmatpush1.bf16.msra.mxu0 %v2558
      %2583 = vmatprep.subr.bf16.mxu0 0
      %2584 = vmatpush1.bf16.msra.mxu0 0
      %2585 = vmatprep.subr.bf16.mxu0 0
      %2586 = vmatpush1.bf16.msra.mxu0 0
      %2587 = vmatprep.subr.bf16.mxu0 0
      %2588 = vmatpush1.bf16.msra.mxu0 0
      %2589 = vmatprep.subr.bf16.mxu0 0
      %2590 = vmatpush1.bf16.msra.mxu0 0
      %2591 = vmatprep.subr.bf16.mxu0 0
      %2592 = vmatpush1.bf16.msra.mxu0 0
      %2593 = vmatprep.subr.bf16.mxu0 0
      %2594 = vmatpush1.bf16.msra.mxu0 0
      %2595 = vmatprep.subr.bf16.mxu0 0
      %2596 = vmatpush1.bf16.msra.mxu0 0
      %2597 = vmatprep.subr.bf16.mxu0 0
      %2598 = vmatpush1.bf16.msra.mxu0 0
      %2599 = vmatprep.mubr.bf16.mxu0 0
      %2600 = vmatmul.mubr.bf16.gmra.mrb[0].mxu0 %v2535
      %v2601 = vpop.f32.mrb[0].mxu0
      %v2602 = vadd.f32 0.0, %v2601
      %v2603 = vpop.f32.mrb[0].mxu0
      %v2604 = vpop.f32.mrb[0].mxu0
      %v2605 = vadd.f32 0.0, %v2604
      %v2606 = vpop.f32.mrb[0].mxu0
      %2607 = vmatprep.mubr.bf16.mxu0 0
      %2608 = vmatmul.mubr.bf16.gmra.mrb[0].mxu0 %v2536
      %v2609 = vpop.f32.mrb[0].mxu0
      %v2610 = vadd.f32 0.0, %v2609
      %v2611 = vpop.f32.mrb[0].mxu0
      %v2612 = vpop.f32.mrb[0].mxu0
      %v2613 = vadd.f32 0.0, %v2612
      %v2614 = vpop.f32.mrb[0].mxu0
      %2615 = vmatprep.mubr.bf16.mxu0 0
      %2616 = vmatmul.mubr.bf16.gmra.mrb[0].mxu0 %v2537
      %v2617 = vpop.f32.mrb[0].mxu0
      %v2618 = vadd.f32 0.0, %v2617
      %v2619 = vpop.f32.mrb[0].mxu0
      %v2620 = vpop.f32.mrb[0].mxu0
      %v2621 = vadd.f32 0.0, %v2620
      %v2622 = vpop.f32.mrb[0].mxu0
      %2623 = vmatprep.mubr.bf16.mxu0 0
      %2624 = vmatmul.mubr.bf16.gmra.mrb[0].mxu0 %v2538
      %v2625 = vpop.f32.mrb[0].mxu0
      %v2626 = vadd.f32 0.0, %v2625
      %v2627 = vpop.f32.mrb[0].mxu0
      %v2628 = vpop.f32.mrb[0].mxu0
      %v2629 = vadd.f32 0.0, %v2628
      %v2630 = vpop.f32.mrb[0].mxu0
      %2631 = vmatprep.mubr.bf16.mxu0 0
      %2632 = vmatmul.mubr.bf16.gmra.mrb[0].mxu0 %v2539
      %v2633 = vpop.f32.mrb[0].mxu0
      %v2634 = vadd.f32 0.0, %v2633
      %v2635 = vpop.f32.mrb[0].mxu0
      %v2636 = vpop.f32.mrb[0].mxu0
      %v2637 = vadd.f32 0.0, %v2636
      %v2638 = vpop.f32.mrb[0].mxu0
      %2639 = vmatprep.mubr.bf16.mxu0 0
      %2640 = vmatmul.mubr.bf16.gmra.mrb[0].mxu0 %v2540
      %v2641 = vpop.f32.mrb[0].mxu0
      %v2642 = vadd.f32 0.0, %v2641
      %v2643 = vpop.f32.mrb[0].mxu0
      %v2644 = vpop.f32.mrb[0].mxu0
      %v2645 = vadd.f32 0.0, %v2644
      %v2646 = vpop.f32.mrb[0].mxu0
      %2647 = vmatprep.mubr.bf16.mxu0 0
      %2648 = vmatmul.mubr.bf16.gmra.mrb[0].mxu0 %v2541
      %v2649 = vpop.f32.mrb[0].mxu0
      %v2650 = vadd.f32 0.0, %v2649
      %v2651 = vpop.f32.mrb[0].mxu0
      %v2652 = vpop.f32.mrb[0].mxu0
      %v2653 = vadd.f32 0.0, %v2652
      %v2654 = vpop.f32.mrb[0].mxu0
      %2655 = vmatprep.mubr.bf16.mxu0 0
      %2656 = vmatmul.mubr.bf16.gmra.mrb[0].mxu0 %v2542
      %v2657 = vpop.f32.mrb[0].mxu0
      %v2658 = vadd.f32 0.0, %v2657
      %v2659 = vpop.f32.mrb[0].mxu0
      %v2660 = vpop.f32.mrb[0].mxu0
      %v2661 = vadd.f32 0.0, %v2660
      %v2662 = vpop.f32.mrb[0].mxu0
      %2663 = vdwg.mxu0
      %2664 = vst.msk [vmem:[#allocation3] sm:$0xff] %vm1223, %v2602
      %2665 = vst.msk [vmem:[#allocation3 + $0x8] sm:$0xff] %vm1223, %v2605
      %2666 = vst.msk [vmem:[#allocation3 + $0x10] sm:$0xff] %vm1223, %v2610
      %2667 = vst.msk [vmem:[#allocation3 + $0x18] sm:$0xff] %vm1223, %v2613
      %2668 = vst.msk [vmem:[#allocation3 + $0x20] sm:$0xff] %vm1223, %v2618
      %2669 = vst.msk [vmem:[#allocation3 + $0x28] sm:$0xff] %vm1223, %v2621
      %2670 = vst.msk [vmem:[#allocation3 + $0x30] sm:$0xff] %vm1223, %v2626
      %2671 = vst.msk [vmem:[#allocation3 + $0x38] sm:$0xff] %vm1223, %v2629
      %2672 = vst.msk [vmem:[#allocation3 + $0x40] sm:$0xff] %vm1223, %v2634
      %2673 = vst.msk [vmem:[#allocation3 + $0x48] sm:$0xff] %vm1223, %v2637
      %2674 = vst.msk [vmem:[#allocation3 + $0x50] sm:$0xff] %vm1223, %v2642
      %2675 = vst.msk [vmem:[#allocation3 + $0x58] sm:$0xff] %vm1223, %v2645
      %2676 = vst.msk [vmem:[#allocation3 + $0x60] sm:$0xff] %vm1223, %v2650
      %2677 = vst.msk [vmem:[#allocation3 + $0x68] sm:$0xff] %vm1223, %v2653
      %2678 = vst.msk [vmem:[#allocation3 + $0x70] sm:$0xff] %vm1223, %v2658
      %2679 = vst.msk [vmem:[#allocation3 + $0x78] sm:$0xff] %vm1223, %v2661
      %v2680 = vld [vmem:[#allocation2] sm:$0xff]
      %v2681 = vld [vmem:[#allocation2 + $0x8] sm:$0xff]
      %v2682 = vld [vmem:[#allocation2 + $0x10] sm:$0xff]
      %v2683 = vld [vmem:[#allocation2 + $0x18] sm:$0xff]
      %v2684 = vld [vmem:[#allocation2 + $0x20] sm:$0xff]
      %v2685 = vld [vmem:[#allocation2 + $0x28] sm:$0xff]
      %v2686 = vld [vmem:[#allocation2 + $0x30] sm:$0xff]
      %v2687 = vld [vmem:[#allocation2 + $0x38] sm:$0xff]
      %v2688 = vld [vmem:[#allocation2 + $0x40] sm:$0xff]
      %v2689 = vld [vmem:[#allocation2 + $0x48] sm:$0xff]
      %v2690 = vld [vmem:[#allocation2 + $0x50] sm:$0xff]
      %v2691 = vld [vmem:[#allocation2 + $0x58] sm:$0xff]
      %v2692 = vld [vmem:[#allocation2 + $0x60] sm:$0xff]
      %v2693 = vld [vmem:[#allocation2 + $0x68] sm:$0xff]
      %v2694 = vld [vmem:[#allocation2 + $0x70] sm:$0xff]
      %v2695 = vld [vmem:[#allocation2 + $0x78] sm:$0xff]
      %v2696 = vpack.c.bf16 %v2681, %v2680
      %v2697 = vpack.c.bf16 %v2683, %v2682
      %v2698 = vpack.c.bf16 %v2685, %v2684
      %v2699 = vpack.c.bf16 %v2687, %v2686
      %v2700 = vpack.c.bf16 %v2689, %v2688
      %v2701 = vpack.c.bf16 %v2691, %v2690
      %v2702 = vpack.c.bf16 %v2693, %v2692
      %v2703 = vpack.c.bf16 %v2695, %v2694
      %v2704 = vld [vmem:[%s7] sm:$0xff]
      %v2705 = vld [vmem:[%s7 + $0x8] sm:$0xff]
      %v2706 = vld [vmem:[%s7 + $0x10] sm:$0xff]
      %v2707 = vld [vmem:[%s7 + $0x18] sm:$0xff]
      %v2708 = vld [vmem:[%s7 + $0x20] sm:$0xff]
      %v2709 = vld [vmem:[%s7 + $0x28] sm:$0xff]
      %v2710 = vld [vmem:[%s7 + $0x30] sm:$0xff]
      %v2711 = vld [vmem:[%s7 + $0x38] sm:$0xff]
      %v2712 = vld [vmem:[%s7 + $0x40] sm:$0xff]
      %v2713 = vld [vmem:[%s7 + $0x48] sm:$0xff]
      %v2714 = vld [vmem:[%s7 + $0x50] sm:$0xff]
      %v2715 = vld [vmem:[%s7 + $0x58] sm:$0xff]
      %v2716 = vld [vmem:[%s7 + $0x60] sm:$0xff]
      %v2717 = vld [vmem:[%s7 + $0x68] sm:$0xff]
      %v2718 = vld [vmem:[%s7 + $0x70] sm:$0xff]
      %v2719 = vld [vmem:[%s7 + $0x78] sm:$0xff]
      %2728 = vrot.lane.b32.xlu0 %v2696, 88
      %v2729 = vpop.permute.xlu0 %2728
      %2730 = vrot.lane.b32.xlu0 %v2697, 88
      %v2731 = vpop.permute.xlu0 %2730
      %2732 = vrot.lane.b32.xlu0 %v2698, 88
      %v2733 = vpop.permute.xlu0 %2732
      %2734 = vrot.lane.b32.xlu0 %v2699, 88
      %v2735 = vpop.permute.xlu0 %2734
      %2736 = vrot.lane.b32.xlu0 %v2700, 88
      %v2737 = vpop.permute.xlu0 %2736
      %2738 = vrot.lane.b32.xlu0 %v2701, 88
      %v2739 = vpop.permute.xlu0 %2738
      %2740 = vrot.lane.b32.xlu0 %v2702, 88
      %v2741 = vpop.permute.xlu0 %2740
      %2742 = vrot.lane.b32.xlu0 %v2703, 88
      %v2743 = vpop.permute.xlu0 %2742
      %2744 = vrot.lane.b32.xlu0 %v2696, 96
      %v2745 = vpop.permute.xlu0 %2744
      %2746 = vrot.lane.b32.xlu0 %v2697, 96
      %v2747 = vpop.permute.xlu0 %2746
      %2748 = vrot.lane.b32.xlu0 %v2698, 96
      %v2749 = vpop.permute.xlu0 %2748
      %2750 = vrot.lane.b32.xlu0 %v2699, 96
      %v2751 = vpop.permute.xlu0 %2750
      %2752 = vrot.lane.b32.xlu0 %v2700, 96
      %v2753 = vpop.permute.xlu0 %2752
      %2754 = vrot.lane.b32.xlu0 %v2701, 96
      %v2755 = vpop.permute.xlu0 %2754
      %2756 = vrot.lane.b32.xlu0 %v2702, 96
      %v2757 = vpop.permute.xlu0 %2756
      %2758 = vrot.lane.b32.xlu0 %v2703, 96
      %v2759 = vpop.permute.xlu0 %2758
      %v2761 = vsel %vm2245, %v2729, 0
      %v2764 = vsel %vm2245, %v2731, 0
      %v2767 = vsel %vm2245, %v2733, 0
      %v2770 = vsel %vm2245, %v2735, 0
      %v2773 = vsel %vm2245, %v2737, 0
      %v2776 = vsel %vm2245, %v2739, 0
      %v2779 = vsel %vm2245, %v2741, 0
      %v2782 = vsel %vm2245, %v2743, 0
      %v2785 = vsel %vm2245, %v2745, 0
      %v2788 = vsel %vm2245, %v2747, 0
      %v2791 = vsel %vm2245, %v2749, 0
      %v2794 = vsel %vm2245, %v2751, 0
      %v2797 = vsel %vm2245, %v2753, 0
      %v2800 = vsel %vm2245, %v2755, 0
      %v2803 = vsel %vm2245, %v2757, 0
      %v2806 = vsel %vm2245, %v2759, 0
      %2808 = vmatprep.subr.bf16.mxu0 0
      %2809 = vmatpush1.bf16.xpose.msra.mxu0 %v2785
      %2810 = vmatprep.subr.bf16.mxu0 0
      %2811 = vmatpush1.bf16.xpose.msra.mxu0 %v2788
      %2812 = vmatprep.subr.bf16.mxu0 0
      %2813 = vmatpush1.bf16.xpose.msra.mxu0 %v2791
      %2814 = vmatprep.subr.bf16.mxu0 0
      %2815 = vmatpush1.bf16.xpose.msra.mxu0 %v2794
      %2816 = vmatprep.subr.bf16.mxu0 0
      %2817 = vmatpush1.bf16.xpose.msra.mxu0 %v2797
      %2818 = vmatprep.subr.bf16.mxu0 0
      %2819 = vmatpush1.bf16.xpose.msra.mxu0 %v2800
      %2820 = vmatprep.subr.bf16.mxu0 0
      %2821 = vmatpush1.bf16.xpose.msra.mxu0 %v2803
      %2822 = vmatprep.subr.bf16.mxu0 0
      %2823 = vmatpush1.bf16.xpose.msra.mxu0 %v2806
      %2824 = vmatprep.subr.bf16.mxu0 0
      %2825 = vmatpush1.bf16.xpose.msra.mxu0 0
      %2826 = vmatprep.subr.bf16.mxu0 0
      %2827 = vmatpush1.bf16.xpose.msra.mxu0 0
      %2828 = vmatprep.subr.bf16.mxu0 0
      %2829 = vmatpush1.bf16.xpose.msra.mxu0 0
      %2830 = vmatprep.subr.bf16.mxu0 0
      %2831 = vmatpush1.bf16.xpose.msra.mxu0 0
      %2832 = vmatprep.subr.bf16.mxu0 0
      %2833 = vmatpush1.bf16.xpose.msra.mxu0 0
      %2834 = vmatprep.subr.bf16.mxu0 0
      %2835 = vmatpush1.bf16.xpose.msra.mxu0 0
      %2836 = vmatprep.subr.bf16.mxu0 0
      %2837 = vmatpush1.bf16.xpose.msra.mxu0 0
      %2838 = vmatprep.subr.bf16.mxu0 0
      %2839 = vmatpush1.bf16.xpose.msra.mxu0 0
      %2840 = vmatprep.mubr.bf16.mxu0 0
      %2841 = vmatmul.mubr.bf16.gmra.mrb[0].mxu0 %v2761
      %v2842 = vpop.f32.mrb[0].mxu0
      %v2843 = vadd.f32 %v2704, %v2842
      %v2844 = vpop.f32.mrb[0].mxu0
      %v2845 = vpop.f32.mrb[0].mxu0
      %v2846 = vadd.f32 %v2705, %v2845
      %v2847 = vpop.f32.mrb[0].mxu0
      %2848 = vmatprep.mubr.bf16.mxu0 0
      %2849 = vmatmul.mubr.bf16.gmra.mrb[0].mxu0 %v2764
      %v2850 = vpop.f32.mrb[0].mxu0
      %v2851 = vadd.f32 %v2706, %v2850
      %v2852 = vpop.f32.mrb[0].mxu0
      %v2853 = vpop.f32.mrb[0].mxu0
      %v2854 = vadd.f32 %v2707, %v2853
      %v2855 = vpop.f32.mrb[0].mxu0
      %2856 = vmatprep.mubr.bf16.mxu0 0
      %2857 = vmatmul.mubr.bf16.gmra.mrb[0].mxu0 %v2767
      %v2858 = vpop.f32.mrb[0].mxu0
      %v2859 = vadd.f32 %v2708, %v2858
      %v2860 = vpop.f32.mrb[0].mxu0
      %v2861 = vpop.f32.mrb[0].mxu0
      %v2862 = vadd.f32 %v2709, %v2861
      %v2863 = vpop.f32.mrb[0].mxu0
      %2864 = vmatprep.mubr.bf16.mxu0 0
      %2865 = vmatmul.mubr.bf16.gmra.mrb[0].mxu0 %v2770
      %v2866 = vpop.f32.mrb[0].mxu0
      %v2867 = vadd.f32 %v2710, %v2866
      %v2868 = vpop.f32.mrb[0].mxu0
      %v2869 = vpop.f32.mrb[0].mxu0
      %v2870 = vadd.f32 %v2711, %v2869
      %v2871 = vpop.f32.mrb[0].mxu0
      %2872 = vmatprep.mubr.bf16.mxu0 0
      %2873 = vmatmul.mubr.bf16.gmra.mrb[0].mxu0 %v2773
      %v2874 = vpop.f32.mrb[0].mxu0
      %v2875 = vadd.f32 %v2712, %v2874
      %v2876 = vpop.f32.mrb[0].mxu0
      %v2877 = vpop.f32.mrb[0].mxu0
      %v2878 = vadd.f32 %v2713, %v2877
      %v2879 = vpop.f32.mrb[0].mxu0
      %2880 = vmatprep.mubr.bf16.mxu0 0
      %2881 = vmatmul.mubr.bf16.gmra.mrb[0].mxu0 %v2776
      %v2882 = vpop.f32.mrb[0].mxu0
      %v2883 = vadd.f32 %v2714, %v2882
      %v2884 = vpop.f32.mrb[0].mxu0
      %v2885 = vpop.f32.mrb[0].mxu0
      %v2886 = vadd.f32 %v2715, %v2885
      %v2887 = vpop.f32.mrb[0].mxu0
      %2888 = vmatprep.mubr.bf16.mxu0 0
      %2889 = vmatmul.mubr.bf16.gmra.mrb[0].mxu0 %v2779
      %v2890 = vpop.f32.mrb[0].mxu0
      %v2891 = vadd.f32 %v2716, %v2890
      %v2892 = vpop.f32.mrb[0].mxu0
      %v2893 = vpop.f32.mrb[0].mxu0
      %v2894 = vadd.f32 %v2717, %v2893
      %v2895 = vpop.f32.mrb[0].mxu0
      %2896 = vmatprep.mubr.bf16.mxu0 0
      %2897 = vmatmul.mubr.bf16.gmra.mrb[0].mxu0 %v2782
      %v2898 = vpop.f32.mrb[0].mxu0
      %v2899 = vadd.f32 %v2718, %v2898
      %v2900 = vpop.f32.mrb[0].mxu0
      %v2901 = vpop.f32.mrb[0].mxu0
      %v2902 = vadd.f32 %v2719, %v2901
      %v2903 = vpop.f32.mrb[0].mxu0
      %2904 = vdwg.mxu0
      %2905 = vmax.xlane.f32.xlu0 %v2843
      %v2906 = vpop.xlane.xlu0 %2905
      %2907 = vmax.xlane.f32.xlu0 %v2846
      %v2908 = vpop.xlane.xlu0 %2907
      %2909 = vmax.xlane.f32.xlu0 %v2851
      %v2910 = vpop.xlane.xlu0 %2909
      %2911 = vmax.xlane.f32.xlu0 %v2854
      %v2912 = vpop.xlane.xlu0 %2911
      %2913 = vmax.xlane.f32.xlu0 %v2859
      %v2914 = vpop.xlane.xlu0 %2913
      %2915 = vmax.xlane.f32.xlu0 %v2862
      %v2916 = vpop.xlane.xlu0 %2915
      %2917 = vmax.xlane.f32.xlu0 %v2867
      %v2918 = vpop.xlane.xlu0 %2917
      %2919 = vmax.xlane.f32.xlu0 %v2870
      %v2920 = vpop.xlane.xlu0 %2919
      %2921 = vmax.xlane.f32.xlu0 %v2875
      %v2922 = vpop.xlane.xlu0 %2921
      %2923 = vmax.xlane.f32.xlu0 %v2878
      %v2924 = vpop.xlane.xlu0 %2923
      %2925 = vmax.xlane.f32.xlu0 %v2883
      %v2926 = vpop.xlane.xlu0 %2925
      %2927 = vmax.xlane.f32.xlu0 %v2886
      %v2928 = vpop.xlane.xlu0 %2927
      %2929 = vmax.xlane.f32.xlu0 %v2891
      %v2930 = vpop.xlane.xlu0 %2929
      %2931 = vmax.xlane.f32.xlu0 %v2894
      %v2932 = vpop.xlane.xlu0 %2931
      %2933 = vmax.xlane.f32.xlu0 %v2899
      %v2934 = vpop.xlane.xlu0 %2933
      %2935 = vmax.xlane.f32.xlu0 %v2902
      %v2936 = vpop.xlane.xlu0 %2935
      %v2937 = vsub.f32 %v2843, %v2906
      %v2938 = vsub.f32 %v2846, %v2908
      %v2939 = vsub.f32 %v2851, %v2910
      %v2940 = vsub.f32 %v2854, %v2912
      %v2941 = vsub.f32 %v2859, %v2914
      %v2942 = vsub.f32 %v2862, %v2916
      %v2943 = vsub.f32 %v2867, %v2918
      %v2944 = vsub.f32 %v2870, %v2920
      %v2945 = vsub.f32 %v2875, %v2922
      %v2946 = vsub.f32 %v2878, %v2924
      %v2947 = vsub.f32 %v2883, %v2926
      %v2948 = vsub.f32 %v2886, %v2928
      %v2949 = vsub.f32 %v2891, %v2930
      %v2950 = vsub.f32 %v2894, %v2932
      %v2951 = vsub.f32 %v2899, %v2934
      %v2952 = vsub.f32 %v2902, %v2936
      %v2953 = vmul.f32 %v2937, 1.442695
      %v2954 = vpow.pop %v2953
      %v2955 = vmul.f32 %v2938, 1.442695
      %v2956 = vpow.pop %v2955
      %v2957 = vmul.f32 %v2939, 1.442695
      %v2958 = vpow.pop %v2957
      %v2959 = vmul.f32 %v2940, 1.442695
      %v2960 = vpow.pop %v2959
      %v2961 = vmul.f32 %v2941, 1.442695
      %v2962 = vpow.pop %v2961
      %v2963 = vmul.f32 %v2942, 1.442695
      %v2964 = vpow.pop %v2963
      %v2965 = vmul.f32 %v2943, 1.442695
      %v2966 = vpow.pop %v2965
      %v2967 = vmul.f32 %v2944, 1.442695
      %v2968 = vpow.pop %v2967
      %v2969 = vmul.f32 %v2945, 1.442695
      %v2970 = vpow.pop %v2969
      %v2971 = vmul.f32 %v2946, 1.442695
      %v2972 = vpow.pop %v2971
      %v2973 = vmul.f32 %v2947, 1.442695
      %v2974 = vpow.pop %v2973
      %v2975 = vmul.f32 %v2948, 1.442695
      %v2976 = vpow.pop %v2975
      %v2977 = vmul.f32 %v2949, 1.442695
      %v2978 = vpow.pop %v2977
      %v2979 = vmul.f32 %v2950, 1.442695
      %v2980 = vpow.pop %v2979
      %v2981 = vmul.f32 %v2951, 1.442695
      %v2982 = vpow.pop %v2981
      %v2983 = vmul.f32 %v2952, 1.442695
      %v2984 = vpow.pop %v2983
      %2985 = vadd.xlane.f32.xlu0 %v2954
      %v2986 = vpop.xlane.xlu0 %2985
      %2987 = vadd.xlane.f32.xlu0 %v2956
      %v2988 = vpop.xlane.xlu0 %2987
      %2989 = vadd.xlane.f32.xlu0 %v2958
      %v2990 = vpop.xlane.xlu0 %2989
      %2991 = vadd.xlane.f32.xlu0 %v2960
      %v2992 = vpop.xlane.xlu0 %2991
      %2993 = vadd.xlane.f32.xlu0 %v2962
      %v2994 = vpop.xlane.xlu0 %2993
      %2995 = vadd.xlane.f32.xlu0 %v2964
      %v2996 = vpop.xlane.xlu0 %2995
      %2997 = vadd.xlane.f32.xlu0 %v2966
      %v2998 = vpop.xlane.xlu0 %2997
      %2999 = vadd.xlane.f32.xlu0 %v2968
      %v3000 = vpop.xlane.xlu0 %2999
      %3001 = vadd.xlane.f32.xlu0 %v2970
      %v3002 = vpop.xlane.xlu0 %3001
      %3003 = vadd.xlane.f32.xlu0 %v2972
      %v3004 = vpop.xlane.xlu0 %3003
      %3005 = vadd.xlane.f32.xlu0 %v2974
      %v3006 = vpop.xlane.xlu0 %3005
      %3007 = vadd.xlane.f32.xlu0 %v2976
      %v3008 = vpop.xlane.xlu0 %3007
      %3009 = vadd.xlane.f32.xlu0 %v2978
      %v3010 = vpop.xlane.xlu0 %3009
      %3011 = vadd.xlane.f32.xlu0 %v2980
      %v3012 = vpop.xlane.xlu0 %3011
      %3013 = vadd.xlane.f32.xlu0 %v2982
      %v3014 = vpop.xlane.xlu0 %3013
      %3015 = vadd.xlane.f32.xlu0 %v2984
      %v3016 = vpop.xlane.xlu0 %3015
      %v3017 = vrcp.pop %v2986
      %v3018 = vrcp.pop %v2988
      %v3019 = vrcp.pop %v2990
      %v3020 = vrcp.pop %v2992
      %v3021 = vrcp.pop %v2994
      %v3022 = vrcp.pop %v2996
      %v3023 = vrcp.pop %v2998
      %v3024 = vrcp.pop %v3000
      %v3025 = vrcp.pop %v3002
      %v3026 = vrcp.pop %v3004
      %v3027 = vrcp.pop %v3006
      %v3028 = vrcp.pop %v3008
      %v3029 = vrcp.pop %v3010
      %v3030 = vrcp.pop %v3012
      %v3031 = vrcp.pop %v3014
      %v3032 = vrcp.pop %v3016
      %v3033 = vmul.f32 %v2954, %v3017
      %v3034 = vmul.f32 %v2956, %v3018
      %v3035 = vmul.f32 %v2958, %v3019
      %v3036 = vmul.f32 %v2960, %v3020
      %v3037 = vmul.f32 %v2962, %v3021
      %v3038 = vmul.f32 %v2964, %v3022
      %v3039 = vmul.f32 %v2966, %v3023
      %v3040 = vmul.f32 %v2968, %v3024
      %v3041 = vmul.f32 %v2970, %v3025
      %v3042 = vmul.f32 %v2972, %v3026
      %v3043 = vmul.f32 %v2974, %v3027
      %v3044 = vmul.f32 %v2976, %v3028
      %v3045 = vmul.f32 %v2978, %v3029
      %v3046 = vmul.f32 %v2980, %v3030
      %v3047 = vmul.f32 %v2982, %v3031
      %v3048 = vmul.f32 %v2984, %v3032
      %v3049 = vpack.c.bf16 %v3034, %v3033
      %v3050 = vpack.c.bf16 %v3036, %v3035
      %v3051 = vpack.c.bf16 %v3038, %v3037
      %v3052 = vpack.c.bf16 %v3040, %v3039
      %v3053 = vpack.c.bf16 %v3042, %v3041
      %v3054 = vpack.c.bf16 %v3044, %v3043
      %v3055 = vpack.c.bf16 %v3046, %v3045
      %v3056 = vpack.c.bf16 %v3048, %v3047
      %3057 = vrot.lane.b32.xlu0 %v2696, 80
      %v3058 = vpop.permute.xlu0 %3057
      %3059 = vrot.lane.b32.xlu0 %v2697, 80
      %v3060 = vpop.permute.xlu0 %3059
      %3061 = vrot.lane.b32.xlu0 %v2698, 80
      %v3062 = vpop.permute.xlu0 %3061
      %3063 = vrot.lane.b32.xlu0 %v2699, 80
      %v3064 = vpop.permute.xlu0 %3063
      %3065 = vrot.lane.b32.xlu0 %v2700, 80
      %v3066 = vpop.permute.xlu0 %3065
      %3067 = vrot.lane.b32.xlu0 %v2701, 80
      %v3068 = vpop.permute.xlu0 %3067
      %3069 = vrot.lane.b32.xlu0 %v2702, 80
      %v3070 = vpop.permute.xlu0 %3069
      %3071 = vrot.lane.b32.xlu0 %v2703, 80
      %v3072 = vpop.permute.xlu0 %3071
      %3081 = vmatprep.subr.bf16.mxu0 0
      %3082 = vmatpush1.bf16.msra.mxu0 %v3058
      %3083 = vmatprep.subr.bf16.mxu0 0
      %3084 = vmatpush1.bf16.msra.mxu0 %v3060
      %3085 = vmatprep.subr.bf16.mxu0 0
      %3086 = vmatpush1.bf16.msra.mxu0 %v3062
      %3087 = vmatprep.subr.bf16.mxu0 0
      %3088 = vmatpush1.bf16.msra.mxu0 %v3064
      %3089 = vmatprep.subr.bf16.mxu0 0
      %3090 = vmatpush1.bf16.msra.mxu0 %v3066
      %3091 = vmatprep.subr.bf16.mxu0 0
      %3092 = vmatpush1.bf16.msra.mxu0 %v3068
      %3093 = vmatprep.subr.bf16.mxu0 0
      %3094 = vmatpush1.bf16.msra.mxu0 %v3070
      %3095 = vmatprep.subr.bf16.mxu0 0
      %3096 = vmatpush1.bf16.msra.mxu0 %v3072
      %3097 = vmatprep.subr.bf16.mxu0 0
      %3098 = vmatpush1.bf16.msra.mxu0 0
      %3099 = vmatprep.subr.bf16.mxu0 0
      %3100 = vmatpush1.bf16.msra.mxu0 0
      %3101 = vmatprep.subr.bf16.mxu0 0
      %3102 = vmatpush1.bf16.msra.mxu0 0
      %3103 = vmatprep.subr.bf16.mxu0 0
      %3104 = vmatpush1.bf16.msra.mxu0 0
      %3105 = vmatprep.subr.bf16.mxu0 0
      %3106 = vmatpush1.bf16.msra.mxu0 0
      %3107 = vmatprep.subr.bf16.mxu0 0
      %3108 = vmatpush1.bf16.msra.mxu0 0
      %3109 = vmatprep.subr.bf16.mxu0 0
      %3110 = vmatpush1.bf16.msra.mxu0 0
      %3111 = vmatprep.subr.bf16.mxu0 0
      %3112 = vmatpush1.bf16.msra.mxu0 0
      %3113 = vmatprep.mubr.bf16.mxu0 0
      %3114 = vmatmul.mubr.bf16.gmra.mrb[0].mxu0 %v3049
      %v3115 = vpop.f32.mrb[0].mxu0
      %v3116 = vadd.f32 0.0, %v3115
      %v3117 = vpop.f32.mrb[0].mxu0
      %v3118 = vpop.f32.mrb[0].mxu0
      %v3119 = vadd.f32 0.0, %v3118
      %v3120 = vpop.f32.mrb[0].mxu0
      %3121 = vmatprep.mubr.bf16.mxu0 0
      %3122 = vmatmul.mubr.bf16.gmra.mrb[0].mxu0 %v3050
      %v3123 = vpop.f32.mrb[0].mxu0
      %v3124 = vadd.f32 0.0, %v3123
      %v3125 = vpop.f32.mrb[0].mxu0
      %v3126 = vpop.f32.mrb[0].mxu0
      %v3127 = vadd.f32 0.0, %v3126
      %v3128 = vpop.f32.mrb[0].mxu0
      %3129 = vmatprep.mubr.bf16.mxu0 0
      %3130 = vmatmul.mubr.bf16.gmra.mrb[0].mxu0 %v3051
      %v3131 = vpop.f32.mrb[0].mxu0
      %v3132 = vadd.f32 0.0, %v3131
      %v3133 = vpop.f32.mrb[0].mxu0
      %v3134 = vpop.f32.mrb[0].mxu0
      %v3135 = vadd.f32 0.0, %v3134
      %v3136 = vpop.f32.mrb[0].mxu0
      %3137 = vmatprep.mubr.bf16.mxu0 0
      %3138 = vmatmul.mubr.bf16.gmra.mrb[0].mxu0 %v3052
      %v3139 = vpop.f32.mrb[0].mxu0
      %v3140 = vadd.f32 0.0, %v3139
      %v3141 = vpop.f32.mrb[0].mxu0
      %v3142 = vpop.f32.mrb[0].mxu0
      %v3143 = vadd.f32 0.0, %v3142
      %v3144 = vpop.f32.mrb[0].mxu0
      %3145 = vmatprep.mubr.bf16.mxu0 0
      %3146 = vmatmul.mubr.bf16.gmra.mrb[0].mxu0 %v3053
      %v3147 = vpop.f32.mrb[0].mxu0
      %v3148 = vadd.f32 0.0, %v3147
      %v3149 = vpop.f32.mrb[0].mxu0
      %v3150 = vpop.f32.mrb[0].mxu0
      %v3151 = vadd.f32 0.0, %v3150
      %v3152 = vpop.f32.mrb[0].mxu0
      %3153 = vmatprep.mubr.bf16.mxu0 0
      %3154 = vmatmul.mubr.bf16.gmra.mrb[0].mxu0 %v3054
      %v3155 = vpop.f32.mrb[0].mxu0
      %v3156 = vadd.f32 0.0, %v3155
      %v3157 = vpop.f32.mrb[0].mxu0
      %v3158 = vpop.f32.mrb[0].mxu0
      %v3159 = vadd.f32 0.0, %v3158
      %v3160 = vpop.f32.mrb[0].mxu0
      %3161 = vmatprep.mubr.bf16.mxu0 0
      %3162 = vmatmul.mubr.bf16.gmra.mrb[0].mxu0 %v3055
      %v3163 = vpop.f32.mrb[0].mxu0
      %v3164 = vadd.f32 0.0, %v3163
      %v3165 = vpop.f32.mrb[0].mxu0
      %v3166 = vpop.f32.mrb[0].mxu0
      %v3167 = vadd.f32 0.0, %v3166
      %v3168 = vpop.f32.mrb[0].mxu0
      %3169 = vmatprep.mubr.bf16.mxu0 0
      %3170 = vmatmul.mubr.bf16.gmra.mrb[0].mxu0 %v3056
      %v3171 = vpop.f32.mrb[0].mxu0
      %v3172 = vadd.f32 0.0, %v3171
      %v3173 = vpop.f32.mrb[0].mxu0
      %v3174 = vpop.f32.mrb[0].mxu0
      %v3175 = vadd.f32 0.0, %v3174
      %v3176 = vpop.f32.mrb[0].mxu0
      %3177 = vdwg.mxu0
      %3194 = vrot.lane.b32.xlu0 %v3116, 16
      %v3195 = vpop.permute.xlu0 %3194
      %3196 = vrot.lane.b32.xlu0 %v3119, 16
      %v3197 = vpop.permute.xlu0 %3196
      %3198 = vrot.lane.b32.xlu0 %v3124, 16
      %v3199 = vpop.permute.xlu0 %3198
      %3200 = vrot.lane.b32.xlu0 %v3127, 16
      %v3201 = vpop.permute.xlu0 %3200
      %3202 = vrot.lane.b32.xlu0 %v3132, 16
      %v3203 = vpop.permute.xlu0 %3202
      %3204 = vrot.lane.b32.xlu0 %v3135, 16
      %v3205 = vpop.permute.xlu0 %3204
      %3206 = vrot.lane.b32.xlu0 %v3140, 16
      %v3207 = vpop.permute.xlu0 %3206
      %3208 = vrot.lane.b32.xlu0 %v3143, 16
      %v3209 = vpop.permute.xlu0 %3208
      %3210 = vrot.lane.b32.xlu0 %v3148, 16
      %v3211 = vpop.permute.xlu0 %3210
      %3212 = vrot.lane.b32.xlu0 %v3151, 16
      %v3213 = vpop.permute.xlu0 %3212
      %3214 = vrot.lane.b32.xlu0 %v3156, 16
      %v3215 = vpop.permute.xlu0 %3214
      %3216 = vrot.lane.b32.xlu0 %v3159, 16
      %v3217 = vpop.permute.xlu0 %3216
      %3218 = vrot.lane.b32.xlu0 %v3164, 16
      %v3219 = vpop.permute.xlu0 %3218
      %3220 = vrot.lane.b32.xlu0 %v3167, 16
      %v3221 = vpop.permute.xlu0 %3220
      %3222 = vrot.lane.b32.xlu0 %v3172, 16
      %v3223 = vpop.permute.xlu0 %3222
      %3224 = vrot.lane.b32.xlu0 %v3175, 16
      %v3225 = vpop.permute.xlu0 %3224
      %vm3242 = vcmask 261248
      %3243 = vst.msk [vmem:[#allocation3] sm:$0xff] %vm3242, %v3195
      %3244 = vst.msk [vmem:[#allocation3 + $0x8] sm:$0xff] %vm3242, %v3197
      %3245 = vst.msk [vmem:[#allocation3 + $0x10] sm:$0xff] %vm3242, %v3199
      %3246 = vst.msk [vmem:[#allocation3 + $0x18] sm:$0xff] %vm3242, %v3201
      %3247 = vst.msk [vmem:[#allocation3 + $0x20] sm:$0xff] %vm3242, %v3203
      %3248 = vst.msk [vmem:[#allocation3 + $0x28] sm:$0xff] %vm3242, %v3205
      %3249 = vst.msk [vmem:[#allocation3 + $0x30] sm:$0xff] %vm3242, %v3207
      %3250 = vst.msk [vmem:[#allocation3 + $0x38] sm:$0xff] %vm3242, %v3209
      %3251 = vst.msk [vmem:[#allocation3 + $0x40] sm:$0xff] %vm3242, %v3211
      %3252 = vst.msk [vmem:[#allocation3 + $0x48] sm:$0xff] %vm3242, %v3213
      %3253 = vst.msk [vmem:[#allocation3 + $0x50] sm:$0xff] %vm3242, %v3215
      %3254 = vst.msk [vmem:[#allocation3 + $0x58] sm:$0xff] %vm3242, %v3217
      %3255 = vst.msk [vmem:[#allocation3 + $0x60] sm:$0xff] %vm3242, %v3219
      %3256 = vst.msk [vmem:[#allocation3 + $0x68] sm:$0xff] %vm3242, %v3221
      %3257 = vst.msk [vmem:[#allocation3 + $0x70] sm:$0xff] %vm3242, %v3223
      %3258 = vst.msk [vmem:[#allocation3 + $0x78] sm:$0xff] %vm3242, %v3225
      %v3259 = vld [vmem:[#allocation2] sm:$0xff]
      %v3260 = vld [vmem:[#allocation2 + $0x8] sm:$0xff]
      %v3261 = vld [vmem:[#allocation2 + $0x10] sm:$0xff]
      %v3262 = vld [vmem:[#allocation2 + $0x18] sm:$0xff]
      %v3263 = vld [vmem:[#allocation2 + $0x20] sm:$0xff]
      %v3264 = vld [vmem:[#allocation2 + $0x28] sm:$0xff]
      %v3265 = vld [vmem:[#allocation2 + $0x30] sm:$0xff]
      %v3266 = vld [vmem:[#allocation2 + $0x38] sm:$0xff]
      %v3267 = vld [vmem:[#allocation2 + $0x40] sm:$0xff]
      %v3268 = vld [vmem:[#allocation2 + $0x48] sm:$0xff]
      %v3269 = vld [vmem:[#allocation2 + $0x50] sm:$0xff]
      %v3270 = vld [vmem:[#allocation2 + $0x58] sm:$0xff]
      %v3271 = vld [vmem:[#allocation2 + $0x60] sm:$0xff]
      %v3272 = vld [vmem:[#allocation2 + $0x68] sm:$0xff]
      %v3273 = vld [vmem:[#allocation2 + $0x70] sm:$0xff]
      %v3274 = vld [vmem:[#allocation2 + $0x78] sm:$0xff]
      %v3275 = vpack.c.bf16 %v3260, %v3259
      %v3276 = vpack.c.bf16 %v3262, %v3261
      %v3277 = vpack.c.bf16 %v3264, %v3263
      %v3278 = vpack.c.bf16 %v3266, %v3265
      %v3279 = vpack.c.bf16 %v3268, %v3267
      %v3280 = vpack.c.bf16 %v3270, %v3269
      %v3281 = vpack.c.bf16 %v3272, %v3271
      %v3282 = vpack.c.bf16 %v3274, %v3273
      %v3283 = vld [vmem:[%s7] sm:$0xff]
      %v3284 = vld [vmem:[%s7 + $0x8] sm:$0xff]
      %v3285 = vld [vmem:[%s7 + $0x10] sm:$0xff]
      %v3286 = vld [vmem:[%s7 + $0x18] sm:$0xff]
      %v3287 = vld [vmem:[%s7 + $0x20] sm:$0xff]
      %v3288 = vld [vmem:[%s7 + $0x28] sm:$0xff]
      %v3289 = vld [vmem:[%s7 + $0x30] sm:$0xff]
      %v3290 = vld [vmem:[%s7 + $0x38] sm:$0xff]
      %v3291 = vld [vmem:[%s7 + $0x40] sm:$0xff]
      %v3292 = vld [vmem:[%s7 + $0x48] sm:$0xff]
      %v3293 = vld [vmem:[%s7 + $0x50] sm:$0xff]
      %v3294 = vld [vmem:[%s7 + $0x58] sm:$0xff]
      %v3295 = vld [vmem:[%s7 + $0x60] sm:$0xff]
      %v3296 = vld [vmem:[%s7 + $0x68] sm:$0xff]
      %v3297 = vld [vmem:[%s7 + $0x70] sm:$0xff]
      %v3298 = vld [vmem:[%s7 + $0x78] sm:$0xff]
      %3307 = vrot.lane.b32.xlu0 %v3275, 56
      %v3308 = vpop.permute.xlu0 %3307
      %3309 = vrot.lane.b32.xlu0 %v3276, 56
      %v3310 = vpop.permute.xlu0 %3309
      %3311 = vrot.lane.b32.xlu0 %v3277, 56
      %v3312 = vpop.permute.xlu0 %3311
      %3313 = vrot.lane.b32.xlu0 %v3278, 56
      %v3314 = vpop.permute.xlu0 %3313
      %3315 = vrot.lane.b32.xlu0 %v3279, 56
      %v3316 = vpop.permute.xlu0 %3315
      %3317 = vrot.lane.b32.xlu0 %v3280, 56
      %v3318 = vpop.permute.xlu0 %3317
      %3319 = vrot.lane.b32.xlu0 %v3281, 56
      %v3320 = vpop.permute.xlu0 %3319
      %3321 = vrot.lane.b32.xlu0 %v3282, 56
      %v3322 = vpop.permute.xlu0 %3321
      %3323 = vrot.lane.b32.xlu0 %v3275, 64
      %v3324 = vpop.permute.xlu0 %3323
      %3325 = vrot.lane.b32.xlu0 %v3276, 64
      %v3326 = vpop.permute.xlu0 %3325
      %3327 = vrot.lane.b32.xlu0 %v3277, 64
      %v3328 = vpop.permute.xlu0 %3327
      %3329 = vrot.lane.b32.xlu0 %v3278, 64
      %v3330 = vpop.permute.xlu0 %3329
      %3331 = vrot.lane.b32.xlu0 %v3279, 64
      %v3332 = vpop.permute.xlu0 %3331
      %3333 = vrot.lane.b32.xlu0 %v3280, 64
      %v3334 = vpop.permute.xlu0 %3333
      %3335 = vrot.lane.b32.xlu0 %v3281, 64
      %v3336 = vpop.permute.xlu0 %3335
      %3337 = vrot.lane.b32.xlu0 %v3282, 64
      %v3338 = vpop.permute.xlu0 %3337
      %v3340 = vsel %vm2245, %v3308, 0
      %v3343 = vsel %vm2245, %v3310, 0
      %v3346 = vsel %vm2245, %v3312, 0
      %v3349 = vsel %vm2245, %v3314, 0
      %v3352 = vsel %vm2245, %v3316, 0
      %v3355 = vsel %vm2245, %v3318, 0
      %v3358 = vsel %vm2245, %v3320, 0
      %v3361 = vsel %vm2245, %v3322, 0
      %v3364 = vsel %vm2245, %v3324, 0
      %v3367 = vsel %vm2245, %v3326, 0
      %v3370 = vsel %vm2245, %v3328, 0
      %v3373 = vsel %vm2245, %v3330, 0
      %v3376 = vsel %vm2245, %v3332, 0
      %v3379 = vsel %vm2245, %v3334, 0
      %v3382 = vsel %vm2245, %v3336, 0
      %v3385 = vsel %vm2245, %v3338, 0
      %3387 = vmatprep.subr.bf16.mxu0 0
      %3388 = vmatpush1.bf16.xpose.msra.mxu0 %v3364
      %3389 = vmatprep.subr.bf16.mxu0 0
      %3390 = vmatpush1.bf16.xpose.msra.mxu0 %v3367
      %3391 = vmatprep.subr.bf16.mxu0 0
      %3392 = vmatpush1.bf16.xpose.msra.mxu0 %v3370
      %3393 = vmatprep.subr.bf16.mxu0 0
      %3394 = vmatpush1.bf16.xpose.msra.mxu0 %v3373
      %3395 = vmatprep.subr.bf16.mxu0 0
      %3396 = vmatpush1.bf16.xpose.msra.mxu0 %v3376
      %3397 = vmatprep.subr.bf16.mxu0 0
      %3398 = vmatpush1.bf16.xpose.msra.mxu0 %v3379
      %3399 = vmatprep.subr.bf16.mxu0 0
      %3400 = vmatpush1.bf16.xpose.msra.mxu0 %v3382
      %3401 = vmatprep.subr.bf16.mxu0 0
      %3402 = vmatpush1.bf16.xpose.msra.mxu0 %v3385
      %3403 = vmatprep.subr.bf16.mxu0 0
      %3404 = vmatpush1.bf16.xpose.msra.mxu0 0
      %3405 = vmatprep.subr.bf16.mxu0 0
      %3406 = vmatpush1.bf16.xpose.msra.mxu0 0
      %3407 = vmatprep.subr.bf16.mxu0 0
      %3408 = vmatpush1.bf16.xpose.msra.mxu0 0
      %3409 = vmatprep.subr.bf16.mxu0 0
      %3410 = vmatpush1.bf16.xpose.msra.mxu0 0
      %3411 = vmatprep.subr.bf16.mxu0 0
      %3412 = vmatpush1.bf16.xpose.msra.mxu0 0
      %3413 = vmatprep.subr.bf16.mxu0 0
      %3414 = vmatpush1.bf16.xpose.msra.mxu0 0
      %3415 = vmatprep.subr.bf16.mxu0 0
      %3416 = vmatpush1.bf16.xpose.msra.mxu0 0
      %3417 = vmatprep.subr.bf16.mxu0 0
      %3418 = vmatpush1.bf16.xpose.msra.mxu0 0
      %3419 = vmatprep.mubr.bf16.mxu0 0
      %3420 = vmatmul.mubr.bf16.gmra.mrb[0].mxu0 %v3340
      %v3421 = vpop.f32.mrb[0].mxu0
      %v3422 = vadd.f32 %v3283, %v3421
      %v3423 = vpop.f32.mrb[0].mxu0
      %v3424 = vpop.f32.mrb[0].mxu0
      %v3425 = vadd.f32 %v3284, %v3424
      %v3426 = vpop.f32.mrb[0].mxu0
      %3427 = vmatprep.mubr.bf16.mxu0 0
      %3428 = vmatmul.mubr.bf16.gmra.mrb[0].mxu0 %v3343
      %v3429 = vpop.f32.mrb[0].mxu0
      %v3430 = vadd.f32 %v3285, %v3429
      %v3431 = vpop.f32.mrb[0].mxu0
      %v3432 = vpop.f32.mrb[0].mxu0
      %v3433 = vadd.f32 %v3286, %v3432
      %v3434 = vpop.f32.mrb[0].mxu0
      %3435 = vmatprep.mubr.bf16.mxu0 0
      %3436 = vmatmul.mubr.bf16.gmra.mrb[0].mxu0 %v3346
      %v3437 = vpop.f32.mrb[0].mxu0
      %v3438 = vadd.f32 %v3287, %v3437
      %v3439 = vpop.f32.mrb[0].mxu0
      %v3440 = vpop.f32.mrb[0].mxu0
      %v3441 = vadd.f32 %v3288, %v3440
      %v3442 = vpop.f32.mrb[0].mxu0
      %3443 = vmatprep.mubr.bf16.mxu0 0
      %3444 = vmatmul.mubr.bf16.gmra.mrb[0].mxu0 %v3349
      %v3445 = vpop.f32.mrb[0].mxu0
      %v3446 = vadd.f32 %v3289, %v3445
      %v3447 = vpop.f32.mrb[0].mxu0
      %v3448 = vpop.f32.mrb[0].mxu0
      %v3449 = vadd.f32 %v3290, %v3448
      %v3450 = vpop.f32.mrb[0].mxu0
      %3451 = vmatprep.mubr.bf16.mxu0 0
      %3452 = vmatmul.mubr.bf16.gmra.mrb[0].mxu0 %v3352
      %v3453 = vpop.f32.mrb[0].mxu0
      %v3454 = vadd.f32 %v3291, %v3453
      %v3455 = vpop.f32.mrb[0].mxu0
      %v3456 = vpop.f32.mrb[0].mxu0
      %v3457 = vadd.f32 %v3292, %v3456
      %v3458 = vpop.f32.mrb[0].mxu0
      %3459 = vmatprep.mubr.bf16.mxu0 0
      %3460 = vmatmul.mubr.bf16.gmra.mrb[0].mxu0 %v3355
      %v3461 = vpop.f32.mrb[0].mxu0
      %v3462 = vadd.f32 %v3293, %v3461
      %v3463 = vpop.f32.mrb[0].mxu0
      %v3464 = vpop.f32.mrb[0].mxu0
      %v3465 = vadd.f32 %v3294, %v3464
      %v3466 = vpop.f32.mrb[0].mxu0
      %3467 = vmatprep.mubr.bf16.mxu0 0
      %3468 = vmatmul.mubr.bf16.gmra.mrb[0].mxu0 %v3358
      %v3469 = vpop.f32.mrb[0].mxu0
      %v3470 = vadd.f32 %v3295, %v3469
      %v3471 = vpop.f32.mrb[0].mxu0
      %v3472 = vpop.f32.mrb[0].mxu0
      %v3473 = vadd.f32 %v3296, %v3472
      %v3474 = vpop.f32.mrb[0].mxu0
      %3475 = vmatprep.mubr.bf16.mxu0 0
      %3476 = vmatmul.mubr.bf16.gmra.mrb[0].mxu0 %v3361
      %v3477 = vpop.f32.mrb[0].mxu0
      %v3478 = vadd.f32 %v3297, %v3477
      %v3479 = vpop.f32.mrb[0].mxu0
      %v3480 = vpop.f32.mrb[0].mxu0
      %v3481 = vadd.f32 %v3298, %v3480
      %v3482 = vpop.f32.mrb[0].mxu0
      %3483 = vdwg.mxu0
      %3484 = vmax.xlane.f32.xlu0 %v3422
      %v3485 = vpop.xlane.xlu0 %3484
      %3486 = vmax.xlane.f32.xlu0 %v3425
      %v3487 = vpop.xlane.xlu0 %3486
      %3488 = vmax.xlane.f32.xlu0 %v3430
      %v3489 = vpop.xlane.xlu0 %3488
      %3490 = vmax.xlane.f32.xlu0 %v3433
      %v3491 = vpop.xlane.xlu0 %3490
      %3492 = vmax.xlane.f32.xlu0 %v3438
      %v3493 = vpop.xlane.xlu0 %3492
      %3494 = vmax.xlane.f32.xlu0 %v3441
      %v3495 = vpop.xlane.xlu0 %3494
      %3496 = vmax.xlane.f32.xlu0 %v3446
      %v3497 = vpop.xlane.xlu0 %3496
      %3498 = vmax.xlane.f32.xlu0 %v3449
      %v3499 = vpop.xlane.xlu0 %3498
      %3500 = vmax.xlane.f32.xlu0 %v3454
      %v3501 = vpop.xlane.xlu0 %3500
      %3502 = vmax.xlane.f32.xlu0 %v3457
      %v3503 = vpop.xlane.xlu0 %3502
      %3504 = vmax.xlane.f32.xlu0 %v3462
      %v3505 = vpop.xlane.xlu0 %3504
      %3506 = vmax.xlane.f32.xlu0 %v3465
      %v3507 = vpop.xlane.xlu0 %3506
      %3508 = vmax.xlane.f32.xlu0 %v3470
      %v3509 = vpop.xlane.xlu0 %3508
      %3510 = vmax.xlane.f32.xlu0 %v3473
      %v3511 = vpop.xlane.xlu0 %3510
      %3512 = vmax.xlane.f32.xlu0 %v3478
      %v3513 = vpop.xlane.xlu0 %3512
      %3514 = vmax.xlane.f32.xlu0 %v3481
      %v3515 = vpop.xlane.xlu0 %3514
      %v3516 = vsub.f32 %v3422, %v3485
      %v3517 = vsub.f32 %v3425, %v3487
      %v3518 = vsub.f32 %v3430, %v3489
      %v3519 = vsub.f32 %v3433, %v3491
      %v3520 = vsub.f32 %v3438, %v3493
      %v3521 = vsub.f32 %v3441, %v3495
      %v3522 = vsub.f32 %v3446, %v3497
      %v3523 = vsub.f32 %v3449, %v3499
      %v3524 = vsub.f32 %v3454, %v3501
      %v3525 = vsub.f32 %v3457, %v3503
      %v3526 = vsub.f32 %v3462, %v3505
      %v3527 = vsub.f32 %v3465, %v3507
      %v3528 = vsub.f32 %v3470, %v3509
      %v3529 = vsub.f32 %v3473, %v3511
      %v3530 = vsub.f32 %v3478, %v3513
      %v3531 = vsub.f32 %v3481, %v3515
      %v3532 = vmul.f32 %v3516, 1.442695
      %v3533 = vpow.pop %v3532
      %v3534 = vmul.f32 %v3517, 1.442695
      %v3535 = vpow.pop %v3534
      %v3536 = vmul.f32 %v3518, 1.442695
      %v3537 = vpow.pop %v3536
      %v3538 = vmul.f32 %v3519, 1.442695
      %v3539 = vpow.pop %v3538
      %v3540 = vmul.f32 %v3520, 1.442695
      %v3541 = vpow.pop %v3540
      %v3542 = vmul.f32 %v3521, 1.442695
      %v3543 = vpow.pop %v3542
      %v3544 = vmul.f32 %v3522, 1.442695
      %v3545 = vpow.pop %v3544
      %v3546 = vmul.f32 %v3523, 1.442695
      %v3547 = vpow.pop %v3546
      %v3548 = vmul.f32 %v3524, 1.442695
      %v3549 = vpow.pop %v3548
      %v3550 = vmul.f32 %v3525, 1.442695
      %v3551 = vpow.pop %v3550
      %v3552 = vmul.f32 %v3526, 1.442695
      %v3553 = vpow.pop %v3552
      %v3554 = vmul.f32 %v3527, 1.442695
      %v3555 = vpow.pop %v3554
      %v3556 = vmul.f32 %v3528, 1.442695
      %v3557 = vpow.pop %v3556
      %v3558 = vmul.f32 %v3529, 1.442695
      %v3559 = vpow.pop %v3558
      %v3560 = vmul.f32 %v3530, 1.442695
      %v3561 = vpow.pop %v3560
      %v3562 = vmul.f32 %v3531, 1.442695
      %v3563 = vpow.pop %v3562
      %3564 = vadd.xlane.f32.xlu0 %v3533
      %v3565 = vpop.xlane.xlu0 %3564
      %3566 = vadd.xlane.f32.xlu0 %v3535
      %v3567 = vpop.xlane.xlu0 %3566
      %3568 = vadd.xlane.f32.xlu0 %v3537
      %v3569 = vpop.xlane.xlu0 %3568
      %3570 = vadd.xlane.f32.xlu0 %v3539
      %v3571 = vpop.xlane.xlu0 %3570
      %3572 = vadd.xlane.f32.xlu0 %v3541
      %v3573 = vpop.xlane.xlu0 %3572
      %3574 = vadd.xlane.f32.xlu0 %v3543
      %v3575 = vpop.xlane.xlu0 %3574
      %3576 = vadd.xlane.f32.xlu0 %v3545
      %v3577 = vpop.xlane.xlu0 %3576
      %3578 = vadd.xlane.f32.xlu0 %v3547
      %v3579 = vpop.xlane.xlu0 %3578
      %3580 = vadd.xlane.f32.xlu0 %v3549
      %v3581 = vpop.xlane.xlu0 %3580
      %3582 = vadd.xlane.f32.xlu0 %v3551
      %v3583 = vpop.xlane.xlu0 %3582
      %3584 = vadd.xlane.f32.xlu0 %v3553
      %v3585 = vpop.xlane.xlu0 %3584
      %3586 = vadd.xlane.f32.xlu0 %v3555
      %v3587 = vpop.xlane.xlu0 %3586
      %3588 = vadd.xlane.f32.xlu0 %v3557
      %v3589 = vpop.xlane.xlu0 %3588
      %3590 = vadd.xlane.f32.xlu0 %v3559
      %v3591 = vpop.xlane.xlu0 %3590
      %3592 = vadd.xlane.f32.xlu0 %v3561
      %v3593 = vpop.xlane.xlu0 %3592
      %3594 = vadd.xlane.f32.xlu0 %v3563
      %v3595 = vpop.xlane.xlu0 %3594
      %v3596 = vrcp.pop %v3565
      %v3597 = vrcp.pop %v3567
      %v3598 = vrcp.pop %v3569
      %v3599 = vrcp.pop %v3571
      %v3600 = vrcp.pop %v3573
      %v3601 = vrcp.pop %v3575
      %v3602 = vrcp.pop %v3577
      %v3603 = vrcp.pop %v3579
      %v3604 = vrcp.pop %v3581
      %v3605 = vrcp.pop %v3583
      %v3606 = vrcp.pop %v3585
      %v3607 = vrcp.pop %v3587
      %v3608 = vrcp.pop %v3589
      %v3609 = vrcp.pop %v3591
      %v3610 = vrcp.pop %v3593
      %v3611 = vrcp.pop %v3595
      %v3612 = vmul.f32 %v3533, %v3596
      %v3613 = vmul.f32 %v3535, %v3597
      %v3614 = vmul.f32 %v3537, %v3598
      %v3615 = vmul.f32 %v3539, %v3599
      %v3616 = vmul.f32 %v3541, %v3600
      %v3617 = vmul.f32 %v3543, %v3601
      %v3618 = vmul.f32 %v3545, %v3602
      %v3619 = vmul.f32 %v3547, %v3603
      %v3620 = vmul.f32 %v3549, %v3604
      %v3621 = vmul.f32 %v3551, %v3605
      %v3622 = vmul.f32 %v3553, %v3606
      %v3623 = vmul.f32 %v3555, %v3607
      %v3624 = vmul.f32 %v3557, %v3608
      %v3625 = vmul.f32 %v3559, %v3609
      %v3626 = vmul.f32 %v3561, %v3610
      %v3627 = vmul.f32 %v3563, %v3611
      %v3628 = vpack.c.bf16 %v3613, %v3612
      %v3629 = vpack.c.bf16 %v3615, %v3614
      %v3630 = vpack.c.bf16 %v3617, %v3616
      %v3631 = vpack.c.bf16 %v3619, %v3618
      %v3632 = vpack.c.bf16 %v3621, %v3620
      %v3633 = vpack.c.bf16 %v3623, %v3622
      %v3634 = vpack.c.bf16 %v3625, %v3624
      %v3635 = vpack.c.bf16 %v3627, %v3626
      %3636 = vrot.lane.b32.xlu0 %v3275, 48
      %v3637 = vpop.permute.xlu0 %3636
      %3638 = vrot.lane.b32.xlu0 %v3276, 48
      %v3639 = vpop.permute.xlu0 %3638
      %3640 = vrot.lane.b32.xlu0 %v3277, 48
      %v3641 = vpop.permute.xlu0 %3640
      %3642 = vrot.lane.b32.xlu0 %v3278, 48
      %v3643 = vpop.permute.xlu0 %3642
      %3644 = vrot.lane.b32.xlu0 %v3279, 48
      %v3645 = vpop.permute.xlu0 %3644
      %3646 = vrot.lane.b32.xlu0 %v3280, 48
      %v3647 = vpop.permute.xlu0 %3646
      %3648 = vrot.lane.b32.xlu0 %v3281, 48
      %v3649 = vpop.permute.xlu0 %3648
      %3650 = vrot.lane.b32.xlu0 %v3282, 48
      %v3651 = vpop.permute.xlu0 %3650
      %3660 = vmatprep.subr.bf16.mxu0 0
      %3661 = vmatpush1.bf16.msra.mxu0 %v3637
      %3662 = vmatprep.subr.bf16.mxu0 0
      %3663 = vmatpush1.bf16.msra.mxu0 %v3639
      %3664 = vmatprep.subr.bf16.mxu0 0
      %3665 = vmatpush1.bf16.msra.mxu0 %v3641
      %3666 = vmatprep.subr.bf16.mxu0 0
      %3667 = vmatpush1.bf16.msra.mxu0 %v3643
      %3668 = vmatprep.subr.bf16.mxu0 0
      %3669 = vmatpush1.bf16.msra.mxu0 %v3645
      %3670 = vmatprep.subr.bf16.mxu0 0
      %3671 = vmatpush1.bf16.msra.mxu0 %v3647
      %3672 = vmatprep.subr.bf16.mxu0 0
      %3673 = vmatpush1.bf16.msra.mxu0 %v3649
      %3674 = vmatprep.subr.bf16.mxu0 0
      %3675 = vmatpush1.bf16.msra.mxu0 %v3651
      %3676 = vmatprep.subr.bf16.mxu0 0
      %3677 = vmatpush1.bf16.msra.mxu0 0
      %3678 = vmatprep.subr.bf16.mxu0 0
      %3679 = vmatpush1.bf16.msra.mxu0 0
      %3680 = vmatprep.subr.bf16.mxu0 0
      %3681 = vmatpush1.bf16.msra.mxu0 0
      %3682 = vmatprep.subr.bf16.mxu0 0
      %3683 = vmatpush1.bf16.msra.mxu0 0
      %3684 = vmatprep.subr.bf16.mxu0 0
      %3685 = vmatpush1.bf16.msra.mxu0 0
      %3686 = vmatprep.subr.bf16.mxu0 0
      %3687 = vmatpush1.bf16.msra.mxu0 0
      %3688 = vmatprep.subr.bf16.mxu0 0
      %3689 = vmatpush1.bf16.msra.mxu0 0
      %3690 = vmatprep.subr.bf16.mxu0 0
      %3691 = vmatpush1.bf16.msra.mxu0 0
      %3692 = vmatprep.mubr.bf16.mxu0 0
      %3693 = vmatmul.mubr.bf16.gmra.mrb[0].mxu0 %v3628
      %v3694 = vpop.f32.mrb[0].mxu0
      %v3695 = vadd.f32 0.0, %v3694
      %v3696 = vpop.f32.mrb[0].mxu0
      %v3697 = vpop.f32.mrb[0].mxu0
      %v3698 = vadd.f32 0.0, %v3697
      %v3699 = vpop.f32.mrb[0].mxu0
      %3700 = vmatprep.mubr.bf16.mxu0 0
      %3701 = vmatmul.mubr.bf16.gmra.mrb[0].mxu0 %v3629
      %v3702 = vpop.f32.mrb[0].mxu0
      %v3703 = vadd.f32 0.0, %v3702
      %v3704 = vpop.f32.mrb[0].mxu0
      %v3705 = vpop.f32.mrb[0].mxu0
      %v3706 = vadd.f32 0.0, %v3705
      %v3707 = vpop.f32.mrb[0].mxu0
      %3708 = vmatprep.mubr.bf16.mxu0 0
      %3709 = vmatmul.mubr.bf16.gmra.mrb[0].mxu0 %v3630
      %v3710 = vpop.f32.mrb[0].mxu0
      %v3711 = vadd.f32 0.0, %v3710
      %v3712 = vpop.f32.mrb[0].mxu0
      %v3713 = vpop.f32.mrb[0].mxu0
      %v3714 = vadd.f32 0.0, %v3713
      %v3715 = vpop.f32.mrb[0].mxu0
      %3716 = vmatprep.mubr.bf16.mxu0 0
      %3717 = vmatmul.mubr.bf16.gmra.mrb[0].mxu0 %v3631
      %v3718 = vpop.f32.mrb[0].mxu0
      %v3719 = vadd.f32 0.0, %v3718
      %v3720 = vpop.f32.mrb[0].mxu0
      %v3721 = vpop.f32.mrb[0].mxu0
      %v3722 = vadd.f32 0.0, %v3721
      %v3723 = vpop.f32.mrb[0].mxu0
      %3724 = vmatprep.mubr.bf16.mxu0 0
      %3725 = vmatmul.mubr.bf16.gmra.mrb[0].mxu0 %v3632
      %v3726 = vpop.f32.mrb[0].mxu0
      %v3727 = vadd.f32 0.0, %v3726
      %v3728 = vpop.f32.mrb[0].mxu0
      %v3729 = vpop.f32.mrb[0].mxu0
      %v3730 = vadd.f32 0.0, %v3729
      %v3731 = vpop.f32.mrb[0].mxu0
      %3732 = vmatprep.mubr.bf16.mxu0 0
      %3733 = vmatmul.mubr.bf16.gmra.mrb[0].mxu0 %v3633
      %v3734 = vpop.f32.mrb[0].mxu0
      %v3735 = vadd.f32 0.0, %v3734
      %v3736 = vpop.f32.mrb[0].mxu0
      %v3737 = vpop.f32.mrb[0].mxu0
      %v3738 = vadd.f32 0.0, %v3737
      %v3739 = vpop.f32.mrb[0].mxu0
      %3740 = vmatprep.mubr.bf16.mxu0 0
      %3741 = vmatmul.mubr.bf16.gmra.mrb[0].mxu0 %v3634
      %v3742 = vpop.f32.mrb[0].mxu0
      %v3743 = vadd.f32 0.0, %v3742
      %v3744 = vpop.f32.mrb[0].mxu0
      %v3745 = vpop.f32.mrb[0].mxu0
      %v3746 = vadd.f32 0.0, %v3745
      %v3747 = vpop.f32.mrb[0].mxu0
      %3748 = vmatprep.mubr.bf16.mxu0 0
      %3749 = vmatmul.mubr.bf16.gmra.mrb[0].mxu0 %v3635
      %v3750 = vpop.f32.mrb[0].mxu0
      %v3751 = vadd.f32 0.0, %v3750
      %v3752 = vpop.f32.mrb[0].mxu0
      %v3753 = vpop.f32.mrb[0].mxu0
      %v3754 = vadd.f32 0.0, %v3753
      %v3755 = vpop.f32.mrb[0].mxu0
      %3756 = vdwg.mxu0
      %3773 = vrot.lane.b32.xlu0 %v3695, 32
      %v3774 = vpop.permute.xlu0 %3773
      %3775 = vrot.lane.b32.xlu0 %v3698, 32
      %v3776 = vpop.permute.xlu0 %3775
      %3777 = vrot.lane.b32.xlu0 %v3703, 32
      %v3778 = vpop.permute.xlu0 %3777
      %3779 = vrot.lane.b32.xlu0 %v3706, 32
      %v3780 = vpop.permute.xlu0 %3779
      %3781 = vrot.lane.b32.xlu0 %v3711, 32
      %v3782 = vpop.permute.xlu0 %3781
      %3783 = vrot.lane.b32.xlu0 %v3714, 32
      %v3784 = vpop.permute.xlu0 %3783
      %3785 = vrot.lane.b32.xlu0 %v3719, 32
      %v3786 = vpop.permute.xlu0 %3785
      %3787 = vrot.lane.b32.xlu0 %v3722, 32
      %v3788 = vpop.permute.xlu0 %3787
      %3789 = vrot.lane.b32.xlu0 %v3727, 32
      %v3790 = vpop.permute.xlu0 %3789
      %3791 = vrot.lane.b32.xlu0 %v3730, 32
      %v3792 = vpop.permute.xlu0 %3791
      %3793 = vrot.lane.b32.xlu0 %v3735, 32
      %v3794 = vpop.permute.xlu0 %3793
      %3795 = vrot.lane.b32.xlu0 %v3738, 32
      %v3796 = vpop.permute.xlu0 %3795
      %3797 = vrot.lane.b32.xlu0 %v3743, 32
      %v3798 = vpop.permute.xlu0 %3797
      %3799 = vrot.lane.b32.xlu0 %v3746, 32
      %v3800 = vpop.permute.xlu0 %3799
      %3801 = vrot.lane.b32.xlu0 %v3751, 32
      %v3802 = vpop.permute.xlu0 %3801
      %3803 = vrot.lane.b32.xlu0 %v3754, 32
      %v3804 = vpop.permute.xlu0 %3803
      %vm3821 = vcmask 392448
      %3822 = vst.msk [vmem:[#allocation3] sm:$0xff] %vm3821, %v3774
      %3823 = vst.msk [vmem:[#allocation3 + $0x8] sm:$0xff] %vm3821, %v3776
      %3824 = vst.msk [vmem:[#allocation3 + $0x10] sm:$0xff] %vm3821, %v3778
      %3825 = vst.msk [vmem:[#allocation3 + $0x18] sm:$0xff] %vm3821, %v3780
      %3826 = vst.msk [vmem:[#allocation3 + $0x20] sm:$0xff] %vm3821, %v3782
      %3827 = vst.msk [vmem:[#allocation3 + $0x28] sm:$0xff] %vm3821, %v3784
      %3828 = vst.msk [vmem:[#allocation3 + $0x30] sm:$0xff] %vm3821, %v3786
      %3829 = vst.msk [vmem:[#allocation3 + $0x38] sm:$0xff] %vm3821, %v3788
      %3830 = vst.msk [vmem:[#allocation3 + $0x40] sm:$0xff] %vm3821, %v3790
      %3831 = vst.msk [vmem:[#allocation3 + $0x48] sm:$0xff] %vm3821, %v3792
      %3832 = vst.msk [vmem:[#allocation3 + $0x50] sm:$0xff] %vm3821, %v3794
      %3833 = vst.msk [vmem:[#allocation3 + $0x58] sm:$0xff] %vm3821, %v3796
      %3834 = vst.msk [vmem:[#allocation3 + $0x60] sm:$0xff] %vm3821, %v3798
      %3835 = vst.msk [vmem:[#allocation3 + $0x68] sm:$0xff] %vm3821, %v3800
      %3836 = vst.msk [vmem:[#allocation3 + $0x70] sm:$0xff] %vm3821, %v3802
      %3837 = vst.msk [vmem:[#allocation3 + $0x78] sm:$0xff] %vm3821, %v3804
      %v3838 = vld [vmem:[%s6] sm:$0xf]
      %v3839 = vld [vmem:[%s6 + $0x4] sm:$0xf]
      %v3840 = vld [vmem:[%s6 + $0x8] sm:$0xf]
      %v3841 = vld [vmem:[%s6 + $0xc] sm:$0xf]
      %v3842 = vld [vmem:[%s6 + $0x10] sm:$0xf]
      %v3843 = vld [vmem:[%s6 + $0x14] sm:$0xf]
      %v3844 = vld [vmem:[#allocation3] sm:$0xff]
      %v3845 = vld [vmem:[#allocation3 + $0x8] sm:$0xff]
      %v3846 = vld [vmem:[#allocation3 + $0x10] sm:$0xff]
      %v3847 = vld [vmem:[#allocation3 + $0x18] sm:$0xff]
      %v3848 = vld [vmem:[#allocation3 + $0x20] sm:$0xff]
      %v3849 = vld [vmem:[#allocation3 + $0x28] sm:$0xff]
      %v3850 = vld [vmem:[#allocation3 + $0x30] sm:$0xff]
      %v3851 = vld [vmem:[#allocation3 + $0x38] sm:$0xff]
      %v3852 = vld [vmem:[#allocation3 + $0x40] sm:$0xff]
      %v3853 = vld [vmem:[#allocation3 + $0x48] sm:$0xff]
      %v3854 = vld [vmem:[#allocation3 + $0x50] sm:$0xff]
      %v3855 = vld [vmem:[#allocation3 + $0x58] sm:$0xff]
      %v3856 = vld [vmem:[#allocation3 + $0x60] sm:$0xff]
      %v3857 = vld [vmem:[#allocation3 + $0x68] sm:$0xff]
      %v3858 = vld [vmem:[#allocation3 + $0x70] sm:$0xff]
      %v3859 = vld [vmem:[#allocation3 + $0x78] sm:$0xff]
      %v3860 = vpack.c.bf16 %v3845, %v3844
      %v3861 = vpack.c.bf16 %v3847, %v3846
      %v3862 = vpack.c.bf16 %v3849, %v3848
      %v3863 = vpack.c.bf16 %v3851, %v3850
      %v3864 = vpack.c.bf16 %v3853, %v3852
      %v3865 = vpack.c.bf16 %v3855, %v3854
      %v3866 = vpack.c.bf16 %v3857, %v3856
      %v3867 = vpack.c.bf16 %v3859, %v3858
      %v3874 = vunpack.c.l.b16 %v3838
      %v3875 = vunpack.c.l.b16 %v3839
      %v3876 = vunpack.c.l.b16 %v3840
      %v3877 = vunpack.c.l.b16 %v3841
      %v3878 = vunpack.c.l.b16 %v3842
      %v3879 = vunpack.c.l.b16 %v3843
      %v3880 = vpack.c.b16 %v3875, %v3874
      %v3881 = vpack.c.b16 %v3877, %v3876
      %v3882 = vpack.c.b16 %v3879, %v3878
      %3883 = vrot.lane.b32.xlu0 %v3880, 32
      %v3884 = vpop.permute.xlu0 %3883
      %3885 = vrot.lane.b32.xlu0 %v3881, 32
      %v3886 = vpop.permute.xlu0 %3885
      %3887 = vrot.lane.b32.xlu0 %v3882, 32
      %v3888 = vpop.permute.xlu0 %3887
      %v3893 = vsel %vm2043, %v3860, 0
      %v3896 = vsel %vm2043, %v3861, 0
      %v3899 = vsel %vm2043, %v3862, 0
      %v3902 = vsel %vm2043, %v3863, 0
      %v3905 = vsel %vm2043, %v3864, 0
      %v3908 = vsel %vm2043, %v3865, 0
      %v3911 = vsel %vm2043, %v3866, 0
      %v3914 = vsel %vm2043, %v3867, 0
      %3916 = vmatprep.subr.bf16.mxu0 0
      %3917 = vmatpush1.bf16.msra.mxu0 %v3884
      %3918 = vmatprep.subr.bf16.mxu0 0
      %3919 = vmatpush1.bf16.msra.mxu0 %v3886
      %3920 = vmatprep.subr.bf16.mxu0 0
      %3921 = vmatpush1.bf16.msra.mxu0 %v3888
      %3922 = vmatprep.subr.bf16.mxu0 0
      %3923 = vmatpush1.bf16.msra.mxu0 0
      %3924 = vmatprep.subr.bf16.mxu0 0
      %3925 = vmatpush1.bf16.msra.mxu0 0
      %3926 = vmatprep.subr.bf16.mxu0 0
      %3927 = vmatpush1.bf16.msra.mxu0 0
      %3928 = vmatprep.subr.bf16.mxu0 0
      %3929 = vmatpush1.bf16.msra.mxu0 0
      %3930 = vmatprep.subr.bf16.mxu0 0
      %3931 = vmatpush1.bf16.msra.mxu0 0
      %3932 = vmatprep.subr.bf16.mxu0 0
      %3933 = vmatpush1.bf16.msra.mxu0 0
      %3934 = vmatprep.subr.bf16.mxu0 0
      %3935 = vmatpush1.bf16.msra.mxu0 0
      %3936 = vmatprep.subr.bf16.mxu0 0
      %3937 = vmatpush1.bf16.msra.mxu0 0
      %3938 = vmatprep.subr.bf16.mxu0 0
      %3939 = vmatpush1.bf16.msra.mxu0 0
      %3940 = vmatprep.subr.bf16.mxu0 0
      %3941 = vmatpush1.bf16.msra.mxu0 0
      %3942 = vmatprep.subr.bf16.mxu0 0
      %3943 = vmatpush1.bf16.msra.mxu0 0
      %3944 = vmatprep.subr.bf16.mxu0 0
      %3945 = vmatpush1.bf16.msra.mxu0 0
      %3946 = vmatprep.subr.bf16.mxu0 0
      %3947 = vmatpush1.bf16.msra.mxu0 0
      %3948 = vmatprep.mubr.bf16.mxu0 0
      %3949 = vmatmul.mubr.bf16.gmra.mrb[0].mxu0 %v3893
      %v3950 = vpop.f32.mrb[0].mxu0
      %v3951 = vadd.f32 0.0, %v3950
      %v3952 = vpop.f32.mrb[0].mxu0
      %v3953 = vpop.f32.mrb[0].mxu0
      %v3954 = vadd.f32 0.0, %v3953
      %v3955 = vpop.f32.mrb[0].mxu0
      %3956 = vmatprep.mubr.bf16.mxu0 0
      %3957 = vmatmul.mubr.bf16.gmra.mrb[0].mxu0 %v3896
      %v3958 = vpop.f32.mrb[0].mxu0
      %v3959 = vadd.f32 0.0, %v3958
      %v3960 = vpop.f32.mrb[0].mxu0
      %v3961 = vpop.f32.mrb[0].mxu0
      %v3962 = vadd.f32 0.0, %v3961
      %v3963 = vpop.f32.mrb[0].mxu0
      %3964 = vmatprep.mubr.bf16.mxu0 0
      %3965 = vmatmul.mubr.bf16.gmra.mrb[0].mxu0 %v3899
      %v3966 = vpop.f32.mrb[0].mxu0
      %v3967 = vadd.f32 0.0, %v3966
      %v3968 = vpop.f32.mrb[0].mxu0
      %v3969 = vpop.f32.mrb[0].mxu0
      %v3970 = vadd.f32 0.0, %v3969
      %v3971 = vpop.f32.mrb[0].mxu0
      %3972 = vmatprep.mubr.bf16.mxu0 0
      %3973 = vmatmul.mubr.bf16.gmra.mrb[0].mxu0 %v3902
      %v3974 = vpop.f32.mrb[0].mxu0
      %v3975 = vadd.f32 0.0, %v3974
      %v3976 = vpop.f32.mrb[0].mxu0
      %v3977 = vpop.f32.mrb[0].mxu0
      %v3978 = vadd.f32 0.0, %v3977
      %v3979 = vpop.f32.mrb[0].mxu0
      %3980 = vmatprep.mubr.bf16.mxu0 0
      %3981 = vmatmul.mubr.bf16.gmra.mrb[0].mxu0 %v3905
      %v3982 = vpop.f32.mrb[0].mxu0
      %v3983 = vadd.f32 0.0, %v3982
      %v3984 = vpop.f32.mrb[0].mxu0
      %v3985 = vpop.f32.mrb[0].mxu0
      %v3986 = vadd.f32 0.0, %v3985
      %v3987 = vpop.f32.mrb[0].mxu0
      %3988 = vmatprep.mubr.bf16.mxu0 0
      %3989 = vmatmul.mubr.bf16.gmra.mrb[0].mxu0 %v3908
      %v3990 = vpop.f32.mrb[0].mxu0
      %v3991 = vadd.f32 0.0, %v3990
      %v3992 = vpop.f32.mrb[0].mxu0
      %v3993 = vpop.f32.mrb[0].mxu0
      %v3994 = vadd.f32 0.0, %v3993
      %v3995 = vpop.f32.mrb[0].mxu0
      %3996 = vmatprep.mubr.bf16.mxu0 0
      %3997 = vmatmul.mubr.bf16.gmra.mrb[0].mxu0 %v3911
      %v3998 = vpop.f32.mrb[0].mxu0
      %v3999 = vadd.f32 0.0, %v3998
      %v4000 = vpop.f32.mrb[0].mxu0
      %v4001 = vpop.f32.mrb[0].mxu0
      %v4002 = vadd.f32 0.0, %v4001
      %v4003 = vpop.f32.mrb[0].mxu0
      %4004 = vmatprep.mubr.bf16.mxu0 0
      %4005 = vmatmul.mubr.bf16.gmra.mrb[0].mxu0 %v3914
      %v4006 = vpop.f32.mrb[0].mxu0
      %v4007 = vadd.f32 0.0, %v4006
      %v4008 = vpop.f32.mrb[0].mxu0
      %v4009 = vpop.f32.mrb[0].mxu0
      %v4010 = vadd.f32 0.0, %v4009
      %v4011 = vpop.f32.mrb[0].mxu0
      %4012 = vdwg.mxu0
      %v4013 = vld [vmem:[#allocation2] sm:$0xff]
      %v4014 = vld [vmem:[#allocation2 + $0x8] sm:$0xff]
      %v4015 = vld [vmem:[#allocation2 + $0x10] sm:$0xff]
      %v4016 = vld [vmem:[#allocation2 + $0x18] sm:$0xff]
      %v4017 = vld [vmem:[#allocation2 + $0x20] sm:$0xff]
      %v4018 = vld [vmem:[#allocation2 + $0x28] sm:$0xff]
      %v4019 = vld [vmem:[#allocation2 + $0x30] sm:$0xff]
      %v4020 = vld [vmem:[#allocation2 + $0x38] sm:$0xff]
      %v4021 = vld [vmem:[#allocation2 + $0x40] sm:$0xff]
      %v4022 = vld [vmem:[#allocation2 + $0x48] sm:$0xff]
      %v4023 = vld [vmem:[#allocation2 + $0x50] sm:$0xff]
      %v4024 = vld [vmem:[#allocation2 + $0x58] sm:$0xff]
      %v4025 = vld [vmem:[#allocation2 + $0x60] sm:$0xff]
      %v4026 = vld [vmem:[#allocation2 + $0x68] sm:$0xff]
      %v4027 = vld [vmem:[#allocation2 + $0x70] sm:$0xff]
      %v4028 = vld [vmem:[#allocation2 + $0x78] sm:$0xff]
      %4045 = vrot.lane.b32.xlu0 %v3951, 96
      %v4046 = vpop.permute.xlu0 %4045
      %4047 = vrot.lane.b32.xlu0 %v3954, 96
      %v4048 = vpop.permute.xlu0 %4047
      %4049 = vrot.lane.b32.xlu0 %v3959, 96
      %v4050 = vpop.permute.xlu0 %4049
      %4051 = vrot.lane.b32.xlu0 %v3962, 96
      %v4052 = vpop.permute.xlu0 %4051
      %4053 = vrot.lane.b32.xlu0 %v3967, 96
      %v4054 = vpop.permute.xlu0 %4053
      %4055 = vrot.lane.b32.xlu0 %v3970, 96
      %v4056 = vpop.permute.xlu0 %4055
      %4057 = vrot.lane.b32.xlu0 %v3975, 96
      %v4058 = vpop.permute.xlu0 %4057
      %4059 = vrot.lane.b32.xlu0 %v3978, 96
      %v4060 = vpop.permute.xlu0 %4059
      %4061 = vrot.lane.b32.xlu0 %v3983, 96
      %v4062 = vpop.permute.xlu0 %4061
      %4063 = vrot.lane.b32.xlu0 %v3986, 96
      %v4064 = vpop.permute.xlu0 %4063
      %4065 = vrot.lane.b32.xlu0 %v3991, 96
      %v4066 = vpop.permute.xlu0 %4065
      %4067 = vrot.lane.b32.xlu0 %v3994, 96
      %v4068 = vpop.permute.xlu0 %4067
      %4069 = vrot.lane.b32.xlu0 %v3999, 96
      %v4070 = vpop.permute.xlu0 %4069
      %4071 = vrot.lane.b32.xlu0 %v4002, 96
      %v4072 = vpop.permute.xlu0 %4071
      %4073 = vrot.lane.b32.xlu0 %v4007, 96
      %v4074 = vpop.permute.xlu0 %4073
      %4075 = vrot.lane.b32.xlu0 %v4010, 96
      %v4076 = vpop.permute.xlu0 %4075
      %v4093 = vadd.f32 %v4013, %v4046
      %v4094 = vadd.f32 %v4014, %v4048
      %v4095 = vadd.f32 %v4015, %v4050
      %v4096 = vadd.f32 %v4016, %v4052
      %v4097 = vadd.f32 %v4017, %v4054
      %v4098 = vadd.f32 %v4018, %v4056
      %v4099 = vadd.f32 %v4019, %v4058
      %v4100 = vadd.f32 %v4020, %v4060
      %v4101 = vadd.f32 %v4021, %v4062
      %v4102 = vadd.f32 %v4022, %v4064
      %v4103 = vadd.f32 %v4023, %v4066
      %v4104 = vadd.f32 %v4024, %v4068
      %v4105 = vadd.f32 %v4025, %v4070
      %v4106 = vadd.f32 %v4026, %v4072
      %v4107 = vadd.f32 %v4027, %v4074
      %v4108 = vadd.f32 %v4028, %v4076
      %v4109 = vld [vmem:[%s5 + $0x7] sm:$0x1]
      %v4111 = vlaneseq
      %v4112 = vshrl.u32 %v4111, 7
      %v4113 = vsub.s32 0, %v4112
      %v4114 = vrot.slane %v4109, %v4113
      %4115 = vrot.lane.b32.xlu0 %v4114, 96
      %v4116 = vpop.permute.xlu0 %4115
      %v4118 = vadd.f32 %v4093, %v4116
      %v4119 = vadd.f32 %v4094, %v4116
      %v4120 = vadd.f32 %v4095, %v4116
      %v4121 = vadd.f32 %v4096, %v4116
      %v4122 = vadd.f32 %v4097, %v4116
      %v4123 = vadd.f32 %v4098, %v4116
      %v4124 = vadd.f32 %v4099, %v4116
      %v4125 = vadd.f32 %v4100, %v4116
      %v4126 = vadd.f32 %v4101, %v4116
      %v4127 = vadd.f32 %v4102, %v4116
      %v4128 = vadd.f32 %v4103, %v4116
      %v4129 = vadd.f32 %v4104, %v4116
      %v4130 = vadd.f32 %v4105, %v4116
      %v4131 = vadd.f32 %v4106, %v4116
      %v4132 = vadd.f32 %v4107, %v4116
      %v4133 = vadd.f32 %v4108, %v4116
      %4150 = vrot.lane.b32.xlu0 %v4118, 32
      %v4151 = vpop.permute.xlu0 %4150
      %4152 = vrot.lane.b32.xlu0 %v4119, 32
      %v4153 = vpop.permute.xlu0 %4152
      %4154 = vrot.lane.b32.xlu0 %v4120, 32
      %v4155 = vpop.permute.xlu0 %4154
      %4156 = vrot.lane.b32.xlu0 %v4121, 32
      %v4157 = vpop.permute.xlu0 %4156
      %4158 = vrot.lane.b32.xlu0 %v4122, 32
      %v4159 = vpop.permute.xlu0 %4158
      %4160 = vrot.lane.b32.xlu0 %v4123, 32
      %v4161 = vpop.permute.xlu0 %4160
      %4162 = vrot.lane.b32.xlu0 %v4124, 32
      %v4163 = vpop.permute.xlu0 %4162
      %4164 = vrot.lane.b32.xlu0 %v4125, 32
      %v4165 = vpop.permute.xlu0 %4164
      %4166 = vrot.lane.b32.xlu0 %v4126, 32
      %v4167 = vpop.permute.xlu0 %4166
      %4168 = vrot.lane.b32.xlu0 %v4127, 32
      %v4169 = vpop.permute.xlu0 %4168
      %4170 = vrot.lane.b32.xlu0 %v4128, 32
      %v4171 = vpop.permute.xlu0 %4170
      %4172 = vrot.lane.b32.xlu0 %v4129, 32
      %v4173 = vpop.permute.xlu0 %4172
      %4174 = vrot.lane.b32.xlu0 %v4130, 32
      %v4175 = vpop.permute.xlu0 %4174
      %4176 = vrot.lane.b32.xlu0 %v4131, 32
      %v4177 = vpop.permute.xlu0 %4176
      %4178 = vrot.lane.b32.xlu0 %v4132, 32
      %v4179 = vpop.permute.xlu0 %4178
      %4180 = vrot.lane.b32.xlu0 %v4133, 32
      %v4181 = vpop.permute.xlu0 %4180
      %4198 = vst.msk [vmem:[%s307] sm:$0xff] %vm1661, %v4151
      %4199 = vst.msk [vmem:[%s307 + $0x8] sm:$0xff] %vm1661, %v4153
      %4200 = vst.msk [vmem:[%s307 + $0x10] sm:$0xff] %vm1661, %v4155
      %4201 = vst.msk [vmem:[%s307 + $0x18] sm:$0xff] %vm1661, %v4157
      %4202 = vst.msk [vmem:[%s307 + $0x20] sm:$0xff] %vm1661, %v4159
      %4203 = vst.msk [vmem:[%s307 + $0x28] sm:$0xff] %vm1661, %v4161
      %4204 = vst.msk [vmem:[%s307 + $0x30] sm:$0xff] %vm1661, %v4163
      %4205 = vst.msk [vmem:[%s307 + $0x38] sm:$0xff] %vm1661, %v4165
      %4206 = vst.msk [vmem:[%s307 + $0x40] sm:$0xff] %vm1661, %v4167
      %4207 = vst.msk [vmem:[%s307 + $0x48] sm:$0xff] %vm1661, %v4169
      %4208 = vst.msk [vmem:[%s307 + $0x50] sm:$0xff] %vm1661, %v4171
      %4209 = vst.msk [vmem:[%s307 + $0x58] sm:$0xff] %vm1661, %v4173
      %4210 = vst.msk [vmem:[%s307 + $0x60] sm:$0xff] %vm1661, %v4175
      %4211 = vst.msk [vmem:[%s307 + $0x68] sm:$0xff] %vm1661, %v4177
      %4212 = vst.msk [vmem:[%s307 + $0x70] sm:$0xff] %vm1661, %v4179
      %4213 = vst.msk [vmem:[%s307 + $0x78] sm:$0xff] %vm1661, %v4181
      %s4214 = smul.u32 16, %s19
      %p4215 = scmp.lt.s32.totalorder %s4214, 31
      %s4216 = scalar_select %p4215, %s4214, 31
      %s4217 = smul.addr %s4216, 8
      %s4218 = scalar_lea.vmem %s8, %s4217
      // Predicated region
      $region53: #{tpu_custom_call.1} parent=51 // pred_check
        %p4219 = pneg %p210
      $region54: #{tpu_custom_call.1} parent=51 // pred_check_branch
        %4221 = sbr.rel (%p4219) target = $region56
      $region55: #{tpu_custom_call.1} parent=51 // pred_region
        %s4222 = smul.u32 16, %s19
      $region56: #{tpu_custom_call.1} parent=51 // pred_fallthru
        _
    $region52: #{tpu_custom_call.1} parent=5 // pred_fallthru
      _
    %p4223 = scmp.le.s32.totalorder 2, %s14
    // Predicated region
    $region57: #{tpu_custom_call.1} parent=5 // pred_check
      %p4224 = pneg %p4223
    $region58: #{tpu_custom_call.1} parent=5 // pred_check_branch
      %4226 = sbr.rel (%p4224) target = $region60
    $region59: #{tpu_custom_call.1} parent=5 // pred_region
      %s4227 = ssub.s32 %s14, 2
      // Predicated region
      $region61: #{tpu_custom_call.1} parent=59 // pred_check
        %p4228 = pneg %p216
      $region62: #{tpu_custom_call.1} parent=59 // pred_check_branch
        %4230 = sbr.rel (%p4228) target = $region64
      $region63: #{tpu_custom_call.1} parent=59 // pred_region
        %s4231 = smul.u32 16, %s20
        %p4232 = scmp.lt.s32.totalorder %s4231, 31
        %s4233 = scalar_select %p4232, %s4231, 31
        %s4234 = smul.addr %s4233, 8
        %s4235 = scalar_lea.vmem %s8, %s4234
      $region64: #{tpu_custom_call.1} parent=59 // pred_fallthru
        _
    $region60: #{tpu_custom_call.1} parent=5 // pred_fallthru
      _
  $region6: #{tpu_custom_call.1} parent=0 // loop_footer
    %s18 = sadd.s32 1, %s14
  $region7: #{tpu_custom_call.1} parent=0 // loop_footer_branch
    %13 = sbr.rel target = $region3
  $region8: #{tpu_custom_call.1} parent=0 // loop_exit
    _

</llo_original>
